<compile_context>
chip_gen: v6e
topology: v6e:2x2x1
jax: 0.10.0
libtpu: 0.0.40
codegen_flags: <defaults>
</compile_context>

<pallas_src>
import functools

import jax
import jax.numpy as jnp
from jax import lax
from jax.experimental import pallas as pl
from jax.experimental.pallas import tpu as pltpu


# ----------------------------- in-kernel helpers -----------------------------

def _mm(a, b):
    """MXU matmul with bf16 operands and f32 accumulation."""
    return jnp.dot(a.astype(jnp.bfloat16), b.astype(jnp.bfloat16),
                   preferred_element_type=jnp.float32)


def _layernorm(x, g, b, eps=1e-5):
    mu = jnp.mean(x, axis=-1, keepdims=True)
    xc = x - mu
    var = jnp.mean(xc * xc, axis=-1, keepdims=True)
    return xc * lax.rsqrt(var + eps) * g + b


def _gelu(x):
    # tanh-form GELU (EUP tanh instead of a VALU erf polynomial).
    c = 0.7978845608028654  # sqrt(2/pi)
    return 0.5 * x * (1.0 + jnp.tanh(c * (x + 0.044715 * x * x * x)))


# ------------------------------ fused ViT kernel ------------------------------

def _vit_kernel(x0_ref, w_in_ref, b_in_ref, wo_ref, bo_ref,
                g1_ref, be1_ref, w1_ref, bb1_ref,
                w2_ref, bb2_ref, g2_ref, be2_ref,
                head_w_ref, head_b_ref,
                out_ref, x_vmem,
                *, B, S, D, heads, dff_chunk):
    l = pl.program_id(0)
    R = S * B
    hd = D // heads
    Dff = w1_ref.shape[-1]
    bf16 = jnp.bfloat16

    # --- prologue: load the already-embedded tokens into the VMEM carry ------
    @pl.when(l == 0)
    def _():
        x_vmem[...] = x0_ref[...]

    x2 = x_vmem[...]                                   # (R, D) f32, rows = (s, b)

    # --- multi-head attention over the image-batch axis ----------------------
    # (batch_first=False reading of the (B, S, D) input, as in the reference.)
    # 1/sqrt(hd) is already folded into the q columns of w_in / b_in.
    qkv = _mm(x2, w_in_ref[...]) + b_in_ref[...]       # (R, 3D) f32
    q3 = qkv[:, :D].reshape(S, B, D).astype(bf16)
    k3 = qkv[:, D:2 * D].reshape(S, B, D).astype(bf16)
    v3 = qkv[:, 2 * D:].reshape(S, B, D).astype(bf16)

    # Per-head MXU contractions over hd, batched over the S positions
    # (flash-attention style dot_generals); no O(B^2*S*D) f32 intermediates.
    # The out-projection is accumulated per head (== concat(heads) @ wo).
    attn_acc = jnp.zeros((R, D), jnp.float32)
    for h in range(heads):                             # small static unroll
        lo = h * hd
        qh = q3[:, :, lo:lo + hd]                      # (S, B, hd)
        kh = k3[:, :, lo:lo + hd]
        vh = v3[:, :, lo:lo + hd]
        sc = jnp.einsum('sbd,scd->sbc', qh, kh,
                        preferred_element_type=jnp.float32)        # (S, B, B)
        sc = sc - jnp.max(sc, axis=-1, keepdims=True)  # softmax over source axis
        pr = jnp.exp(sc)
        pr = pr * pl.reciprocal(jnp.sum(pr, axis=-1, keepdims=True), approx=True)
        ah = jnp.einsum('sbc,scd->sbd', pr.astype(bf16), vh,
                        preferred_element_type=jnp.float32)        # (S, B, hd)
        attn_acc = attn_acc + jnp.dot(ah.reshape(R, hd).astype(bf16),
                                      wo_ref[lo:lo + hd, :],
                                      preferred_element_type=jnp.float32)
    attn2 = attn_acc + bo_ref[...]

    # --- residual + norm1, feed-forward (Dff-chunked), residual + norm2 ------
    # (dropout layers are identity at inference)
    y = _layernorm(attn2 + x2, g1_ref[...], be1_ref[...])
    yb = y.astype(bf16)
    f = jnp.zeros((R, D), jnp.float32)
    for c0 in range(0, Dff, dff_chunk):                # static chunk loop
        ck = min(dff_chunk, Dff - c0)
        hmid = _gelu(jnp.dot(yb, w1_ref[:, c0:c0 + ck],
                             preferred_element_type=jnp.float32)
                     + bb1_ref[:, c0:c0 + ck])
        f = f + jnp.dot(hmid.astype(bf16), w2_ref[c0:c0 + ck, :],
                        preferred_element_type=jnp.float32)
    f = f + bb2_ref[...]
    z = _layernorm(f + y, g2_ref[...], be2_ref[...])
    x_vmem[...] = z                                    # carry to next depth step

    # --- classification head: logits from the cls-token rows (s == 0) --------
    @pl.when(l == pl.num_programs(0) - 1)
    def _():
        cls = z[:B, :]                                 # contiguous rows b=0..B-1
        out_ref[...] = _mm(cls, head_w_ref[...]) + head_b_ref[...]


# ------------------------------- JAX wrapper ----------------------------------

def prepare_params(params, cfg):
    """One-time (outside jit) weight preprocessing:
    compose backbone+patch convs into one embedding matmul, fold the attention
    scale into q, cast matmul weights to bf16, pad the head to 128 lanes."""
    D = cfg['dim']
    C = cfg['in_chans']
    L = cfg['depth']
    p = cfg['patch_size']
    heads = cfg['heads']
    Dff = cfg['mlp_dim'] * D
    NC = cfg['num_classes']
    NCp = ((NC + 127) // 128) * 128
    hd = D // heads
    scale = 1.0 / (hd ** 0.5)
    bf16 = jnp.bfloat16

    # compose the two affine strided convs into one (D, K) matmul
    w1c = params['cnn_w'].reshape(D, C * 16)                       # (D, C*4*4)
    w_eff = jnp.einsum('omhw,mk->ohwk', params['patch_w'], w1c)
    w_eff = w_eff.reshape(D, C * (4 * p) * (4 * p))                # cols (h,w,c,a,b)
    b_eff = jnp.einsum('omhw,m->o', params['patch_w'], params['cnn_b']) + params['patch_b']

    # fold 1/sqrt(hd) into the q third of the in-projection
    w_in = params['w_in'].at[:, :, :D].multiply(scale)
    b_in = params['b_in'].at[:, :D].multiply(scale)

    # pad the classification head to a 128-lane-wide slab (lane-dense output)
    head_w = jnp.zeros((D, NCp), jnp.float32).at[:, :NC].set(params['head_w'])
    head_b = jnp.zeros((NCp,), jnp.float32).at[:NC].set(params['head_b'])

    return {
        'w_emb': jnp.transpose(w_eff),                             # (K, D) f32
        'b_emb': b_eff,
        'cls_tok': params['cls_tok'], 'pos_emb': params['pos_emb'],
        'w_in': w_in.astype(bf16), 'b_in': b_in.reshape(L, 1, 3 * D),
        'wo': params['wo'].astype(bf16), 'bo': params['bo'].reshape(L, 1, D),
        'g1': params['g1'].reshape(L, 1, D), 'be1': params['be1'].reshape(L, 1, D),
        'w1': params['w1'].astype(bf16), 'bb1': params['bb1'].reshape(L, 1, Dff),
        'w2': params['w2'].astype(bf16), 'bb2': params['bb2'].reshape(L, 1, D),
        'g2': params['g2'].reshape(L, 1, D), 'be2': params['be2'].reshape(L, 1, D),
        'head_w': head_w.astype(bf16), 'head_b': head_b.reshape(1, NCp),
    }


def vit_forward(pp, x, cfg):
    B, C, H, W = x.shape
    D = cfg['dim']
    heads = cfg['heads']
    L = cfg['depth']
    Dff = cfg['mlp_dim'] * D
    NC = cfg['num_classes']
    p = cfg['patch_size']
    cs = 4 * p                      # composite stride: cnn stand-in (/4), patch conv (/p)
    Hp, Wp = H // cs, W // cs
    P = Hp * Wp
    S = P + 1
    R = S * B
    K = C * cs * cs
    NCp = pp['head_w'].shape[-1]

    # ---- one-shot embedding prologue in the wrapper (kept out of the depth
    #      pipeline so it does not occupy VMEM for all L steps) ---------------
    xr = x.reshape(B, C, Hp, p, 4, Wp, p, 4)
    patches = xr.transpose(0, 2, 5, 3, 6, 1, 4, 7).reshape(B, P, K)     # im2col
    emb = jnp.dot(patches, pp['w_emb']) + pp['b_emb']                   # (B, P, D)
    cls = jnp.broadcast_to(pp['cls_tok'], (B, 1, D))
    x0 = jnp.concatenate([cls, emb], axis=1) + pp['pos_emb']            # (B, S, D)
    x0 = jnp.transpose(x0, (1, 0, 2)).reshape(R, D)                     # rows = (s, b)

    args = [x0,
            pp['w_in'], pp['b_in'], pp['wo'], pp['bo'],
            pp['g1'], pp['be1'], pp['w1'], pp['bb1'],
            pp['w2'], pp['bb2'], pp['g2'], pp['be2'],
            pp['head_w'], pp['head_b']]

    def full(a):                 # whole array, resident across all grid steps
        return pl.BlockSpec(a.shape, lambda l, n=a.ndim: (0,) * n)

    def per_depth(a):            # one depth slice per grid step (auto-pipelined)
        return pl.BlockSpec((None,) + a.shape[1:],
                            lambda l, n=a.ndim: (l,) + (0,) * (n - 1))

    in_specs = [full(args[0])]
    in_specs += [per_depth(a) for a in args[1:13]]
    in_specs += [full(args[13]), full(args[14])]

    # per-generation VMEM budget: ~3/4 of the detected physical capacity
    try:
        cap = int(pltpu.get_tpu_info().vmem_capacity_bytes)
        vmem_limit = max(32 * 1024 * 1024, min(cap * 3 // 4, 112 * 1024 * 1024))
    except Exception:
        vmem_limit = 48 * 1024 * 1024          # safe on v7x's 64 MiB VMEM

    kernel = functools.partial(_vit_kernel, B=B, S=S, D=D, heads=heads,
                               dff_chunk=min(Dff, 512))
    out = pl.pallas_call(
        kernel,
        out_shape=jax.ShapeDtypeStruct((B, NCp), jnp.float32),
        grid=(L,),
        in_specs=in_specs,
        out_specs=pl.BlockSpec((B, NCp), lambda l: (0, 0)),
        scratch_shapes=[pltpu.VMEM((R, D), jnp.float32)],
        compiler_params=pltpu.CompilerParams(
            dimension_semantics=("arbitrary",),        # sequential carry over depth
            vmem_limit_bytes=vmem_limit),
    )(*args)
    return out[:, :NC]


# --------------------------------- params -------------------------------------

def init_params(key, cfg):
    D = cfg['dim']
    C = cfg['in_chans']
    L = cfg['depth']
    p = cfg['patch_size']
    Dff = cfg['mlp_dim'] * D
    NC = cfg['num_classes']
    S = cfg['num_patches'] + 1
    ks = iter(jax.random.split(key, 32))

    def nrm(shape, scale=0.02):
        return scale * jax.random.normal(next(ks), shape, jnp.float32)

    return {
        # TODO(synk): the pretrained torchvision ResNet50 backbone is not
        # reproduced; a deterministic 4x4/stride-4 conv producing `dim`
        # channels stands in for it.
        'cnn_w': nrm((D, C, 4, 4)), 'cnn_b': nrm((D,)),
        'patch_w': nrm((D, D, p, p)), 'patch_b': nrm((D,)),
        'pos_emb': jax.random.normal(next(ks), (1, S, D), jnp.float32),
        'cls_tok': jax.random.normal(next(ks), (1, 1, D), jnp.float32),
        'head_w': nrm((D, NC)), 'head_b': nrm((NC,)),
        # transformer blocks, stacked along a leading depth axis
        'w_in': nrm((L, D, 3 * D)), 'b_in': nrm((L, 3 * D)),
        'wo': nrm((L, D, D)), 'bo': nrm((L, D)),
        'g1': jnp.ones((L, D), jnp.float32), 'be1': jnp.zeros((L, D), jnp.float32),
        'w1': nrm((L, D, Dff)), 'bb1': nrm((L, Dff)),
        'w2': nrm((L, Dff, D)), 'bb2': nrm((L, D)),
        'g2': jnp.ones((L, D), jnp.float32), 'be2': jnp.zeros((L, D), jnp.float32),
    }


if __name__ == "__main__":
    cfg = dict(img_size=16, in_chans=3, dim=32, patch_size=2, heads=4,
               depth=2, mlp_dim=2, dropout=0.1, num_classes=10)
    # The stand-in backbone downsamples by 4, so the actual token grid is
    # (img_size // (4*patch_size))**2.
    cfg['num_patches'] = (cfg['img_size'] // (4 * cfg['patch_size'])) ** 2   # = 4

    key = jax.random.PRNGKey(0)
    pkey, xkey = jax.random.split(key)
    params = init_params(pkey, cfg)
    pp = prepare_params(params, cfg)     # one-time weight prep, outside jit
    x = jax.random.normal(
        xkey, (2, cfg['in_chans'], cfg['img_size'], cfg['img_size']), jnp.float32)

    fwd = jax.jit(functools.partial(vit_forward, cfg=cfg))
    out = jax.block_until_ready(fwd(pp, x))
    assert out.shape == (2, cfg['num_classes'])
    print("KERNEL_OK")
</pallas_src>

<mosaic_0001>
module attributes {stable_mosaic.version = 11 : i64} {
  func.func @_vit_kernel(%arg0: i32, %arg1: memref<10x32xf32, #tpu.memory_space<vmem>>, %arg2: memref<1x32x96xbf16, #tpu.memory_space<vmem>>, %arg3: memref<1x1x96xf32, #tpu.memory_space<vmem>>, %arg4: memref<1x32x32xbf16, #tpu.memory_space<vmem>>, %arg5: memref<1x1x32xf32, #tpu.memory_space<vmem>>, %arg6: memref<1x1x32xf32, #tpu.memory_space<vmem>>, %arg7: memref<1x1x32xf32, #tpu.memory_space<vmem>>, %arg8: memref<1x32x64xbf16, #tpu.memory_space<vmem>>, %arg9: memref<1x1x64xf32, #tpu.memory_space<vmem>>, %arg10: memref<1x64x32xbf16, #tpu.memory_space<vmem>>, %arg11: memref<1x1x32xf32, #tpu.memory_space<vmem>>, %arg12: memref<1x1x32xf32, #tpu.memory_space<vmem>>, %arg13: memref<1x1x32xf32, #tpu.memory_space<vmem>>, %arg14: memref<32x128xbf16, #tpu.memory_space<vmem>>, %arg15: memref<1x128xf32, #tpu.memory_space<vmem>>, %arg16: memref<2x128xf32, #tpu.memory_space<vmem>>, %arg17: memref<10x32xf32, #tpu.memory_space<vmem>>) attributes {dimension_semantics = [#tpu.dimension_semantics<arbitrary>], iteration_bounds = array<i64: 2>, scalar_prefetch = 0 : i64, scratch_operands = 1 : i64, tpu.core_type = #tpu.core_type<tc>, window_params = [{pipeline_mode = #tpu.pipeline_mode<synchronous>, transform_indices = @transform_0, window_bounds = array<i64: 10, 32>}, {transform_indices = @transform_1, window_bounds = array<i64: 1, 32, 96>}, {transform_indices = @transform_2, window_bounds = array<i64: 1, 1, 96>}, {transform_indices = @transform_3, window_bounds = array<i64: 1, 32, 32>}, {transform_indices = @transform_4, window_bounds = array<i64: 1, 1, 32>}, {transform_indices = @transform_5, window_bounds = array<i64: 1, 1, 32>}, {transform_indices = @transform_6, window_bounds = array<i64: 1, 1, 32>}, {transform_indices = @transform_7, window_bounds = array<i64: 1, 32, 64>}, {transform_indices = @transform_8, window_bounds = array<i64: 1, 1, 64>}, {transform_indices = @transform_9, window_bounds = array<i64: 1, 64, 32>}, {transform_indices = @transform_10, window_bounds = array<i64: 1, 1, 32>}, {transform_indices = @transform_11, window_bounds = array<i64: 1, 1, 32>}, {transform_indices = @transform_12, window_bounds = array<i64: 1, 1, 32>}, {pipeline_mode = #tpu.pipeline_mode<synchronous>, transform_indices = @transform_13, window_bounds = array<i64: 32, 128>}, {pipeline_mode = #tpu.pipeline_mode<synchronous>, transform_indices = @transform_14, window_bounds = array<i64: 1, 128>}, {pipeline_mode = #tpu.pipeline_mode<synchronous>, transform_indices = @transform_15, window_bounds = array<i64: 2, 128>}]} {
    %c0_i32 = arith.constant 0 : i32
    %0 = arith.cmpi eq, %arg0, %c0_i32 : i32
    %1 = arith.extui %0 : i1 to i32
    %c0_i32_0 = arith.constant 0 : i32
    %2 = arith.cmpi ne, %1, %c0_i32_0 : i32
    scf.if %2 {
      %c0_85 = arith.constant 0 : index
      %c0_86 = arith.constant 0 : index
      %199 = vector.load %arg1[%c0_85, %c0_86] : memref<10x32xf32, #tpu.memory_space<vmem>>, vector<10x32xf32>
      %c0_87 = arith.constant 0 : index
      %c0_88 = arith.constant 0 : index
      %200 = vector.load %arg17[%c0_87, %c0_88] : memref<10x32xf32, #tpu.memory_space<vmem>>, vector<10x32xf32>
      tpu.vector_store %arg17[%c0_87, %c0_88], %199 {strides = array<i32>} : memref<10x32xf32, #tpu.memory_space<vmem>>, vector<10x32xf32>,
    } else {
    }
    %c0 = arith.constant 0 : index
    %c0_1 = arith.constant 0 : index
    %3 = vector.load %arg17[%c0, %c0_1] : memref<10x32xf32, #tpu.memory_space<vmem>>, vector<10x32xf32>
    %c0_2 = arith.constant 0 : index
    %c0_3 = arith.constant 0 : index
    %c0_4 = arith.constant 0 : index
    %4 = vector.load %arg2[%c0_2, %c0_3, %c0_4] : memref<1x32x96xbf16, #tpu.memory_space<vmem>>, vector<1x32x96xbf16>
    %5 = vector.shape_cast %4 : vector<1x32x96xbf16> to vector<32x96xbf16>
    %6 = arith.truncf %3 : vector<10x32xf32> to vector<10x32xbf16>
    %cst = arith.constant dense<0.000000e+00> : vector<10x96xf32>
    %7 = tpu.matmul %6, %5, %cst {dimension_numbers = #tpu.dot_dimension_numbers<[1], [0], [0], [1], [0, 0, 1, 1], [], []>} : vector<10x32xbf16>, vector<32x96xbf16>, vector<10x96xf32> -> vector<10x96xf32>
    %c0_5 = arith.constant 0 : index
    %c0_6 = arith.constant 0 : index
    %c0_7 = arith.constant 0 : index
    %8 = vector.load %arg3[%c0_5, %c0_6, %c0_7] : memref<1x1x96xf32, #tpu.memory_space<vmem>>, vector<1x1x96xf32>
    %9 = vector.shape_cast %8 : vector<1x1x96xf32> to vector<1x96xf32>
    %10 = vector.broadcast %9 : vector<1x96xf32> to vector<10x96xf32>
    %11 = arith.addf %7, %10 : vector<10x96xf32>
    %12 = vector.extract_strided_slice %11 {offsets = [0, 0], sizes = [10, 32], strides = [1, 1]} : vector<10x96xf32> to vector<10x32xf32>
    %13 = vector.shape_cast %12 : vector<10x32xf32> to vector<5x2x32xf32>
    %14 = arith.truncf %13 : vector<5x2x32xf32> to vector<5x2x32xbf16>
    %15 = vector.extract_strided_slice %11 {offsets = [0, 32], sizes = [10, 32], strides = [1, 1]} : vector<10x96xf32> to vector<10x32xf32>
    %16 = vector.shape_cast %15 : vector<10x32xf32> to vector<5x2x32xf32>
    %17 = arith.truncf %16 : vector<5x2x32xf32> to vector<5x2x32xbf16>
    %18 = vector.extract_strided_slice %11 {offsets = [0, 64], sizes = [10, 32], strides = [1, 1]} : vector<10x96xf32> to vector<10x32xf32>
    %19 = vector.shape_cast %18 : vector<10x32xf32> to vector<5x2x32xf32>
    %20 = arith.truncf %19 : vector<5x2x32xf32> to vector<5x2x32xbf16>
    %cst_8 = arith.constant 0.000000e+00 : f32
    %21 = vector.broadcast %cst_8 : f32 to vector<10x32xf32>
    %22 = vector.extract_strided_slice %14 {offsets = [0, 0, 0], sizes = [5, 2, 8], strides = [1, 1, 1]} : vector<5x2x32xbf16> to vector<5x2x8xbf16>
    %23 = vector.extract_strided_slice %17 {offsets = [0, 0, 0], sizes = [5, 2, 8], strides = [1, 1, 1]} : vector<5x2x32xbf16> to vector<5x2x8xbf16>
    %24 = vector.extract_strided_slice %20 {offsets = [0, 0, 0], sizes = [5, 2, 8], strides = [1, 1, 1]} : vector<5x2x32xbf16> to vector<5x2x8xbf16>
    "tpu.trace_start"() <{level = 10 : i32, message = "sbd,scd->sbc"}> : () -> ()
    %cst_9 = arith.constant dense<0.000000e+00> : vector<5x2x2xf32>
    %25 = tpu.matmul %22, %23, %cst_9 {dimension_numbers = #tpu.dot_dimension_numbers<[2], [2], [1], [1], [0, 0, 0, 1, 1, 1], [0], [0]>} : vector<5x2x8xbf16>, vector<5x2x8xbf16>, vector<5x2x2xf32> -> vector<5x2x2xf32>
    "tpu.trace_stop"() : () -> ()
    %cst_10 = arith.constant dense<0xFF800000> : vector<5x2xf32>
    %26 = vector.multi_reduction <maximumf>, %25, %cst_10 [2] : vector<5x2x2xf32> to vector<5x2xf32>
    %27 = vector.shape_cast %26 : vector<5x2xf32> to vector<5x2x1xf32>
    %28 = vector.broadcast %27 : vector<5x2x1xf32> to vector<5x2x2xf32>
    %29 = arith.subf %25, %28 : vector<5x2x2xf32>
    %30 = math.exp %29 : vector<5x2x2xf32>
    %cst_11 = arith.constant dense<0.000000e+00> : vector<5x2xf32>
    %31 = vector.multi_reduction <add>, %30, %cst_11 [2] : vector<5x2x2xf32> to vector<5x2xf32>
    %32 = vector.shape_cast %31 : vector<5x2xf32> to vector<5x2x1xf32>
    %33 = tpu.reciprocal %32 {approx = true} : vector<5x2x1xf32> -> vector<5x2x1xf32>
    %34 = vector.broadcast %33 : vector<5x2x1xf32> to vector<5x2x2xf32>
    %35 = arith.mulf %30, %34 : vector<5x2x2xf32>
    %36 = arith.truncf %35 : vector<5x2x2xf32> to vector<5x2x2xbf16>
    "tpu.trace_start"() <{level = 10 : i32, message = "sbc,scd->sbd"}> : () -> ()
    %cst_12 = arith.constant dense<0.000000e+00> : vector<5x2x8xf32>
    %37 = tpu.matmul %36, %24, %cst_12 {dimension_numbers = #tpu.dot_dimension_numbers<[2], [1], [1], [2], [0, 0, 0, 1, 1, 2], [0], [0]>} : vector<5x2x2xbf16>, vector<5x2x8xbf16>, vector<5x2x8xf32> -> vector<5x2x8xf32>
    "tpu.trace_stop"() : () -> ()
    %38 = vector.shape_cast %37 : vector<5x2x8xf32> to vector<10x8xf32>
    %39 = arith.truncf %38 : vector<10x8xf32> to vector<10x8xbf16>
    %c0_13 = arith.constant 0 : index
    %c0_14 = arith.constant 0 : index
    %c0_15 = arith.constant 0 : index
    %40 = vector.load %arg4[%c0_13, %c0_14, %c0_15] : memref<1x32x32xbf16, #tpu.memory_space<vmem>>, vector<1x8x32xbf16>
    %41 = vector.shape_cast %40 : vector<1x8x32xbf16> to vector<8x32xbf16>
    %cst_16 = arith.constant dense<0.000000e+00> : vector<10x32xf32>
    %42 = tpu.matmul %39, %41, %cst_16 {dimension_numbers = #tpu.dot_dimension_numbers<[1], [0], [0], [1], [0, 0, 1, 1], [], []>} : vector<10x8xbf16>, vector<8x32xbf16>, vector<10x32xf32> -> vector<10x32xf32>
    %43 = arith.addf %21, %42 : vector<10x32xf32>
    %44 = vector.extract_strided_slice %14 {offsets = [0, 0, 8], sizes = [5, 2, 8], strides = [1, 1, 1]} : vector<5x2x32xbf16> to vector<5x2x8xbf16>
    %45 = vector.extract_strided_slice %17 {offsets = [0, 0, 8], sizes = [5, 2, 8], strides = [1, 1, 1]} : vector<5x2x32xbf16> to vector<5x2x8xbf16>
    %46 = vector.extract_strided_slice %20 {offsets = [0, 0, 8], sizes = [5, 2, 8], strides = [1, 1, 1]} : vector<5x2x32xbf16> to vector<5x2x8xbf16>
    "tpu.trace_start"() <{level = 10 : i32, message = "sbd,scd->sbc"}> : () -> ()
    %cst_17 = arith.constant dense<0.000000e+00> : vector<5x2x2xf32>
    %47 = tpu.matmul %44, %45, %cst_17 {dimension_numbers = #tpu.dot_dimension_numbers<[2], [2], [1], [1], [0, 0, 0, 1, 1, 1], [0], [0]>} : vector<5x2x8xbf16>, vector<5x2x8xbf16>, vector<5x2x2xf32> -> vector<5x2x2xf32>
    "tpu.trace_stop"() : () -> ()
    %cst_18 = arith.constant dense<0xFF800000> : vector<5x2xf32>
    %48 = vector.multi_reduction <maximumf>, %47, %cst_18 [2] : vector<5x2x2xf32> to vector<5x2xf32>
    %49 = vector.shape_cast %48 : vector<5x2xf32> to vector<5x2x1xf32>
    %50 = vector.broadcast %49 : vector<5x2x1xf32> to vector<5x2x2xf32>
    %51 = arith.subf %47, %50 : vector<5x2x2xf32>
    %52 = math.exp %51 : vector<5x2x2xf32>
    %cst_19 = arith.constant dense<0.000000e+00> : vector<5x2xf32>
    %53 = vector.multi_reduction <add>, %52, %cst_19 [2] : vector<5x2x2xf32> to vector<5x2xf32>
    %54 = vector.shape_cast %53 : vector<5x2xf32> to vector<5x2x1xf32>
    %55 = tpu.reciprocal %54 {approx = true} : vector<5x2x1xf32> -> vector<5x2x1xf32>
    %56 = vector.broadcast %55 : vector<5x2x1xf32> to vector<5x2x2xf32>
    %57 = arith.mulf %52, %56 : vector<5x2x2xf32>
    %58 = arith.truncf %57 : vector<5x2x2xf32> to vector<5x2x2xbf16>
    "tpu.trace_start"() <{level = 10 : i32, message = "sbc,scd->sbd"}> : () -> ()
    %cst_20 = arith.constant dense<0.000000e+00> : vector<5x2x8xf32>
    %59 = tpu.matmul %58, %46, %cst_20 {dimension_numbers = #tpu.dot_dimension_numbers<[2], [1], [1], [2], [0, 0, 0, 1, 1, 2], [0], [0]>} : vector<5x2x2xbf16>, vector<5x2x8xbf16>, vector<5x2x8xf32> -> vector<5x2x8xf32>
    "tpu.trace_stop"() : () -> ()
    %60 = vector.shape_cast %59 : vector<5x2x8xf32> to vector<10x8xf32>
    %61 = arith.truncf %60 : vector<10x8xf32> to vector<10x8xbf16>
    %c0_21 = arith.constant 0 : index
    %c8 = arith.constant 8 : index
    %c0_22 = arith.constant 0 : index
    %62 = vector.load %arg4[%c0_21, %c8, %c0_22] : memref<1x32x32xbf16, #tpu.memory_space<vmem>>, vector<1x8x32xbf16>
    %63 = vector.shape_cast %62 : vector<1x8x32xbf16> to vector<8x32xbf16>
    %cst_23 = arith.constant dense<0.000000e+00> : vector<10x32xf32>
    %64 = tpu.matmul %61, %63, %cst_23 {dimension_numbers = #tpu.dot_dimension_numbers<[1], [0], [0], [1], [0, 0, 1, 1], [], []>} : vector<10x8xbf16>, vector<8x32xbf16>, vector<10x32xf32> -> vector<10x32xf32>
    %65 = arith.addf %43, %64 : vector<10x32xf32>
    %66 = vector.extract_strided_slice %14 {offsets = [0, 0, 16], sizes = [5, 2, 8], strides = [1, 1, 1]} : vector<5x2x32xbf16> to vector<5x2x8xbf16>
    %67 = vector.extract_strided_slice %17 {offsets = [0, 0, 16], sizes = [5, 2, 8], strides = [1, 1, 1]} : vector<5x2x32xbf16> to vector<5x2x8xbf16>
    %68 = vector.extract_strided_slice %20 {offsets = [0, 0, 16], sizes = [5, 2, 8], strides = [1, 1, 1]} : vector<5x2x32xbf16> to vector<5x2x8xbf16>
    "tpu.trace_start"() <{level = 10 : i32, message = "sbd,scd->sbc"}> : () -> ()
    %cst_24 = arith.constant dense<0.000000e+00> : vector<5x2x2xf32>
    %69 = tpu.matmul %66, %67, %cst_24 {dimension_numbers = #tpu.dot_dimension_numbers<[2], [2], [1], [1], [0, 0, 0, 1, 1, 1], [0], [0]>} : vector<5x2x8xbf16>, vector<5x2x8xbf16>, vector<5x2x2xf32> -> vector<5x2x2xf32>
    "tpu.trace_stop"() : () -> ()
    %cst_25 = arith.constant dense<0xFF800000> : vector<5x2xf32>
    %70 = vector.multi_reduction <maximumf>, %69, %cst_25 [2] : vector<5x2x2xf32> to vector<5x2xf32>
    %71 = vector.shape_cast %70 : vector<5x2xf32> to vector<5x2x1xf32>
    %72 = vector.broadcast %71 : vector<5x2x1xf32> to vector<5x2x2xf32>
    %73 = arith.subf %69, %72 : vector<5x2x2xf32>
    %74 = math.exp %73 : vector<5x2x2xf32>
    %cst_26 = arith.constant dense<0.000000e+00> : vector<5x2xf32>
    %75 = vector.multi_reduction <add>, %74, %cst_26 [2] : vector<5x2x2xf32> to vector<5x2xf32>
    %76 = vector.shape_cast %75 : vector<5x2xf32> to vector<5x2x1xf32>
    %77 = tpu.reciprocal %76 {approx = true} : vector<5x2x1xf32> -> vector<5x2x1xf32>
    %78 = vector.broadcast %77 : vector<5x2x1xf32> to vector<5x2x2xf32>
    %79 = arith.mulf %74, %78 : vector<5x2x2xf32>
    %80 = arith.truncf %79 : vector<5x2x2xf32> to vector<5x2x2xbf16>
    "tpu.trace_start"() <{level = 10 : i32, message = "sbc,scd->sbd"}> : () -> ()
    %cst_27 = arith.constant dense<0.000000e+00> : vector<5x2x8xf32>
    %81 = tpu.matmul %80, %68, %cst_27 {dimension_numbers = #tpu.dot_dimension_numbers<[2], [1], [1], [2], [0, 0, 0, 1, 1, 2], [0], [0]>} : vector<5x2x2xbf16>, vector<5x2x8xbf16>, vector<5x2x8xf32> -> vector<5x2x8xf32>
    "tpu.trace_stop"() : () -> ()
    %82 = vector.shape_cast %81 : vector<5x2x8xf32> to vector<10x8xf32>
    %83 = arith.truncf %82 : vector<10x8xf32> to vector<10x8xbf16>
    %c0_28 = arith.constant 0 : index
    %c16 = arith.constant 16 : index
    %c0_29 = arith.constant 0 : index
    %84 = vector.load %arg4[%c0_28, %c16, %c0_29] : memref<1x32x32xbf16, #tpu.memory_space<vmem>>, vector<1x8x32xbf16>
    %85 = vector.shape_cast %84 : vector<1x8x32xbf16> to vector<8x32xbf16>
    %cst_30 = arith.constant dense<0.000000e+00> : vector<10x32xf32>
    %86 = tpu.matmul %83, %85, %cst_30 {dimension_numbers = #tpu.dot_dimension_numbers<[1], [0], [0], [1], [0, 0, 1, 1], [], []>} : vector<10x8xbf16>, vector<8x32xbf16>, vector<10x32xf32> -> vector<10x32xf32>
    %87 = arith.addf %65, %86 : vector<10x32xf32>
    %88 = vector.extract_strided_slice %14 {offsets = [0, 0, 24], sizes = [5, 2, 8], strides = [1, 1, 1]} : vector<5x2x32xbf16> to vector<5x2x8xbf16>
    %89 = vector.extract_strided_slice %17 {offsets = [0, 0, 24], sizes = [5, 2, 8], strides = [1, 1, 1]} : vector<5x2x32xbf16> to vector<5x2x8xbf16>
    %90 = vector.extract_strided_slice %20 {offsets = [0, 0, 24], sizes = [5, 2, 8], strides = [1, 1, 1]} : vector<5x2x32xbf16> to vector<5x2x8xbf16>
    "tpu.trace_start"() <{level = 10 : i32, message = "sbd,scd->sbc"}> : () -> ()
    %cst_31 = arith.constant dense<0.000000e+00> : vector<5x2x2xf32>
    %91 = tpu.matmul %88, %89, %cst_31 {dimension_numbers = #tpu.dot_dimension_numbers<[2], [2], [1], [1], [0, 0, 0, 1, 1, 1], [0], [0]>} : vector<5x2x8xbf16>, vector<5x2x8xbf16>, vector<5x2x2xf32> -> vector<5x2x2xf32>
    "tpu.trace_stop"() : () -> ()
    %cst_32 = arith.constant dense<0xFF800000> : vector<5x2xf32>
    %92 = vector.multi_reduction <maximumf>, %91, %cst_32 [2] : vector<5x2x2xf32> to vector<5x2xf32>
    %93 = vector.shape_cast %92 : vector<5x2xf32> to vector<5x2x1xf32>
    %94 = vector.broadcast %93 : vector<5x2x1xf32> to vector<5x2x2xf32>
    %95 = arith.subf %91, %94 : vector<5x2x2xf32>
    %96 = math.exp %95 : vector<5x2x2xf32>
    %cst_33 = arith.constant dense<0.000000e+00> : vector<5x2xf32>
    %97 = vector.multi_reduction <add>, %96, %cst_33 [2] : vector<5x2x2xf32> to vector<5x2xf32>
    %98 = vector.shape_cast %97 : vector<5x2xf32> to vector<5x2x1xf32>
    %99 = tpu.reciprocal %98 {approx = true} : vector<5x2x1xf32> -> vector<5x2x1xf32>
    %100 = vector.broadcast %99 : vector<5x2x1xf32> to vector<5x2x2xf32>
    %101 = arith.mulf %96, %100 : vector<5x2x2xf32>
    %102 = arith.truncf %101 : vector<5x2x2xf32> to vector<5x2x2xbf16>
    "tpu.trace_start"() <{level = 10 : i32, message = "sbc,scd->sbd"}> : () -> ()
    %cst_34 = arith.constant dense<0.000000e+00> : vector<5x2x8xf32>
    %103 = tpu.matmul %102, %90, %cst_34 {dimension_numbers = #tpu.dot_dimension_numbers<[2], [1], [1], [2], [0, 0, 0, 1, 1, 2], [0], [0]>} : vector<5x2x2xbf16>, vector<5x2x8xbf16>, vector<5x2x8xf32> -> vector<5x2x8xf32>
    "tpu.trace_stop"() : () -> ()
    %104 = vector.shape_cast %103 : vector<5x2x8xf32> to vector<10x8xf32>
    %105 = arith.truncf %104 : vector<10x8xf32> to vector<10x8xbf16>
    %c0_35 = arith.constant 0 : index
    %c24 = arith.constant 24 : index
    %c0_36 = arith.constant 0 : index
    %106 = vector.load %arg4[%c0_35, %c24, %c0_36] : memref<1x32x32xbf16, #tpu.memory_space<vmem>>, vector<1x8x32xbf16>
    %107 = vector.shape_cast %106 : vector<1x8x32xbf16> to vector<8x32xbf16>
    %cst_37 = arith.constant dense<0.000000e+00> : vector<10x32xf32>
    %108 = tpu.matmul %105, %107, %cst_37 {dimension_numbers = #tpu.dot_dimension_numbers<[1], [0], [0], [1], [0, 0, 1, 1], [], []>} : vector<10x8xbf16>, vector<8x32xbf16>, vector<10x32xf32> -> vector<10x32xf32>
    %109 = arith.addf %87, %108 : vector<10x32xf32>
    %c0_38 = arith.constant 0 : index
    %c0_39 = arith.constant 0 : index
    %c0_40 = arith.constant 0 : index
    %110 = vector.load %arg5[%c0_38, %c0_39, %c0_40] : memref<1x1x32xf32, #tpu.memory_space<vmem>>, vector<1x1x32xf32>
    %111 = vector.shape_cast %110 : vector<1x1x32xf32> to vector<1x32xf32>
    %112 = vector.broadcast %111 : vector<1x32xf32> to vector<10x32xf32>
    %113 = arith.addf %109, %112 : vector<10x32xf32>
    %114 = arith.addf %113, %3 : vector<10x32xf32>
    %c0_41 = arith.constant 0 : index
    %c0_42 = arith.constant 0 : index
    %c0_43 = arith.constant 0 : index
    %115 = vector.load %arg6[%c0_41, %c0_42, %c0_43] : memref<1x1x32xf32, #tpu.memory_space<vmem>>, vector<1x1x32xf32>
    %116 = vector.shape_cast %115 : vector<1x1x32xf32> to vector<1x32xf32>
    %c0_44 = arith.constant 0 : index
    %c0_45 = arith.constant 0 : index
    %c0_46 = arith.constant 0 : index
    %117 = vector.load %arg7[%c0_44, %c0_45, %c0_46] : memref<1x1x32xf32, #tpu.memory_space<vmem>>, vector<1x1x32xf32>
    %118 = vector.shape_cast %117 : vector<1x1x32xf32> to vector<1x32xf32>
    %cst_47 = arith.constant dense<0.000000e+00> : vector<10xf32>
    %119 = vector.multi_reduction <add>, %114, %cst_47 [1] : vector<10x32xf32> to vector<10xf32>
    %120 = vector.shape_cast %119 : vector<10xf32> to vector<10x1xf32>
    %cst_48 = arith.constant 3.200000e+01 : f32
    %121 = vector.broadcast %cst_48 : f32 to vector<10x1xf32>
    %122 = arith.divf %120, %121 : vector<10x1xf32>
    %123 = vector.broadcast %122 : vector<10x1xf32> to vector<10x32xf32>
    %124 = arith.subf %114, %123 : vector<10x32xf32>
    %125 = arith.mulf %124, %124 : vector<10x32xf32>
    %cst_49 = arith.constant dense<0.000000e+00> : vector<10xf32>
    %126 = vector.multi_reduction <add>, %125, %cst_49 [1] : vector<10x32xf32> to vector<10xf32>
    %127 = vector.shape_cast %126 : vector<10xf32> to vector<10x1xf32>
    %cst_50 = arith.constant 3.200000e+01 : f32
    %128 = vector.broadcast %cst_50 : f32 to vector<10x1xf32>
    %129 = arith.divf %127, %128 : vector<10x1xf32>
    %cst_51 = arith.constant 9.99999974E-6 : f32
    %130 = vector.broadcast %cst_51 : f32 to vector<10x1xf32>
    %131 = arith.addf %129, %130 : vector<10x1xf32>
    %132 = math.rsqrt %131 : vector<10x1xf32>
    %133 = vector.broadcast %132 : vector<10x1xf32> to vector<10x32xf32>
    %134 = arith.mulf %124, %133 : vector<10x32xf32>
    %135 = vector.broadcast %116 : vector<1x32xf32> to vector<10x32xf32>
    %136 = arith.mulf %134, %135 : vector<10x32xf32>
    %137 = vector.broadcast %118 : vector<1x32xf32> to vector<10x32xf32>
    %138 = arith.addf %136, %137 : vector<10x32xf32>
    %139 = arith.truncf %138 : vector<10x32xf32> to vector<10x32xbf16>
    %cst_52 = arith.constant 0.000000e+00 : f32
    %140 = vector.broadcast %cst_52 : f32 to vector<10x32xf32>
    %c0_53 = arith.constant 0 : index
    %c0_54 = arith.constant 0 : index
    %c0_55 = arith.constant 0 : index
    %141 = vector.load %arg8[%c0_53, %c0_54, %c0_55] : memref<1x32x64xbf16, #tpu.memory_space<vmem>>, vector<1x32x64xbf16>
    %142 = vector.shape_cast %141 : vector<1x32x64xbf16> to vector<32x64xbf16>
    %cst_56 = arith.constant dense<0.000000e+00> : vector<10x64xf32>
    %143 = tpu.matmul %139, %142, %cst_56 {dimension_numbers = #tpu.dot_dimension_numbers<[1], [0], [0], [1], [0, 0, 1, 1], [], []>} : vector<10x32xbf16>, vector<32x64xbf16>, vector<10x64xf32> -> vector<10x64xf32>
    %c0_57 = arith.constant 0 : index
    %c0_58 = arith.constant 0 : index
    %c0_59 = arith.constant 0 : index
    %144 = vector.load %arg9[%c0_57, %c0_58, %c0_59] : memref<1x1x64xf32, #tpu.memory_space<vmem>>, vector<1x1x64xf32>
    %145 = vector.shape_cast %144 : vector<1x1x64xf32> to vector<1x64xf32>
    %146 = vector.broadcast %145 : vector<1x64xf32> to vector<10x64xf32>
    %147 = arith.addf %143, %146 : vector<10x64xf32>
    %cst_60 = arith.constant 5.000000e-01 : f32
    %148 = vector.broadcast %cst_60 : f32 to vector<10x64xf32>
    %149 = arith.mulf %148, %147 : vector<10x64xf32>
    %cst_61 = arith.constant 4.471500e-02 : f32
    %150 = vector.broadcast %cst_61 : f32 to vector<10x64xf32>
    %151 = arith.mulf %150, %147 : vector<10x64xf32>
    %152 = arith.mulf %151, %147 : vector<10x64xf32>
    %153 = arith.mulf %152, %147 : vector<10x64xf32>
    %154 = arith.addf %147, %153 : vector<10x64xf32>
    %cst_62 = arith.constant 0.797884583 : f32
    %155 = vector.broadcast %cst_62 : f32 to vector<10x64xf32>
    %156 = arith.mulf %155, %154 : vector<10x64xf32>
    %157 = math.tanh %156 : vector<10x64xf32>
    %cst_63 = arith.constant 1.000000e+00 : f32
    %158 = vector.broadcast %cst_63 : f32 to vector<10x64xf32>
    %159 = arith.addf %158, %157 : vector<10x64xf32>
    %160 = arith.mulf %149, %159 : vector<10x64xf32>
    %161 = arith.truncf %160 : vector<10x64xf32> to vector<10x64xbf16>
    %c0_64 = arith.constant 0 : index
    %c0_65 = arith.constant 0 : index
    %c0_66 = arith.constant 0 : index
    %162 = vector.load %arg10[%c0_64, %c0_65, %c0_66] : memref<1x64x32xbf16, #tpu.memory_space<vmem>>, vector<1x64x32xbf16>
    %163 = vector.shape_cast %162 : vector<1x64x32xbf16> to vector<64x32xbf16>
    %cst_67 = arith.constant dense<0.000000e+00> : vector<10x32xf32>
    %164 = tpu.matmul %161, %163, %cst_67 {dimension_numbers = #tpu.dot_dimension_numbers<[1], [0], [0], [1], [0, 0, 1, 1], [], []>} : vector<10x64xbf16>, vector<64x32xbf16>, vector<10x32xf32> -> vector<10x32xf32>
    %165 = arith.addf %140, %164 : vector<10x32xf32>
    %c0_68 = arith.constant 0 : index
    %c0_69 = arith.constant 0 : index
    %c0_70 = arith.constant 0 : index
    %166 = vector.load %arg11[%c0_68, %c0_69, %c0_70] : memref<1x1x32xf32, #tpu.memory_space<vmem>>, vector<1x1x32xf32>
    %167 = vector.shape_cast %166 : vector<1x1x32xf32> to vector<1x32xf32>
    %168 = vector.broadcast %167 : vector<1x32xf32> to vector<10x32xf32>
    %169 = arith.addf %165, %168 : vector<10x32xf32>
    %170 = arith.addf %169, %138 : vector<10x32xf32>
    %c0_71 = arith.constant 0 : index
    %c0_72 = arith.constant 0 : index
    %c0_73 = arith.constant 0 : index
    %171 = vector.load %arg12[%c0_71, %c0_72, %c0_73] : memref<1x1x32xf32, #tpu.memory_space<vmem>>, vector<1x1x32xf32>
    %172 = vector.shape_cast %171 : vector<1x1x32xf32> to vector<1x32xf32>
    %c0_74 = arith.constant 0 : index
    %c0_75 = arith.constant 0 : index
    %c0_76 = arith.constant 0 : index
    %173 = vector.load %arg13[%c0_74, %c0_75, %c0_76] : memref<1x1x32xf32, #tpu.memory_space<vmem>>, vector<1x1x32xf32>
    %174 = vector.shape_cast %173 : vector<1x1x32xf32> to vector<1x32xf32>
    %cst_77 = arith.constant dense<0.000000e+00> : vector<10xf32>
    %175 = vector.multi_reduction <add>, %170, %cst_77 [1] : vector<10x32xf32> to vector<10xf32>
    %176 = vector.shape_cast %175 : vector<10xf32> to vector<10x1xf32>
    %cst_78 = arith.constant 3.200000e+01 : f32
    %177 = vector.broadcast %cst_78 : f32 to vector<10x1xf32>
    %178 = arith.divf %176, %177 : vector<10x1xf32>
    %179 = vector.broadcast %178 : vector<10x1xf32> to vector<10x32xf32>
    %180 = arith.subf %170, %179 : vector<10x32xf32>
    %181 = arith.mulf %180, %180 : vector<10x32xf32>
    %cst_79 = arith.constant dense<0.000000e+00> : vector<10xf32>
    %182 = vector.multi_reduction <add>, %181, %cst_79 [1] : vector<10x32xf32> to vector<10xf32>
    %183 = vector.shape_cast %182 : vector<10xf32> to vector<10x1xf32>
    %cst_80 = arith.constant 3.200000e+01 : f32
    %184 = vector.broadcast %cst_80 : f32 to vector<10x1xf32>
    %185 = arith.divf %183, %184 : vector<10x1xf32>
    %cst_81 = arith.constant 9.99999974E-6 : f32
    %186 = vector.broadcast %cst_81 : f32 to vector<10x1xf32>
    %187 = arith.addf %185, %186 : vector<10x1xf32>
    %188 = math.rsqrt %187 : vector<10x1xf32>
    %189 = vector.broadcast %188 : vector<10x1xf32> to vector<10x32xf32>
    %190 = arith.mulf %180, %189 : vector<10x32xf32>
    %191 = vector.broadcast %172 : vector<1x32xf32> to vector<10x32xf32>
    %192 = arith.mulf %190, %191 : vector<10x32xf32>
    %193 = vector.broadcast %174 : vector<1x32xf32> to vector<10x32xf32>
    %194 = arith.addf %192, %193 : vector<10x32xf32>
    %c0_82 = arith.constant 0 : index
    %c0_83 = arith.constant 0 : index
    %195 = vector.load %arg17[%c0_82, %c0_83] : memref<10x32xf32, #tpu.memory_space<vmem>>, vector<10x32xf32>
    tpu.vector_store %arg17[%c0_82, %c0_83], %194 {strides = array<i32>} : memref<10x32xf32, #tpu.memory_space<vmem>>, vector<10x32xf32>,
    %c1_i32 = arith.constant 1 : i32
    %196 = arith.cmpi eq, %arg0, %c1_i32 : i32
    %197 = arith.extui %196 : i1 to i32
    %c0_i32_84 = arith.constant 0 : i32
    %198 = arith.cmpi ne, %197, %c0_i32_84 : i32
    scf.if %198 {
      %199 = vector.extract_strided_slice %194 {offsets = [0, 0], sizes = [2, 32], strides = [1, 1]} : vector<10x32xf32> to vector<2x32xf32>
      %c0_85 = arith.constant 0 : index
      %c0_86 = arith.constant 0 : index
      %200 = vector.load %arg14[%c0_85, %c0_86] : memref<32x128xbf16, #tpu.memory_space<vmem>>, vector<32x128xbf16>
      %201 = arith.truncf %199 : vector<2x32xf32> to vector<2x32xbf16>
      %cst_87 = arith.constant dense<0.000000e+00> : vector<2x128xf32>
      %202 = tpu.matmul %201, %200, %cst_87 {dimension_numbers = #tpu.dot_dimension_numbers<[1], [0], [0], [1], [0, 0, 1, 1], [], []>} : vector<2x32xbf16>, vector<32x128xbf16>, vector<2x128xf32> -> vector<2x128xf32>
      %c0_88 = arith.constant 0 : index
      %c0_89 = arith.constant 0 : index
      %203 = vector.load %arg15[%c0_88, %c0_89] : memref<1x128xf32, #tpu.memory_space<vmem>>, vector<1x128xf32>
      %204 = vector.broadcast %203 : vector<1x128xf32> to vector<2x128xf32>
      %205 = arith.addf %202, %204 : vector<2x128xf32>
      %c0_90 = arith.constant 0 : index
      %c0_91 = arith.constant 0 : index
      %206 = vector.load %arg16[%c0_90, %c0_91] : memref<2x128xf32, #tpu.memory_space<vmem>>, vector<2x128xf32>
      tpu.vector_store %arg16[%c0_90, %c0_91], %205 {strides = array<i32>} : memref<2x128xf32, #tpu.memory_space<vmem>>, vector<2x128xf32>,
    } else {
    }
    return
  }
  func.func @transform_0(%arg0: i32) -> (i32, i32) {
    %c0_i32 = arith.constant 0 : i32
    %c0_i32_0 = arith.constant 0 : i32
    %c0_i32_1 = arith.constant 0 : i32
    return %c0_i32, %c0_i32_0 : i32, i32
  }
  func.func @transform_1(%arg0: i32) -> (i32, i32, i32) {
    %c0_i32 = arith.constant 0 : i32
    %c0_i32_0 = arith.constant 0 : i32
    %c0_i32_1 = arith.constant 0 : i32
    return %arg0, %c0_i32, %c0_i32_0 : i32, i32, i32
  }
  func.func @transform_2(%arg0: i32) -> (i32, i32, i32) {
    %c0_i32 = arith.constant 0 : i32
    %c0_i32_0 = arith.constant 0 : i32
    %c0_i32_1 = arith.constant 0 : i32
    return %arg0, %c0_i32, %c0_i32_0 : i32, i32, i32
  }
  func.func @transform_3(%arg0: i32) -> (i32, i32, i32) {
    %c0_i32 = arith.constant 0 : i32
    %c0_i32_0 = arith.constant 0 : i32
    %c0_i32_1 = arith.constant 0 : i32
    return %arg0, %c0_i32, %c0_i32_0 : i32, i32, i32
  }
  func.func @transform_4(%arg0: i32) -> (i32, i32, i32) {
    %c0_i32 = arith.constant 0 : i32
    %c0_i32_0 = arith.constant 0 : i32
    %c0_i32_1 = arith.constant 0 : i32
    return %arg0, %c0_i32, %c0_i32_0 : i32, i32, i32
  }
  func.func @transform_5(%arg0: i32) -> (i32, i32, i32) {
    %c0_i32 = arith.constant 0 : i32
    %c0_i32_0 = arith.constant 0 : i32
    %c0_i32_1 = arith.constant 0 : i32
    return %arg0, %c0_i32, %c0_i32_0 : i32, i32, i32
  }
  func.func @transform_6(%arg0: i32) -> (i32, i32, i32) {
    %c0_i32 = arith.constant 0 : i32
    %c0_i32_0 = arith.constant 0 : i32
    %c0_i32_1 = arith.constant 0 : i32
    return %arg0, %c0_i32, %c0_i32_0 : i32, i32, i32
  }
  func.func @transform_7(%arg0: i32) -> (i32, i32, i32) {
    %c0_i32 = arith.constant 0 : i32
    %c0_i32_0 = arith.constant 0 : i32
    %c0_i32_1 = arith.constant 0 : i32
    return %arg0, %c0_i32, %c0_i32_0 : i32, i32, i32
  }
  func.func @transform_8(%arg0: i32) -> (i32, i32, i32) {
    %c0_i32 = arith.constant 0 : i32
    %c0_i32_0 = arith.constant 0 : i32
    %c0_i32_1 = arith.constant 0 : i32
    return %arg0, %c0_i32, %c0_i32_0 : i32, i32, i32
  }
  func.func @transform_9(%arg0: i32) -> (i32, i32, i32) {
    %c0_i32 = arith.constant 0 : i32
    %c0_i32_0 = arith.constant 0 : i32
    %c0_i32_1 = arith.constant 0 : i32
    return %arg0, %c0_i32, %c0_i32_0 : i32, i32, i32
  }
  func.func @transform_10(%arg0: i32) -> (i32, i32, i32) {
    %c0_i32 = arith.constant 0 : i32
    %c0_i32_0 = arith.constant 0 : i32
    %c0_i32_1 = arith.constant 0 : i32
    return %arg0, %c0_i32, %c0_i32_0 : i32, i32, i32
  }
  func.func @transform_11(%arg0: i32) -> (i32, i32, i32) {
    %c0_i32 = arith.constant 0 : i32
    %c0_i32_0 = arith.constant 0 : i32
    %c0_i32_1 = arith.constant 0 : i32
    return %arg0, %c0_i32, %c0_i32_0 : i32, i32, i32
  }
  func.func @transform_12(%arg0: i32) -> (i32, i32, i32) {
    %c0_i32 = arith.constant 0 : i32
    %c0_i32_0 = arith.constant 0 : i32
    %c0_i32_1 = arith.constant 0 : i32
    return %arg0, %c0_i32, %c0_i32_0 : i32, i32, i32
  }
  func.func @transform_13(%arg0: i32) -> (i32, i32) {
    %c0_i32 = arith.constant 0 : i32
    %c0_i32_0 = arith.constant 0 : i32
    %c0_i32_1 = arith.constant 0 : i32
    return %c0_i32, %c0_i32_0 : i32, i32
  }
  func.func @transform_14(%arg0: i32) -> (i32, i32) {
    %c0_i32 = arith.constant 0 : i32
    %c0_i32_0 = arith.constant 0 : i32
    %c0_i32_1 = arith.constant 0 : i32
    return %c0_i32, %c0_i32_0 : i32, i32
  }
  func.func @transform_15(%arg0: i32) -> (i32, i32) {
    %c0_i32 = arith.constant 0 : i32
    %c0_i32_0 = arith.constant 0 : i32
    %c0_i32_1 = arith.constant 0 : i32
    return %c0_i32, %c0_i32_0 : i32, i32
  }
}

</mosaic_0001>

<llo_original>
// kernel: vit_forward.1
$region0: #{vit_forward.1}
  #allocation0 [shape = 'u32[]', space=smem, size = 0x4, offset = 0x4, fixed_abs, tag = 'smem constant byte address 0x4 - core index']
  #allocation1 [shape = 'u32[144,128]{1,0:T(1,128)}', space=vmem, size = 0x12000, scoped, tag = 'internal scratch']
  #allocation2 [shape = 'f32[10,32]{1,0:T(8,128)}', space=vmem, size = 0x2000, scoped, tag = 'scratch operand']
  %s0 = inlined_call_operand.vmem [shape: f32[10,32], index: 0, kind: input, shape index: {}]
  %s1 = inlined_call_operand.vmem [shape: bf16[2,32,96], index: 1, kind: input, shape index: {}]
  %s2 = inlined_call_operand.vmem [shape: f32[2,1,96], index: 2, kind: input, shape index: {}]
  %s3 = inlined_call_operand.vmem [shape: bf16[2,32,32], index: 3, kind: input, shape index: {}]
  %s4 = inlined_call_operand.vmem [shape: f32[2,1,32], index: 4, kind: input, shape index: {}]
  %s5 = inlined_call_operand.vmem [shape: f32[2,1,32], index: 5, kind: input, shape index: {}]
  %s6 = inlined_call_operand.vmem [shape: f32[2,1,32], index: 6, kind: input, shape index: {}]
  %s7 = inlined_call_operand.vmem [shape: bf16[2,32,64], index: 7, kind: input, shape index: {}]
  %s8 = inlined_call_operand.vmem [shape: f32[2,1,64], index: 8, kind: input, shape index: {}]
  %s9 = inlined_call_operand.vmem [shape: bf16[2,64,32], index: 9, kind: input, shape index: {}]
  %s10 = inlined_call_operand.vmem [shape: f32[2,1,32], index: 10, kind: input, shape index: {}]
  %s11 = inlined_call_operand.vmem [shape: f32[2,1,32], index: 11, kind: input, shape index: {}]
  %s12 = inlined_call_operand.vmem [shape: f32[2,1,32], index: 12, kind: input, shape index: {}]
  %s13 = inlined_call_operand.vmem [shape: bf16[32,128], index: 13, kind: input, shape index: {}]
  %s14 = inlined_call_operand.vmem [shape: f32[1,128], index: 14, kind: input, shape index: {}]
  %s15 = inlined_call_operand.hbm [shape: f32[2,128], index: 15, kind: output, shape index: {}]
  %s16 = sld [smem:[#allocation0]]
  $region101: #{vit_forward.1} parent=0
    _
  %s18 = ssub.s32 1, %s16
  %s19 = scalar_select 0, %s18, %s16
  $region1: #{vit_forward.1} parent=0
    #allocation3 [shape = 'u8[1024]{0}', space=vmem, size = 0x400, scoped, tag = 'output window, operand 0, single buffered']
    #allocation4 [shape = 's32[2]{0}', space=sflag, size = 0x8, scoped, tag = 'scoped memory for vit_forward.1']
    %20 = vsyncpa [#allocation4], 0
    loop: start=0, step=1, limit=4
    $region2: #{vit_forward.1} parent=1 // loop_pre_header
      _
    $region3: #{vit_forward.1} parent=1 // loop_header
      %s22 = sphi 0, %s26
      %p23 = scmp.ge.s32.totalorder %s22, 4
      %s30 = sphi 0, %s30
      %s32 = sphi 0, %s30
      %s33 = sphi 0, %s32
      %s47 = sphi 0, %s33
      %s53 = sphi 0, %s55
      %s56 = sphi 0, %s53
      %s57 = sphi 0, %s56
      %s73 = sphi 0, %s57
      %s79 = sphi 0, %s81
      %s82 = sphi 0, %s79
      %s83 = sphi 0, %s82
      %s99 = sphi 0, %s83
      %s105 = sphi 0, %s107
      %s108 = sphi 0, %s105
      %s109 = sphi 0, %s108
      %s125 = sphi 0, %s109
      %s131 = sphi 0, %s133
      %s134 = sphi 0, %s131
      %s135 = sphi 0, %s134
      %s151 = sphi 0, %s135
      %s157 = sphi 0, %s159
      %s160 = sphi 0, %s157
      %s161 = sphi 0, %s160
      %s177 = sphi 0, %s161
      %s183 = sphi 0, %s185
      %s186 = sphi 0, %s183
      %s187 = sphi 0, %s186
      %s203 = sphi 0, %s187
      %s209 = sphi 0, %s211
      %s212 = sphi 0, %s209
      %s213 = sphi 0, %s212
      %s229 = sphi 0, %s213
      %s235 = sphi 0, %s237
      %s238 = sphi 0, %s235
      %s239 = sphi 0, %s238
      %s255 = sphi 0, %s239
      %s261 = sphi 0, %s263
      %s264 = sphi 0, %s261
      %s265 = sphi 0, %s264
      %s281 = sphi 0, %s265
      %s287 = sphi 0, %s289
      %s290 = sphi 0, %s287
      %s291 = sphi 0, %s290
      %s307 = sphi 0, %s291
      %s313 = sphi 0, %s315
      %s316 = sphi 0, %s313
      %s317 = sphi 0, %s316
      %s333 = sphi 0, %s317
      %s339 = sphi 0, %s341
      %s342 = sphi 0, %s339
      %s343 = sphi 0, %s342
      %s359 = sphi 0, %s343
      %s363 = sphi 0, %s363
      %s365 = sphi 0, %s363
      %s366 = sphi 0, %s365
      %s380 = sphi 0, %s366
      %s384 = sphi 0, %s384
      %s386 = sphi 0, %s384
      %s387 = sphi 0, %s386
      %s401 = sphi 0, %s387
      %s405 = sphi 0, %s405
      %s407 = sphi 0, %s405
      %s408 = sphi 0, %s407
      %s422 = sphi 0, %s408
    $region4: #{vit_forward.1} parent=1 // loop_header_branch
      %25 = sbr.rel (%p23) target = $region8
    $region5: #{vit_forward.1} parent=1 // loop_body
      %s27 = ssub.s32 %s22, 1
      %s28 = ssub.s32 %s22, 2
      %s29 = sadd.s32 %s22, 1
      %s31 = sadd.s32 %s30, 1
      %p34 = scmp.eq.s32.totalorder %s22, 1
      %p35 = scmp.ne.s32.totalorder %s30, %s32
      %p36 = scmp.eq.s32.totalorder %s22, 0
      %p37 = por %p35, %p36
      %p38 = scmp.ne.s32.totalorder %s30, %s32
      %p39 = scmp.eq.s32.totalorder %s27, 1
      %p40 = por %p38, %p39
      %p41 = scmp.ne.s32.totalorder %s32, %s33
      %p42 = scmp.eq.s32.totalorder %s27, 0
      %p43 = por %p41, %p42
      %p44 = scmp.ne.s32.totalorder %s32, %s33
      %p45 = scmp.eq.s32.totalorder %s28, 1
      %p46 = por %p44, %p45
      %p48 = scmp.ne.s32.totalorder %s33, %s47
      %p49 = scmp.eq.s32.totalorder %s28, 0
      %p50 = por %p48, %p49
      %s51 = ssub.s32 %s22, %s29
      %p52 = scmp.eq.s32.totalorder %s51, 0
      %s54 = sadd.s32 %s53, 1
      %s55 = scalar_select %p52, %s53, %s54
      %p58 = pneg %p52
      %p59 = scmp.eq.s32.totalorder %s22, 1
      %p60 = por %p58, %p59
      %p61 = scmp.ne.s32.totalorder %s53, %s56
      %p62 = scmp.eq.s32.totalorder %s22, 0
      %p63 = por %p61, %p62
      %p64 = scmp.ne.s32.totalorder %s53, %s56
      %p65 = scmp.eq.s32.totalorder %s27, 1
      %p66 = por %p64, %p65
      %p67 = scmp.ne.s32.totalorder %s56, %s57
      %p68 = scmp.eq.s32.totalorder %s27, 0
      %p69 = por %p67, %p68
      %p70 = scmp.ne.s32.totalorder %s56, %s57
      %p71 = scmp.eq.s32.totalorder %s28, 1
      %p72 = por %p70, %p71
      %p74 = scmp.ne.s32.totalorder %s57, %s73
      %p75 = scmp.eq.s32.totalorder %s28, 0
      %p76 = por %p74, %p75
      %s77 = ssub.s32 %s22, %s29
      %p78 = scmp.eq.s32.totalorder %s77, 0
      %s80 = sadd.s32 %s79, 1
      %s81 = scalar_select %p78, %s79, %s80
      %p84 = pneg %p78
      %p85 = scmp.eq.s32.totalorder %s22, 1
      %p86 = por %p84, %p85
      %p87 = scmp.ne.s32.totalorder %s79, %s82
      %p88 = scmp.eq.s32.totalorder %s22, 0
      %p89 = por %p87, %p88
      %p90 = scmp.ne.s32.totalorder %s79, %s82
      %p91 = scmp.eq.s32.totalorder %s27, 1
      %p92 = por %p90, %p91
      %p93 = scmp.ne.s32.totalorder %s82, %s83
      %p94 = scmp.eq.s32.totalorder %s27, 0
      %p95 = por %p93, %p94
      %p96 = scmp.ne.s32.totalorder %s82, %s83
      %p97 = scmp.eq.s32.totalorder %s28, 1
      %p98 = por %p96, %p97
      %p100 = scmp.ne.s32.totalorder %s83, %s99
      %p101 = scmp.eq.s32.totalorder %s28, 0
      %p102 = por %p100, %p101
      %s103 = ssub.s32 %s22, %s29
      %p104 = scmp.eq.s32.totalorder %s103, 0
      %s106 = sadd.s32 %s105, 1
      %s107 = scalar_select %p104, %s105, %s106
      %p110 = pneg %p104
      %p111 = scmp.eq.s32.totalorder %s22, 1
      %p112 = por %p110, %p111
      %p113 = scmp.ne.s32.totalorder %s105, %s108
      %p114 = scmp.eq.s32.totalorder %s22, 0
      %p115 = por %p113, %p114
      %p116 = scmp.ne.s32.totalorder %s105, %s108
      %p117 = scmp.eq.s32.totalorder %s27, 1
      %p118 = por %p116, %p117
      %p119 = scmp.ne.s32.totalorder %s108, %s109
      %p120 = scmp.eq.s32.totalorder %s27, 0
      %p121 = por %p119, %p120
      %p122 = scmp.ne.s32.totalorder %s108, %s109
      %p123 = scmp.eq.s32.totalorder %s28, 1
      %p124 = por %p122, %p123
      %p126 = scmp.ne.s32.totalorder %s109, %s125
      %p127 = scmp.eq.s32.totalorder %s28, 0
      %p128 = por %p126, %p127
      %s129 = ssub.s32 %s22, %s29
      %p130 = scmp.eq.s32.totalorder %s129, 0
      %s132 = sadd.s32 %s131, 1
      %s133 = scalar_select %p130, %s131, %s132
      %p136 = pneg %p130
      %p137 = scmp.eq.s32.totalorder %s22, 1
      %p138 = por %p136, %p137
      %p139 = scmp.ne.s32.totalorder %s131, %s134
      %p140 = scmp.eq.s32.totalorder %s22, 0
      %p141 = por %p139, %p140
      %p142 = scmp.ne.s32.totalorder %s131, %s134
      %p143 = scmp.eq.s32.totalorder %s27, 1
      %p144 = por %p142, %p143
      %p145 = scmp.ne.s32.totalorder %s134, %s135
      %p146 = scmp.eq.s32.totalorder %s27, 0
      %p147 = por %p145, %p146
      %p148 = scmp.ne.s32.totalorder %s134, %s135
      %p149 = scmp.eq.s32.totalorder %s28, 1
      %p150 = por %p148, %p149
      %p152 = scmp.ne.s32.totalorder %s135, %s151
      %p153 = scmp.eq.s32.totalorder %s28, 0
      %p154 = por %p152, %p153
      %s155 = ssub.s32 %s22, %s29
      %p156 = scmp.eq.s32.totalorder %s155, 0
      %s158 = sadd.s32 %s157, 1
      %s159 = scalar_select %p156, %s157, %s158
      %p162 = pneg %p156
      %p163 = scmp.eq.s32.totalorder %s22, 1
      %p164 = por %p162, %p163
      %p165 = scmp.ne.s32.totalorder %s157, %s160
      %p166 = scmp.eq.s32.totalorder %s22, 0
      %p167 = por %p165, %p166
      %p168 = scmp.ne.s32.totalorder %s157, %s160
      %p169 = scmp.eq.s32.totalorder %s27, 1
      %p170 = por %p168, %p169
      %p171 = scmp.ne.s32.totalorder %s160, %s161
      %p172 = scmp.eq.s32.totalorder %s27, 0
      %p173 = por %p171, %p172
      %p174 = scmp.ne.s32.totalorder %s160, %s161
      %p175 = scmp.eq.s32.totalorder %s28, 1
      %p176 = por %p174, %p175
      %p178 = scmp.ne.s32.totalorder %s161, %s177
      %p179 = scmp.eq.s32.totalorder %s28, 0
      %p180 = por %p178, %p179
      %s181 = ssub.s32 %s22, %s29
      %p182 = scmp.eq.s32.totalorder %s181, 0
      %s184 = sadd.s32 %s183, 1
      %s185 = scalar_select %p182, %s183, %s184
      %p188 = pneg %p182
      %p189 = scmp.eq.s32.totalorder %s22, 1
      %p190 = por %p188, %p189
      %p191 = scmp.ne.s32.totalorder %s183, %s186
      %p192 = scmp.eq.s32.totalorder %s22, 0
      %p193 = por %p191, %p192
      %p194 = scmp.ne.s32.totalorder %s183, %s186
      %p195 = scmp.eq.s32.totalorder %s27, 1
      %p196 = por %p194, %p195
      %p197 = scmp.ne.s32.totalorder %s186, %s187
      %p198 = scmp.eq.s32.totalorder %s27, 0
      %p199 = por %p197, %p198
      %p200 = scmp.ne.s32.totalorder %s186, %s187
      %p201 = scmp.eq.s32.totalorder %s28, 1
      %p202 = por %p200, %p201
      %p204 = scmp.ne.s32.totalorder %s187, %s203
      %p205 = scmp.eq.s32.totalorder %s28, 0
      %p206 = por %p204, %p205
      %s207 = ssub.s32 %s22, %s29
      %p208 = scmp.eq.s32.totalorder %s207, 0
      %s210 = sadd.s32 %s209, 1
      %s211 = scalar_select %p208, %s209, %s210
      %p214 = pneg %p208
      %p215 = scmp.eq.s32.totalorder %s22, 1
      %p216 = por %p214, %p215
      %p217 = scmp.ne.s32.totalorder %s209, %s212
      %p218 = scmp.eq.s32.totalorder %s22, 0
      %p219 = por %p217, %p218
      %p220 = scmp.ne.s32.totalorder %s209, %s212
      %p221 = scmp.eq.s32.totalorder %s27, 1
      %p222 = por %p220, %p221
      %p223 = scmp.ne.s32.totalorder %s212, %s213
      %p224 = scmp.eq.s32.totalorder %s27, 0
      %p225 = por %p223, %p224
      %p226 = scmp.ne.s32.totalorder %s212, %s213
      %p227 = scmp.eq.s32.totalorder %s28, 1
      %p228 = por %p226, %p227
      %p230 = scmp.ne.s32.totalorder %s213, %s229
      %p231 = scmp.eq.s32.totalorder %s28, 0
      %p232 = por %p230, %p231
      %s233 = ssub.s32 %s22, %s29
      %p234 = scmp.eq.s32.totalorder %s233, 0
      %s236 = sadd.s32 %s235, 1
      %s237 = scalar_select %p234, %s235, %s236
      %p240 = pneg %p234
      %p241 = scmp.eq.s32.totalorder %s22, 1
      %p242 = por %p240, %p241
      %p243 = scmp.ne.s32.totalorder %s235, %s238
      %p244 = scmp.eq.s32.totalorder %s22, 0
      %p245 = por %p243, %p244
      %p246 = scmp.ne.s32.totalorder %s235, %s238
      %p247 = scmp.eq.s32.totalorder %s27, 1
      %p248 = por %p246, %p247
      %p249 = scmp.ne.s32.totalorder %s238, %s239
      %p250 = scmp.eq.s32.totalorder %s27, 0
      %p251 = por %p249, %p250
      %p252 = scmp.ne.s32.totalorder %s238, %s239
      %p253 = scmp.eq.s32.totalorder %s28, 1
      %p254 = por %p252, %p253
      %p256 = scmp.ne.s32.totalorder %s239, %s255
      %p257 = scmp.eq.s32.totalorder %s28, 0
      %p258 = por %p256, %p257
      %s259 = ssub.s32 %s22, %s29
      %p260 = scmp.eq.s32.totalorder %s259, 0
      %s262 = sadd.s32 %s261, 1
      %s263 = scalar_select %p260, %s261, %s262
      %p266 = pneg %p260
      %p267 = scmp.eq.s32.totalorder %s22, 1
      %p268 = por %p266, %p267
      %p269 = scmp.ne.s32.totalorder %s261, %s264
      %p270 = scmp.eq.s32.totalorder %s22, 0
      %p271 = por %p269, %p270
      %p272 = scmp.ne.s32.totalorder %s261, %s264
      %p273 = scmp.eq.s32.totalorder %s27, 1
      %p274 = por %p272, %p273
      %p275 = scmp.ne.s32.totalorder %s264, %s265
      %p276 = scmp.eq.s32.totalorder %s27, 0
      %p277 = por %p275, %p276
      %p278 = scmp.ne.s32.totalorder %s264, %s265
      %p279 = scmp.eq.s32.totalorder %s28, 1
      %p280 = por %p278, %p279
      %p282 = scmp.ne.s32.totalorder %s265, %s281
      %p283 = scmp.eq.s32.totalorder %s28, 0
      %p284 = por %p282, %p283
      %s285 = ssub.s32 %s22, %s29
      %p286 = scmp.eq.s32.totalorder %s285, 0
      %s288 = sadd.s32 %s287, 1
      %s289 = scalar_select %p286, %s287, %s288
      %p292 = pneg %p286
      %p293 = scmp.eq.s32.totalorder %s22, 1
      %p294 = por %p292, %p293
      %p295 = scmp.ne.s32.totalorder %s287, %s290
      %p296 = scmp.eq.s32.totalorder %s22, 0
      %p297 = por %p295, %p296
      %p298 = scmp.ne.s32.totalorder %s287, %s290
      %p299 = scmp.eq.s32.totalorder %s27, 1
      %p300 = por %p298, %p299
      %p301 = scmp.ne.s32.totalorder %s290, %s291
      %p302 = scmp.eq.s32.totalorder %s27, 0
      %p303 = por %p301, %p302
      %p304 = scmp.ne.s32.totalorder %s290, %s291
      %p305 = scmp.eq.s32.totalorder %s28, 1
      %p306 = por %p304, %p305
      %p308 = scmp.ne.s32.totalorder %s291, %s307
      %p309 = scmp.eq.s32.totalorder %s28, 0
      %p310 = por %p308, %p309
      %s311 = ssub.s32 %s22, %s29
      %p312 = scmp.eq.s32.totalorder %s311, 0
      %s314 = sadd.s32 %s313, 1
      %s315 = scalar_select %p312, %s313, %s314
      %p318 = pneg %p312
      %p319 = scmp.eq.s32.totalorder %s22, 1
      %p320 = por %p318, %p319
      %p321 = scmp.ne.s32.totalorder %s313, %s316
      %p322 = scmp.eq.s32.totalorder %s22, 0
      %p323 = por %p321, %p322
      %p324 = scmp.ne.s32.totalorder %s313, %s316
      %p325 = scmp.eq.s32.totalorder %s27, 1
      %p326 = por %p324, %p325
      %p327 = scmp.ne.s32.totalorder %s316, %s317
      %p328 = scmp.eq.s32.totalorder %s27, 0
      %p329 = por %p327, %p328
      %p330 = scmp.ne.s32.totalorder %s316, %s317
      %p331 = scmp.eq.s32.totalorder %s28, 1
      %p332 = por %p330, %p331
      %p334 = scmp.ne.s32.totalorder %s317, %s333
      %p335 = scmp.eq.s32.totalorder %s28, 0
      %p336 = por %p334, %p335
      %s337 = ssub.s32 %s22, %s29
      %p338 = scmp.eq.s32.totalorder %s337, 0
      %s340 = sadd.s32 %s339, 1
      %s341 = scalar_select %p338, %s339, %s340
      %p344 = pneg %p338
      %p345 = scmp.eq.s32.totalorder %s22, 1
      %p346 = por %p344, %p345
      %p347 = scmp.ne.s32.totalorder %s339, %s342
      %p348 = scmp.eq.s32.totalorder %s22, 0
      %p349 = por %p347, %p348
      %p350 = scmp.ne.s32.totalorder %s339, %s342
      %p351 = scmp.eq.s32.totalorder %s27, 1
      %p352 = por %p350, %p351
      %p353 = scmp.ne.s32.totalorder %s342, %s343
      %p354 = scmp.eq.s32.totalorder %s27, 0
      %p355 = por %p353, %p354
      %p356 = scmp.ne.s32.totalorder %s342, %s343
      %p357 = scmp.eq.s32.totalorder %s28, 1
      %p358 = por %p356, %p357
      %p360 = scmp.ne.s32.totalorder %s343, %s359
      %p361 = scmp.eq.s32.totalorder %s28, 0
      %p362 = por %p360, %p361
      %s364 = sadd.s32 %s363, 1
      %p367 = scmp.eq.s32.totalorder %s22, 1
      %p368 = scmp.ne.s32.totalorder %s363, %s365
      %p369 = scmp.eq.s32.totalorder %s22, 0
      %p370 = por %p368, %p369
      %p371 = scmp.ne.s32.totalorder %s363, %s365
      %p372 = scmp.eq.s32.totalorder %s27, 1
      %p373 = por %p371, %p372
      %p374 = scmp.ne.s32.totalorder %s365, %s366
      %p375 = scmp.eq.s32.totalorder %s27, 0
      %p376 = por %p374, %p375
      %p377 = scmp.ne.s32.totalorder %s365, %s366
      %p378 = scmp.eq.s32.totalorder %s28, 1
      %p379 = por %p377, %p378
      %p381 = scmp.ne.s32.totalorder %s366, %s380
      %p382 = scmp.eq.s32.totalorder %s28, 0
      %p383 = por %p381, %p382
      %s385 = sadd.s32 %s384, 1
      %p388 = scmp.eq.s32.totalorder %s22, 1
      %p389 = scmp.ne.s32.totalorder %s384, %s386
      %p390 = scmp.eq.s32.totalorder %s22, 0
      %p391 = por %p389, %p390
      %p392 = scmp.ne.s32.totalorder %s384, %s386
      %p393 = scmp.eq.s32.totalorder %s27, 1
      %p394 = por %p392, %p393
      %p395 = scmp.ne.s32.totalorder %s386, %s387
      %p396 = scmp.eq.s32.totalorder %s27, 0
      %p397 = por %p395, %p396
      %p398 = scmp.ne.s32.totalorder %s386, %s387
      %p399 = scmp.eq.s32.totalorder %s28, 1
      %p400 = por %p398, %p399
      %p402 = scmp.ne.s32.totalorder %s387, %s401
      %p403 = scmp.eq.s32.totalorder %s28, 0
      %p404 = por %p402, %p403
      %s406 = sadd.s32 %s405, 1
      %p409 = scmp.eq.s32.totalorder %s22, 1
      %p410 = scmp.ne.s32.totalorder %s405, %s407
      %p411 = scmp.eq.s32.totalorder %s22, 0
      %p412 = por %p410, %p411
      %p413 = scmp.ne.s32.totalorder %s405, %s407
      %p414 = scmp.eq.s32.totalorder %s27, 1
      %p415 = por %p413, %p414
      %p416 = scmp.ne.s32.totalorder %s407, %s408
      %p417 = scmp.eq.s32.totalorder %s27, 0
      %p418 = por %p416, %p417
      %p419 = scmp.ne.s32.totalorder %s407, %s408
      %p420 = scmp.eq.s32.totalorder %s28, 1
      %p421 = por %p419, %p420
      %p423 = scmp.ne.s32.totalorder %s408, %s422
      %p424 = scmp.eq.s32.totalorder %s28, 0
      %p425 = por %p423, %p424
      %p426 = scmp.le.s32.totalorder 1, %s22
      %p427 = scmp.lt.s32.totalorder %s22, 3
      %p428 = pnand %p426, %p427
      %p429 = pneg %p428
      // Predicated region
      $region9: #{vit_forward.1} parent=5 // pred_check
        _
      $region10: #{vit_forward.1} parent=5 // pred_check_branch
        %431 = sbr.rel (%p428) target = $region12
      $region11: #{vit_forward.1} parent=5 // pred_region
        %s432 = ssub.s32 %s22, 1
        // Predicated region
        $region13: #{vit_forward.1} parent=11 // pred_check
          %p433 = pneg %p43
        $region14: #{vit_forward.1} parent=11 // pred_check_branch
          %435 = sbr.rel (%p433) target = $region16
        $region15: #{vit_forward.1} parent=11 // pred_region
          _
        $region16: #{vit_forward.1} parent=11 // pred_fallthru
          _
        // Predicated region
        $region17: #{vit_forward.1} parent=11 // pred_check
          %p436 = pneg %p376
        $region18: #{vit_forward.1} parent=11 // pred_check_branch
          %438 = sbr.rel (%p436) target = $region20
        $region19: #{vit_forward.1} parent=11 // pred_region
          _
        $region20: #{vit_forward.1} parent=11 // pred_fallthru
          _
        // Predicated region
        $region21: #{vit_forward.1} parent=11 // pred_check
          %p439 = pneg %p397
        $region22: #{vit_forward.1} parent=11 // pred_check_branch
          %441 = sbr.rel (%p439) target = $region24
        $region23: #{vit_forward.1} parent=11 // pred_region
          _
        $region24: #{vit_forward.1} parent=11 // pred_fallthru
          _
      $region12: #{vit_forward.1} parent=5 // pred_fallthru
        _
      %p442 = scmp.lt.s32.totalorder %s22, 2
      // Predicated region
      $region25: #{vit_forward.1} parent=5 // pred_check
        %p443 = pneg %p442
      $region26: #{vit_forward.1} parent=5 // pred_check_branch
        %445 = sbr.rel (%p443) target = $region28
      $region27: #{vit_forward.1} parent=5 // pred_region
        // Predicated region
        $region29: #{vit_forward.1} parent=27 // pred_check
          %p446 = pneg %p63
        $region30: #{vit_forward.1} parent=27 // pred_check_branch
          %448 = sbr.rel (%p446) target = $region32
        $region31: #{vit_forward.1} parent=27 // pred_region
          %p449 = scmp.lt.s32.totalorder %s22, 1
          %s450 = scalar_select %p449, %s22, 1
          %s451 = smul.addr %s450, 4
          %s452 = smul.addr %s451, 4
          %s453 = scalar_lea.vmem %s1, %s452
        $region32: #{vit_forward.1} parent=27 // pred_fallthru
          _
        // Predicated region
        $region33: #{vit_forward.1} parent=27 // pred_check
          %p454 = pneg %p89
        $region34: #{vit_forward.1} parent=27 // pred_check_branch
          %456 = sbr.rel (%p454) target = $region36
        $region35: #{vit_forward.1} parent=27 // pred_region
          %p457 = scmp.lt.s32.totalorder %s22, 1
          %s458 = scalar_select %p457, %s22, 1
          %s459 = scalar_lea.vmem %s2, %s458
        $region36: #{vit_forward.1} parent=27 // pred_fallthru
          _
        // Predicated region
        $region37: #{vit_forward.1} parent=27 // pred_check
          %p460 = pneg %p115
        $region38: #{vit_forward.1} parent=27 // pred_check_branch
          %462 = sbr.rel (%p460) target = $region40
        $region39: #{vit_forward.1} parent=27 // pred_region
          %p463 = scmp.lt.s32.totalorder %s22, 1
          %s464 = scalar_select %p463, %s22, 1
          %s465 = smul.addr %s464, 4
          %s466 = smul.addr %s465, 4
          %s467 = scalar_lea.vmem %s3, %s466
        $region40: #{vit_forward.1} parent=27 // pred_fallthru
          _
        // Predicated region
        $region41: #{vit_forward.1} parent=27 // pred_check
          %p468 = pneg %p141
        $region42: #{vit_forward.1} parent=27 // pred_check_branch
          %470 = sbr.rel (%p468) target = $region44
        $region43: #{vit_forward.1} parent=27 // pred_region
          %p471 = scmp.lt.s32.totalorder %s22, 1
          %s472 = scalar_select %p471, %s22, 1
          %s473 = scalar_lea.vmem %s4, %s472
        $region44: #{vit_forward.1} parent=27 // pred_fallthru
          _
        // Predicated region
        $region45: #{vit_forward.1} parent=27 // pred_check
          %p474 = pneg %p167
        $region46: #{vit_forward.1} parent=27 // pred_check_branch
          %476 = sbr.rel (%p474) target = $region48
        $region47: #{vit_forward.1} parent=27 // pred_region
          %p477 = scmp.lt.s32.totalorder %s22, 1
          %s478 = scalar_select %p477, %s22, 1
          %s479 = scalar_lea.vmem %s5, %s478
        $region48: #{vit_forward.1} parent=27 // pred_fallthru
          _
        // Predicated region
        $region49: #{vit_forward.1} parent=27 // pred_check
          %p480 = pneg %p193
        $region50: #{vit_forward.1} parent=27 // pred_check_branch
          %482 = sbr.rel (%p480) target = $region52
        $region51: #{vit_forward.1} parent=27 // pred_region
          %p483 = scmp.lt.s32.totalorder %s22, 1
          %s484 = scalar_select %p483, %s22, 1
          %s485 = scalar_lea.vmem %s6, %s484
        $region52: #{vit_forward.1} parent=27 // pred_fallthru
          _
        // Predicated region
        $region53: #{vit_forward.1} parent=27 // pred_check
          %p486 = pneg %p219
        $region54: #{vit_forward.1} parent=27 // pred_check_branch
          %488 = sbr.rel (%p486) target = $region56
        $region55: #{vit_forward.1} parent=27 // pred_region
          %p489 = scmp.lt.s32.totalorder %s22, 1
          %s490 = scalar_select %p489, %s22, 1
          %s491 = smul.addr %s490, 4
          %s492 = smul.addr %s491, 4
          %s493 = scalar_lea.vmem %s7, %s492
        $region56: #{vit_forward.1} parent=27 // pred_fallthru
          _
        // Predicated region
        $region57: #{vit_forward.1} parent=27 // pred_check
          %p494 = pneg %p245
        $region58: #{vit_forward.1} parent=27 // pred_check_branch
          %496 = sbr.rel (%p494) target = $region60
        $region59: #{vit_forward.1} parent=27 // pred_region
          %p497 = scmp.lt.s32.totalorder %s22, 1
          %s498 = scalar_select %p497, %s22, 1
          %s499 = scalar_lea.vmem %s8, %s498
        $region60: #{vit_forward.1} parent=27 // pred_fallthru
          _
        // Predicated region
        $region61: #{vit_forward.1} parent=27 // pred_check
          %p500 = pneg %p271
        $region62: #{vit_forward.1} parent=27 // pred_check_branch
          %502 = sbr.rel (%p500) target = $region64
        $region63: #{vit_forward.1} parent=27 // pred_region
          %p503 = scmp.lt.s32.totalorder %s22, 1
          %s504 = scalar_select %p503, %s22, 1
          %s505 = smul.addr %s504, 8
          %s506 = smul.addr %s505, 4
          %s507 = scalar_lea.vmem %s9, %s506
        $region64: #{vit_forward.1} parent=27 // pred_fallthru
          _
        // Predicated region
        $region65: #{vit_forward.1} parent=27 // pred_check
          %p508 = pneg %p297
        $region66: #{vit_forward.1} parent=27 // pred_check_branch
          %510 = sbr.rel (%p508) target = $region68
        $region67: #{vit_forward.1} parent=27 // pred_region
          %p511 = scmp.lt.s32.totalorder %s22, 1
          %s512 = scalar_select %p511, %s22, 1
          %s513 = scalar_lea.vmem %s10, %s512
        $region68: #{vit_forward.1} parent=27 // pred_fallthru
          _
        // Predicated region
        $region69: #{vit_forward.1} parent=27 // pred_check
          %p514 = pneg %p323
        $region70: #{vit_forward.1} parent=27 // pred_check_branch
          %516 = sbr.rel (%p514) target = $region72
        $region71: #{vit_forward.1} parent=27 // pred_region
          %p517 = scmp.lt.s32.totalorder %s22, 1
          %s518 = scalar_select %p517, %s22, 1
          %s519 = scalar_lea.vmem %s11, %s518
        $region72: #{vit_forward.1} parent=27 // pred_fallthru
          _
        // Predicated region
        $region73: #{vit_forward.1} parent=27 // pred_check
          %p520 = pneg %p349
        $region74: #{vit_forward.1} parent=27 // pred_check_branch
          %522 = sbr.rel (%p520) target = $region76
        $region75: #{vit_forward.1} parent=27 // pred_region
          %p523 = scmp.lt.s32.totalorder %s22, 1
          %s524 = scalar_select %p523, %s22, 1
          %s525 = scalar_lea.vmem %s12, %s524
        $region76: #{vit_forward.1} parent=27 // pred_fallthru
          _
      $region28: #{vit_forward.1} parent=5 // pred_fallthru
        _
      %p526 = scmp.le.s32.totalorder 1, %s22
      %p527 = scmp.lt.s32.totalorder %s22, 3
      %p528 = pnand %p526, %p527
      %p529 = pneg %p528
      // Predicated region
      $region77: #{vit_forward.1} parent=5 // pred_check
        _
      $region78: #{vit_forward.1} parent=5 // pred_check_branch
        %531 = sbr.rel (%p528) target = $region80
      $region79: #{vit_forward.1} parent=5 // pred_region
        %s532 = ssub.s32 %s22, 1
        %p533 = pneg %p43
        %p534 = pneg %p40
        %p535 = scmp.lt.s32.totalorder %s27, 1
        %s536 = scalar_select %p535, %s27, 1
        %s537 = smul.addr %s536, 4
        %s538 = smul.addr %s537, 4
        %s539 = scalar_lea.vmem %s1, %s538
        %p540 = pneg %p69
        %p541 = pneg %p66
        %p542 = scmp.lt.s32.totalorder %s27, 1
        %s543 = scalar_select %p542, %s27, 1
        %s544 = scalar_lea.vmem %s2, %s543
        %p545 = pneg %p95
        %p546 = pneg %p92
        %p547 = scmp.lt.s32.totalorder %s27, 1
        %s548 = scalar_select %p547, %s27, 1
        %s549 = smul.addr %s548, 4
        %s550 = smul.addr %s549, 4
        %s551 = scalar_lea.vmem %s3, %s550
        %p552 = pneg %p121
        %p553 = pneg %p118
        %p554 = scmp.lt.s32.totalorder %s27, 1
        %s555 = scalar_select %p554, %s27, 1
        %s556 = scalar_lea.vmem %s4, %s555
        %p557 = pneg %p147
        %p558 = pneg %p144
        %p559 = scmp.lt.s32.totalorder %s27, 1
        %s560 = scalar_select %p559, %s27, 1
        %s561 = scalar_lea.vmem %s5, %s560
        %p562 = pneg %p173
        %p563 = pneg %p170
        %p564 = scmp.lt.s32.totalorder %s27, 1
        %s565 = scalar_select %p564, %s27, 1
        %s566 = scalar_lea.vmem %s6, %s565
        %p567 = pneg %p199
        %p568 = pneg %p196
        %p569 = scmp.lt.s32.totalorder %s27, 1
        %s570 = scalar_select %p569, %s27, 1
        %s571 = smul.addr %s570, 4
        %s572 = smul.addr %s571, 4
        %s573 = scalar_lea.vmem %s7, %s572
        %p574 = pneg %p225
        %p575 = pneg %p222
        %p576 = scmp.lt.s32.totalorder %s27, 1
        %s577 = scalar_select %p576, %s27, 1
        %s578 = scalar_lea.vmem %s8, %s577
        %p579 = pneg %p251
        %p580 = pneg %p248
        %p581 = scmp.lt.s32.totalorder %s27, 1
        %s582 = scalar_select %p581, %s27, 1
        %s583 = smul.addr %s582, 8
        %s584 = smul.addr %s583, 4
        %s585 = scalar_lea.vmem %s9, %s584
        %p586 = pneg %p277
        %p587 = pneg %p274
        %p588 = scmp.lt.s32.totalorder %s27, 1
        %s589 = scalar_select %p588, %s27, 1
        %s590 = scalar_lea.vmem %s10, %s589
        %p591 = pneg %p303
        %p592 = pneg %p300
        %p593 = scmp.lt.s32.totalorder %s27, 1
        %s594 = scalar_select %p593, %s27, 1
        %s595 = scalar_lea.vmem %s11, %s594
        %p596 = pneg %p329
        %p597 = pneg %p326
        %p598 = scmp.lt.s32.totalorder %s27, 1
        %s599 = scalar_select %p598, %s27, 1
        %s600 = scalar_lea.vmem %s12, %s599
        %p601 = pneg %p355
        %p602 = pneg %p352
        %p603 = pneg %p376
        %p604 = pneg %p373
        %p605 = pneg %p397
        %p606 = pneg %p394
        %p607 = pneg %p418
        %p608 = pneg %p415
        %p609 = scmp.lt.s32.totalorder %s27, 1
        %s610 = scalar_select %p609, %s27, 1
        %s611 = smul.addr %s610, 4
        %s612 = smul.addr %s611, 4
        %s613 = scalar_lea.vmem %s1, %s612
        %p614 = scmp.lt.s32.totalorder %s27, 1
        %s615 = scalar_select %p614, %s27, 1
        %s616 = scalar_lea.vmem %s2, %s615
        %p617 = scmp.lt.s32.totalorder %s27, 1
        %s618 = scalar_select %p617, %s27, 1
        %s619 = smul.addr %s618, 4
        %s620 = smul.addr %s619, 4
        %s621 = scalar_lea.vmem %s3, %s620
        %p622 = scmp.lt.s32.totalorder %s27, 1
        %s623 = scalar_select %p622, %s27, 1
        %s624 = scalar_lea.vmem %s4, %s623
        %p625 = scmp.lt.s32.totalorder %s27, 1
        %s626 = scalar_select %p625, %s27, 1
        %s627 = scalar_lea.vmem %s5, %s626
        %p628 = scmp.lt.s32.totalorder %s27, 1
        %s629 = scalar_select %p628, %s27, 1
        %s630 = scalar_lea.vmem %s6, %s629
        %p631 = scmp.lt.s32.totalorder %s27, 1
        %s632 = scalar_select %p631, %s27, 1
        %s633 = smul.addr %s632, 4
        %s634 = smul.addr %s633, 4
        %s635 = scalar_lea.vmem %s7, %s634
        %p636 = scmp.lt.s32.totalorder %s27, 1
        %s637 = scalar_select %p636, %s27, 1
        %s638 = scalar_lea.vmem %s8, %s637
        %p639 = scmp.lt.s32.totalorder %s27, 1
        %s640 = scalar_select %p639, %s27, 1
        %s641 = smul.addr %s640, 8
        %s642 = smul.addr %s641, 4
        %s643 = scalar_lea.vmem %s9, %s642
        %p644 = scmp.lt.s32.totalorder %s27, 1
        %s645 = scalar_select %p644, %s27, 1
        %s646 = scalar_lea.vmem %s10, %s645
        %p647 = scmp.lt.s32.totalorder %s27, 1
        %s648 = scalar_select %p647, %s27, 1
        %s649 = scalar_lea.vmem %s11, %s648
        %p650 = scmp.lt.s32.totalorder %s27, 1
        %s651 = scalar_select %p650, %s27, 1
        %s652 = scalar_lea.vmem %s12, %s651
        %p654 = scmp.eq.s32.totalorder %s27, 0
        // Predicated region
        $region81: #{vit_forward.1} parent=79 // pred_check
          %p655 = pneg %p654
        $region82: #{vit_forward.1} parent=79 // pred_check_branch
          %657 = sbr.rel (%p655) target = $region84
        $region83: #{vit_forward.1} parent=79 // pred_region
          %v658 = vld [vmem:[%s0] sm:$0xff]
          %v659 = vld [vmem:[%s0 + $0x8] sm:$0x3]
          %vm660 = vcmask 261120
          %661 = vst.msk [vmem:[#allocation2] sm:$0xff] %vm660, %v658
          %vm662 = vcmask 254976
          %663 = vst.msk [vmem:[#allocation2 + $0x8] sm:$0x3] %vm662, %v659
        $region84: #{vit_forward.1} parent=79 // pred_fallthru
          _
        %v664 = vld [vmem:[#allocation2] sm:$0xff]
        %v665 = vld [vmem:[#allocation2 + $0x8] sm:$0x3]
        %v666 = vld [vmem:[%s613] sm:$0xf]
        %v667 = vld [vmem:[%s613 + $0x4] sm:$0xf]
        %v668 = vld [vmem:[%s613 + $0x8] sm:$0xf]
        %v669 = vld [vmem:[%s613 + $0xc] sm:$0xf]
        %v670 = vpack.c.bf16 %v665, %v664
        %v671 = vld [vmem:[%s616] sm:$0x1]
        %v673 = vlaneseq
        %v674 = vshrl.u32 %v673, 7
        %v675 = vsub.s32 0, %v674
        %v676 = vrot.slane %v671, %v675
        %v682 = vunpack.c.l.b16 %v666
        %v683 = vunpack.c.l.b16 %v667
        %v684 = vunpack.c.l.b16 %v668
        %v685 = vunpack.c.l.b16 %v669
        %v686 = vpack.c.b16 %v683, %v682
        %v687 = vpack.c.b16 %v685, %v684
        %vm690 = vcmask 261120
        %v692 = vsel %vm690, %v670, 0
        %694 = vmatprep.subr.bf16.mxu0 0
        %695 = vmatpush1.bf16.msra.mxu0 0
        %696 = vmatprep.subr.bf16.mxu0 0
        %697 = vmatpush1.bf16.msra.mxu0 0
        %698 = vmatprep.subr.bf16.mxu0 0
        %699 = vmatpush1.bf16.msra.mxu0 0
        %700 = vmatprep.subr.bf16.mxu0 0
        %701 = vmatpush1.bf16.msra.mxu0 0
        %702 = vmatprep.subr.bf16.mxu0 0
        %703 = vmatpush1.bf16.msra.mxu0 0
        %704 = vmatprep.subr.bf16.mxu0 0
        %705 = vmatpush1.bf16.msra.mxu0 0
        %706 = vmatprep.subr.bf16.mxu0 0
        %707 = vmatpush1.bf16.msra.mxu0 %v687
        %708 = vmatprep.subr.bf16.mxu0 0
        %709 = vmatpush1.bf16.msra.mxu0 %v686
        %710 = vmatprep.subr.bf16.mxu0 0
        %711 = vmatpush2.bf16.msra.mxu0 0
        %712 = vmatprep.subr.bf16.mxu0 0
        %713 = vmatpush2.bf16.msra.mxu0 0
        %714 = vmatprep.subr.bf16.mxu0 0
        %715 = vmatpush2.bf16.msra.mxu0 0
        %716 = vmatprep.subr.bf16.mxu0 0
        %717 = vmatpush2.bf16.msra.mxu0 0
        %718 = vmatprep.subr.bf16.mxu0 0
        %719 = vmatpush2.bf16.msra.mxu0 0
        %720 = vmatprep.subr.bf16.mxu0 0
        %721 = vmatpush2.bf16.msra.mxu0 0
        %722 = vmatprep.subr.bf16.mxu0 0
        %723 = vmatpush2.bf16.msra.mxu0 0
        %724 = vmatprep.subr.bf16.mxu0 0
        %725 = vmatpush2.bf16.msra.mxu0 0
        %726 = vmatprep.mubr.bf16.mxu0 0
        %727 = vmatmul.mubr.bf16.gmra.mxu0 %v692
        %v728 = vpop.f32.mrf.mxu0
        %v729 = vadd.f32 %v676, %v728
        %v730 = vpop.f32.mrf.mxu0
        %v731 = vpop.f32.mrf.mxu0
        %v732 = vadd.f32 %v676, %v731
        %v733 = vpop.f32.mrf.mxu0
        %734 = vdwg.mxu0
        %v737 = vcombine.high %v729, %v729
        %v739 = vunpack.c.l.s4 1983009808
        %v740 = vunpack.c.0.s8 %v739
        %v741 = vlaneseq
        %v742 = vshrl.u32 %v741, 7
        %v743 = vsub.s32 %v740, %v742
        %v744 = vrot.slane %v729, %v743
        %v746 = vunpack.c.l.s4 1983009808
        %v747 = vunpack.c.0.s8 %v746
        %v748 = vlaneseq
        %v749 = vshrl.u32 %v748, 7
        %v750 = vsub.s32 %v747, %v749
        %v751 = vrot.slane %v737, %v750
        %v752 = vcombine.high %v744, %v744
        %v753 = vcombine.high %v751, %v751
        %v755 = vunpack.c.l.s4 1983009808
        %v756 = vunpack.c.0.s8 %v755
        %v757 = vlaneseq
        %v758 = vshrl.u32 %v757, 7
        %v759 = vsub.s32 %v756, %v758
        %v760 = vrot.slane %v732, %v759
        %v766 = vpack.c.bf16 %v744, %v744
        %v767 = vpack.c.bf16 %v752, %v752
        %v768 = vpack.c.bf16 %v751, %v751
        %v769 = vpack.c.bf16 %v753, %v753
        %v770 = vpack.c.bf16 %v760, %v760
        %772 = vrot.lane.b32.xlu0 %v766, 96
        %v773 = vpop.permute.xlu0 %772
        %vm774 = vcmask 64512
        %v776 = vsel %vm774, %v766, 0
        %v779 = vsel %vm774, %v773, 0
        %781 = vmatprep.subr.bf16.mxu0 0
        %782 = vmatpush1.bf16.xpose.msra.mxu0 0
        %783 = vmatprep.subr.bf16.mxu0 0
        %784 = vmatpush1.bf16.xpose.msra.mxu0 0
        %785 = vmatprep.subr.bf16.mxu0 0
        %786 = vmatpush1.bf16.xpose.msra.mxu0 0
        %787 = vmatprep.subr.bf16.mxu0 0
        %788 = vmatpush1.bf16.xpose.msra.mxu0 0
        %789 = vmatprep.subr.bf16.mxu0 0
        %790 = vmatpush1.bf16.xpose.msra.mxu0 0
        %791 = vmatprep.subr.bf16.mxu0 0
        %792 = vmatpush1.bf16.xpose.msra.mxu0 0
        %793 = vmatprep.subr.bf16.mxu0 0
        %794 = vmatpush1.bf16.xpose.msra.mxu0 0
        %795 = vmatprep.subr.bf16.mxu0 0
        %796 = vmatpush1.bf16.xpose.msra.mxu0 %v779
        %797 = vmatprep.subr.bf16.mxu0 0
        %798 = vmatpush2.bf16.xpose.msra.mxu0 0
        %799 = vmatprep.subr.bf16.mxu0 0
        %800 = vmatpush2.bf16.xpose.msra.mxu0 0
        %801 = vmatprep.subr.bf16.mxu0 0
        %802 = vmatpush2.bf16.xpose.msra.mxu0 0
        %803 = vmatprep.subr.bf16.mxu0 0
        %804 = vmatpush2.bf16.xpose.msra.mxu0 0
        %805 = vmatprep.subr.bf16.mxu0 0
        %806 = vmatpush2.bf16.xpose.msra.mxu0 0
        %807 = vmatprep.subr.bf16.mxu0 0
        %808 = vmatpush2.bf16.xpose.msra.mxu0 0
        %809 = vmatprep.subr.bf16.mxu0 0
        %810 = vmatpush2.bf16.xpose.msra.mxu0 0
        %811 = vmatprep.subr.bf16.mxu0 0
        %812 = vmatpush2.bf16.xpose.msra.mxu0 0
        %813 = vmatprep.mubr.bf16.mxu0 0
        %814 = vmatmul.mubr.bf16.gmra.mxu0 %v776
        %v815 = vpop.f32.mrf.mxu0
        %v816 = vadd.f32 0.0, %v815
        %v817 = vpop.f32.mrf.mxu0
        %v818 = vpop.f32.mrf.mxu0
        %v819 = vpop.f32.mrf.mxu0
        %820 = vdwg.mxu0
        %822 = vrot.lane.b32.xlu0 %v767, 96
        %v823 = vpop.permute.xlu0 %822
        %v825 = vsel %vm774, %v767, 0
        %v828 = vsel %vm774, %v823, 0
        %830 = vmatprep.subr.bf16.mxu0 0
        %831 = vmatpush1.bf16.xpose.msra.mxu0 0
        %832 = vmatprep.subr.bf16.mxu0 0
        %833 = vmatpush1.bf16.xpose.msra.mxu0 0
        %834 = vmatprep.subr.bf16.mxu0 0
        %835 = vmatpush1.bf16.xpose.msra.mxu0 0
        %836 = vmatprep.subr.bf16.mxu0 0
        %837 = vmatpush1.bf16.xpose.msra.mxu0 0
        %838 = vmatprep.subr.bf16.mxu0 0
        %839 = vmatpush1.bf16.xpose.msra.mxu0 0
        %840 = vmatprep.subr.bf16.mxu0 0
        %841 = vmatpush1.bf16.xpose.msra.mxu0 0
        %842 = vmatprep.subr.bf16.mxu0 0
        %843 = vmatpush1.bf16.xpose.msra.mxu0 0
        %844 = vmatprep.subr.bf16.mxu0 0
        %845 = vmatpush1.bf16.xpose.msra.mxu0 %v828
        %846 = vmatprep.subr.bf16.mxu0 0
        %847 = vmatpush2.bf16.xpose.msra.mxu0 0
        %848 = vmatprep.subr.bf16.mxu0 0
        %849 = vmatpush2.bf16.xpose.msra.mxu0 0
        %850 = vmatprep.subr.bf16.mxu0 0
        %851 = vmatpush2.bf16.xpose.msra.mxu0 0
        %852 = vmatprep.subr.bf16.mxu0 0
        %853 = vmatpush2.bf16.xpose.msra.mxu0 0
        %854 = vmatprep.subr.bf16.mxu0 0
        %855 = vmatpush2.bf16.xpose.msra.mxu0 0
        %856 = vmatprep.subr.bf16.mxu0 0
        %857 = vmatpush2.bf16.xpose.msra.mxu0 0
        %858 = vmatprep.subr.bf16.mxu0 0
        %859 = vmatpush2.bf16.xpose.msra.mxu0 0
        %860 = vmatprep.subr.bf16.mxu0 0
        %861 = vmatpush2.bf16.xpose.msra.mxu0 0
        %862 = vmatprep.mubr.bf16.mxu0 0
        %863 = vmatmul.mubr.bf16.gmra.mxu0 %v825
        %v864 = vpop.f32.mrf.mxu0
        %v865 = vadd.f32 0.0, %v864
        %v866 = vpop.f32.mrf.mxu0
        %v867 = vpop.f32.mrf.mxu0
        %v868 = vpop.f32.mrf.mxu0
        %869 = vdwg.mxu0
        %871 = vrot.lane.b32.xlu0 %v768, 96
        %v872 = vpop.permute.xlu0 %871
        %v874 = vsel %vm774, %v768, 0
        %v877 = vsel %vm774, %v872, 0
        %879 = vmatprep.subr.bf16.mxu0 0
        %880 = vmatpush1.bf16.xpose.msra.mxu0 0
        %881 = vmatprep.subr.bf16.mxu0 0
        %882 = vmatpush1.bf16.xpose.msra.mxu0 0
        %883 = vmatprep.subr.bf16.mxu0 0
        %884 = vmatpush1.bf16.xpose.msra.mxu0 0
        %885 = vmatprep.subr.bf16.mxu0 0
        %886 = vmatpush1.bf16.xpose.msra.mxu0 0
        %887 = vmatprep.subr.bf16.mxu0 0
        %888 = vmatpush1.bf16.xpose.msra.mxu0 0
        %889 = vmatprep.subr.bf16.mxu0 0
        %890 = vmatpush1.bf16.xpose.msra.mxu0 0
        %891 = vmatprep.subr.bf16.mxu0 0
        %892 = vmatpush1.bf16.xpose.msra.mxu0 0
        %893 = vmatprep.subr.bf16.mxu0 0
        %894 = vmatpush1.bf16.xpose.msra.mxu0 %v877
        %895 = vmatprep.subr.bf16.mxu0 0
        %896 = vmatpush2.bf16.xpose.msra.mxu0 0
        %897 = vmatprep.subr.bf16.mxu0 0
        %898 = vmatpush2.bf16.xpose.msra.mxu0 0
        %899 = vmatprep.subr.bf16.mxu0 0
        %900 = vmatpush2.bf16.xpose.msra.mxu0 0
        %901 = vmatprep.subr.bf16.mxu0 0
        %902 = vmatpush2.bf16.xpose.msra.mxu0 0
        %903 = vmatprep.subr.bf16.mxu0 0
        %904 = vmatpush2.bf16.xpose.msra.mxu0 0
        %905 = vmatprep.subr.bf16.mxu0 0
        %906 = vmatpush2.bf16.xpose.msra.mxu0 0
        %907 = vmatprep.subr.bf16.mxu0 0
        %908 = vmatpush2.bf16.xpose.msra.mxu0 0
        %909 = vmatprep.subr.bf16.mxu0 0
        %910 = vmatpush2.bf16.xpose.msra.mxu0 0
        %911 = vmatprep.mubr.bf16.mxu0 0
        %912 = vmatmul.mubr.bf16.gmra.mxu0 %v874
        %v913 = vpop.f32.mrf.mxu0
        %v914 = vadd.f32 0.0, %v913
        %v915 = vpop.f32.mrf.mxu0
        %v916 = vpop.f32.mrf.mxu0
        %v917 = vpop.f32.mrf.mxu0
        %918 = vdwg.mxu0
        %920 = vrot.lane.b32.xlu0 %v769, 96
        %v921 = vpop.permute.xlu0 %920
        %v923 = vsel %vm774, %v769, 0
        %v926 = vsel %vm774, %v921, 0
        %928 = vmatprep.subr.bf16.mxu0 0
        %929 = vmatpush1.bf16.xpose.msra.mxu0 0
        %930 = vmatprep.subr.bf16.mxu0 0
        %931 = vmatpush1.bf16.xpose.msra.mxu0 0
        %932 = vmatprep.subr.bf16.mxu0 0
        %933 = vmatpush1.bf16.xpose.msra.mxu0 0
        %934 = vmatprep.subr.bf16.mxu0 0
        %935 = vmatpush1.bf16.xpose.msra.mxu0 0
        %936 = vmatprep.subr.bf16.mxu0 0
        %937 = vmatpush1.bf16.xpose.msra.mxu0 0
        %938 = vmatprep.subr.bf16.mxu0 0
        %939 = vmatpush1.bf16.xpose.msra.mxu0 0
        %940 = vmatprep.subr.bf16.mxu0 0
        %941 = vmatpush1.bf16.xpose.msra.mxu0 0
        %942 = vmatprep.subr.bf16.mxu0 0
        %943 = vmatpush1.bf16.xpose.msra.mxu0 %v926
        %944 = vmatprep.subr.bf16.mxu0 0
        %945 = vmatpush2.bf16.xpose.msra.mxu0 0
        %946 = vmatprep.subr.bf16.mxu0 0
        %947 = vmatpush2.bf16.xpose.msra.mxu0 0
        %948 = vmatprep.subr.bf16.mxu0 0
        %949 = vmatpush2.bf16.xpose.msra.mxu0 0
        %950 = vmatprep.subr.bf16.mxu0 0
        %951 = vmatpush2.bf16.xpose.msra.mxu0 0
        %952 = vmatprep.subr.bf16.mxu0 0
        %953 = vmatpush2.bf16.xpose.msra.mxu0 0
        %954 = vmatprep.subr.bf16.mxu0 0
        %955 = vmatpush2.bf16.xpose.msra.mxu0 0
        %956 = vmatprep.subr.bf16.mxu0 0
        %957 = vmatpush2.bf16.xpose.msra.mxu0 0
        %958 = vmatprep.subr.bf16.mxu0 0
        %959 = vmatpush2.bf16.xpose.msra.mxu0 0
        %960 = vmatprep.mubr.bf16.mxu0 0
        %961 = vmatmul.mubr.bf16.gmra.mxu0 %v923
        %v962 = vpop.f32.mrf.mxu0
        %v963 = vadd.f32 0.0, %v962
        %v964 = vpop.f32.mrf.mxu0
        %v965 = vpop.f32.mrf.mxu0
        %v966 = vpop.f32.mrf.mxu0
        %967 = vdwg.mxu0
        %969 = vrot.lane.b32.xlu0 %v770, 96
        %v970 = vpop.permute.xlu0 %969
        %v972 = vsel %vm774, %v770, 0
        %v975 = vsel %vm774, %v970, 0
        %977 = vmatprep.subr.bf16.mxu0 0
        %978 = vmatpush1.bf16.xpose.msra.mxu0 0
        %979 = vmatprep.subr.bf16.mxu0 0
        %980 = vmatpush1.bf16.xpose.msra.mxu0 0
        %981 = vmatprep.subr.bf16.mxu0 0
        %982 = vmatpush1.bf16.xpose.msra.mxu0 0
        %983 = vmatprep.subr.bf16.mxu0 0
        %984 = vmatpush1.bf16.xpose.msra.mxu0 0
        %985 = vmatprep.subr.bf16.mxu0 0
        %986 = vmatpush1.bf16.xpose.msra.mxu0 0
        %987 = vmatprep.subr.bf16.mxu0 0
        %988 = vmatpush1.bf16.xpose.msra.mxu0 0
        %989 = vmatprep.subr.bf16.mxu0 0
        %990 = vmatpush1.bf16.xpose.msra.mxu0 0
        %991 = vmatprep.subr.bf16.mxu0 0
        %992 = vmatpush1.bf16.xpose.msra.mxu0 %v975
        %993 = vmatprep.subr.bf16.mxu0 0
        %994 = vmatpush2.bf16.xpose.msra.mxu0 0
        %995 = vmatprep.subr.bf16.mxu0 0
        %996 = vmatpush2.bf16.xpose.msra.mxu0 0
        %997 = vmatprep.subr.bf16.mxu0 0
        %998 = vmatpush2.bf16.xpose.msra.mxu0 0
        %999 = vmatprep.subr.bf16.mxu0 0
        %1000 = vmatpush2.bf16.xpose.msra.mxu0 0
        %1001 = vmatprep.subr.bf16.mxu0 0
        %1002 = vmatpush2.bf16.xpose.msra.mxu0 0
        %1003 = vmatprep.subr.bf16.mxu0 0
        %1004 = vmatpush2.bf16.xpose.msra.mxu0 0
        %1005 = vmatprep.subr.bf16.mxu0 0
        %1006 = vmatpush2.bf16.xpose.msra.mxu0 0
        %1007 = vmatprep.subr.bf16.mxu0 0
        %1008 = vmatpush2.bf16.xpose.msra.mxu0 0
        %1009 = vmatprep.mubr.bf16.mxu0 0
        %1010 = vmatmul.mubr.bf16.gmra.mxu0 %v972
        %v1011 = vpop.f32.mrf.mxu0
        %v1012 = vadd.f32 0.0, %v1011
        %v1013 = vpop.f32.mrf.mxu0
        %v1014 = vpop.f32.mrf.mxu0
        %v1015 = vpop.f32.mrf.mxu0
        %1016 = vdwg.mxu0
        %vm1017 = vcmask 9216
        %v1018 = vsel %vm1017, %v816, -inf
        %1019 = vmax.xlane.f32.xlu0 %v1018
        %v1020 = vpop.xlane.xlu0 %1019
        %v1021 = vsel %vm1017, %v865, -inf
        %1022 = vmax.xlane.f32.xlu0 %v1021
        %v1023 = vpop.xlane.xlu0 %1022
        %v1024 = vsel %vm1017, %v914, -inf
        %1025 = vmax.xlane.f32.xlu0 %v1024
        %v1026 = vpop.xlane.xlu0 %1025
        %v1027 = vsel %vm1017, %v963, -inf
        %1028 = vmax.xlane.f32.xlu0 %v1027
        %v1029 = vpop.xlane.xlu0 %1028
        %v1030 = vsel %vm1017, %v1012, -inf
        %1031 = vmax.xlane.f32.xlu0 %v1030
        %v1032 = vpop.xlane.xlu0 %1031
        %v1033 = vsub.f32 %v816, %v1020
        %v1034 = vsub.f32 %v865, %v1023
        %v1035 = vsub.f32 %v914, %v1026
        %v1036 = vsub.f32 %v963, %v1029
        %v1037 = vsub.f32 %v1012, %v1032
        %v1038 = vmul.f32 %v1033, 1.442695
        %v1039 = vpow.pop %v1038
        %v1040 = vmul.f32 %v1034, 1.442695
        %v1041 = vpow.pop %v1040
        %v1042 = vmul.f32 %v1035, 1.442695
        %v1043 = vpow.pop %v1042
        %v1044 = vmul.f32 %v1036, 1.442695
        %v1045 = vpow.pop %v1044
        %v1046 = vmul.f32 %v1037, 1.442695
        %v1047 = vpow.pop %v1046
        %v1048 = vsel %vm1017, %v1039, 0.0
        %1049 = vadd.xlane.f32.xlu0 %v1048
        %v1050 = vpop.xlane.xlu0 %1049
        %v1051 = vsel %vm1017, %v1041, 0.0
        %1052 = vadd.xlane.f32.xlu0 %v1051
        %v1053 = vpop.xlane.xlu0 %1052
        %v1054 = vsel %vm1017, %v1043, 0.0
        %1055 = vadd.xlane.f32.xlu0 %v1054
        %v1056 = vpop.xlane.xlu0 %1055
        %v1057 = vsel %vm1017, %v1045, 0.0
        %1058 = vadd.xlane.f32.xlu0 %v1057
        %v1059 = vpop.xlane.xlu0 %1058
        %v1060 = vsel %vm1017, %v1047, 0.0
        %1061 = vadd.xlane.f32.xlu0 %v1060
        %v1062 = vpop.xlane.xlu0 %1061
        %v1063 = vrcp.pop %v1050
        %v1064 = vrcp.pop %v1053
        %v1065 = vrcp.pop %v1056
        %v1066 = vrcp.pop %v1059
        %v1067 = vrcp.pop %v1062
        %v1068 = vmul.f32 %v1039, %v1063
        %v1069 = vmul.f32 %v1041, %v1064
        %v1070 = vmul.f32 %v1043, %v1065
        %v1071 = vmul.f32 %v1045, %v1066
        %v1072 = vmul.f32 %v1047, %v1067
        %v1073 = vpack.c.bf16 %v1068, %v1068
        %v1074 = vpack.c.bf16 %v1069, %v1069
        %v1075 = vpack.c.bf16 %v1070, %v1070
        %v1076 = vpack.c.bf16 %v1071, %v1071
        %v1077 = vpack.c.bf16 %v1072, %v1072
        %1078 = vrot.lane.b32.xlu0 %v766, 64
        %v1079 = vpop.permute.xlu0 %1078
        %vm1080 = vcmask 15360
        %v1082 = vsel %vm1080, %v1073, 0
        %vm1084 = vcmask 1040384
        %v1086 = vsel %vm1084, %v1079, 0
        %1088 = vmatprep.subr.bf16.mxu0 0
        %1089 = vmatpush1.bf16.msra.mxu0 0
        %1090 = vmatprep.subr.bf16.mxu0 0
        %1091 = vmatpush1.bf16.msra.mxu0 0
        %1092 = vmatprep.subr.bf16.mxu0 0
        %1093 = vmatpush1.bf16.msra.mxu0 0
        %1094 = vmatprep.subr.bf16.mxu0 0
        %1095 = vmatpush1.bf16.msra.mxu0 0
        %1096 = vmatprep.subr.bf16.mxu0 0
        %1097 = vmatpush1.bf16.msra.mxu0 0
        %1098 = vmatprep.subr.bf16.mxu0 0
        %1099 = vmatpush1.bf16.msra.mxu0 0
        %1100 = vmatprep.subr.bf16.mxu0 0
        %1101 = vmatpush1.bf16.msra.mxu0 0
        %1102 = vmatprep.subr.bf16.mxu0 0
        %1103 = vmatpush1.bf16.msra.mxu0 %v1086
        %1104 = vmatprep.subr.bf16.mxu0 0
        %1105 = vmatpush2.bf16.msra.mxu0 0
        %1106 = vmatprep.subr.bf16.mxu0 0
        %1107 = vmatpush2.bf16.msra.mxu0 0
        %1108 = vmatprep.subr.bf16.mxu0 0
        %1109 = vmatpush2.bf16.msra.mxu0 0
        %1110 = vmatprep.subr.bf16.mxu0 0
        %1111 = vmatpush2.bf16.msra.mxu0 0
        %1112 = vmatprep.subr.bf16.mxu0 0
        %1113 = vmatpush2.bf16.msra.mxu0 0
        %1114 = vmatprep.subr.bf16.mxu0 0
        %1115 = vmatpush2.bf16.msra.mxu0 0
        %1116 = vmatprep.subr.bf16.mxu0 0
        %1117 = vmatpush2.bf16.msra.mxu0 0
        %1118 = vmatprep.subr.bf16.mxu0 0
        %1119 = vmatpush2.bf16.msra.mxu0 0
        %1120 = vmatprep.mubr.bf16.mxu0 0
        %1121 = vmatmul.mubr.bf16.gmra.mxu0 %v1082
        %v1122 = vpop.f32.mrf.mxu0
        %v1123 = vadd.f32 0.0, %v1122
        %v1124 = vpop.f32.mrf.mxu0
        %v1125 = vpop.f32.mrf.mxu0
        %v1126 = vpop.f32.mrf.mxu0
        %1127 = vdwg.mxu0
        %1128 = vrot.lane.b32.xlu0 %v767, 64
        %v1129 = vpop.permute.xlu0 %1128
        %v1131 = vsel %vm1080, %v1074, 0
        %v1134 = vsel %vm1084, %v1129, 0
        %1136 = vmatprep.subr.bf16.mxu0 0
        %1137 = vmatpush1.bf16.msra.mxu0 0
        %1138 = vmatprep.subr.bf16.mxu0 0
        %1139 = vmatpush1.bf16.msra.mxu0 0
        %1140 = vmatprep.subr.bf16.mxu0 0
        %1141 = vmatpush1.bf16.msra.mxu0 0
        %1142 = vmatprep.subr.bf16.mxu0 0
        %1143 = vmatpush1.bf16.msra.mxu0 0
        %1144 = vmatprep.subr.bf16.mxu0 0
        %1145 = vmatpush1.bf16.msra.mxu0 0
        %1146 = vmatprep.subr.bf16.mxu0 0
        %1147 = vmatpush1.bf16.msra.mxu0 0
        %1148 = vmatprep.subr.bf16.mxu0 0
        %1149 = vmatpush1.bf16.msra.mxu0 0
        %1150 = vmatprep.subr.bf16.mxu0 0
        %1151 = vmatpush1.bf16.msra.mxu0 %v1134
        %1152 = vmatprep.subr.bf16.mxu0 0
        %1153 = vmatpush2.bf16.msra.mxu0 0
        %1154 = vmatprep.subr.bf16.mxu0 0
        %1155 = vmatpush2.bf16.msra.mxu0 0
        %1156 = vmatprep.subr.bf16.mxu0 0
        %1157 = vmatpush2.bf16.msra.mxu0 0
        %1158 = vmatprep.subr.bf16.mxu0 0
        %1159 = vmatpush2.bf16.msra.mxu0 0
        %1160 = vmatprep.subr.bf16.mxu0 0
        %1161 = vmatpush2.bf16.msra.mxu0 0
        %1162 = vmatprep.subr.bf16.mxu0 0
        %1163 = vmatpush2.bf16.msra.mxu0 0
        %1164 = vmatprep.subr.bf16.mxu0 0
        %1165 = vmatpush2.bf16.msra.mxu0 0
        %1166 = vmatprep.subr.bf16.mxu0 0
        %1167 = vmatpush2.bf16.msra.mxu0 0
        %1168 = vmatprep.mubr.bf16.mxu0 0
        %1169 = vmatmul.mubr.bf16.gmra.mxu0 %v1131
        %v1170 = vpop.f32.mrf.mxu0
        %v1171 = vadd.f32 0.0, %v1170
        %v1172 = vpop.f32.mrf.mxu0
        %v1173 = vpop.f32.mrf.mxu0
        %v1174 = vpop.f32.mrf.mxu0
        %1175 = vdwg.mxu0
        %1176 = vrot.lane.b32.xlu0 %v768, 64
        %v1177 = vpop.permute.xlu0 %1176
        %v1179 = vsel %vm1080, %v1075, 0
        %v1182 = vsel %vm1084, %v1177, 0
        %1184 = vmatprep.subr.bf16.mxu0 0
        %1185 = vmatpush1.bf16.msra.mxu0 0
        %1186 = vmatprep.subr.bf16.mxu0 0
        %1187 = vmatpush1.bf16.msra.mxu0 0
        %1188 = vmatprep.subr.bf16.mxu0 0
        %1189 = vmatpush1.bf16.msra.mxu0 0
        %1190 = vmatprep.subr.bf16.mxu0 0
        %1191 = vmatpush1.bf16.msra.mxu0 0
        %1192 = vmatprep.subr.bf16.mxu0 0
        %1193 = vmatpush1.bf16.msra.mxu0 0
        %1194 = vmatprep.subr.bf16.mxu0 0
        %1195 = vmatpush1.bf16.msra.mxu0 0
        %1196 = vmatprep.subr.bf16.mxu0 0
        %1197 = vmatpush1.bf16.msra.mxu0 0
        %1198 = vmatprep.subr.bf16.mxu0 0
        %1199 = vmatpush1.bf16.msra.mxu0 %v1182
        %1200 = vmatprep.subr.bf16.mxu0 0
        %1201 = vmatpush2.bf16.msra.mxu0 0
        %1202 = vmatprep.subr.bf16.mxu0 0
        %1203 = vmatpush2.bf16.msra.mxu0 0
        %1204 = vmatprep.subr.bf16.mxu0 0
        %1205 = vmatpush2.bf16.msra.mxu0 0
        %1206 = vmatprep.subr.bf16.mxu0 0
        %1207 = vmatpush2.bf16.msra.mxu0 0
        %1208 = vmatprep.subr.bf16.mxu0 0
        %1209 = vmatpush2.bf16.msra.mxu0 0
        %1210 = vmatprep.subr.bf16.mxu0 0
        %1211 = vmatpush2.bf16.msra.mxu0 0
        %1212 = vmatprep.subr.bf16.mxu0 0
        %1213 = vmatpush2.bf16.msra.mxu0 0
        %1214 = vmatprep.subr.bf16.mxu0 0
        %1215 = vmatpush2.bf16.msra.mxu0 0
        %1216 = vmatprep.mubr.bf16.mxu0 0
        %1217 = vmatmul.mubr.bf16.gmra.mxu0 %v1179
        %v1218 = vpop.f32.mrf.mxu0
        %v1219 = vadd.f32 0.0, %v1218
        %v1220 = vpop.f32.mrf.mxu0
        %v1221 = vpop.f32.mrf.mxu0
        %v1222 = vpop.f32.mrf.mxu0
        %1223 = vdwg.mxu0
        %1224 = vrot.lane.b32.xlu0 %v769, 64
        %v1225 = vpop.permute.xlu0 %1224
        %v1227 = vsel %vm1080, %v1076, 0
        %v1230 = vsel %vm1084, %v1225, 0
        %1232 = vmatprep.subr.bf16.mxu0 0
        %1233 = vmatpush1.bf16.msra.mxu0 0
        %1234 = vmatprep.subr.bf16.mxu0 0
        %1235 = vmatpush1.bf16.msra.mxu0 0
        %1236 = vmatprep.subr.bf16.mxu0 0
        %1237 = vmatpush1.bf16.msra.mxu0 0
        %1238 = vmatprep.subr.bf16.mxu0 0
        %1239 = vmatpush1.bf16.msra.mxu0 0
        %1240 = vmatprep.subr.bf16.mxu0 0
        %1241 = vmatpush1.bf16.msra.mxu0 0
        %1242 = vmatprep.subr.bf16.mxu0 0
        %1243 = vmatpush1.bf16.msra.mxu0 0
        %1244 = vmatprep.subr.bf16.mxu0 0
        %1245 = vmatpush1.bf16.msra.mxu0 0
        %1246 = vmatprep.subr.bf16.mxu0 0
        %1247 = vmatpush1.bf16.msra.mxu0 %v1230
        %1248 = vmatprep.subr.bf16.mxu0 0
        %1249 = vmatpush2.bf16.msra.mxu0 0
        %1250 = vmatprep.subr.bf16.mxu0 0
        %1251 = vmatpush2.bf16.msra.mxu0 0
        %1252 = vmatprep.subr.bf16.mxu0 0
        %1253 = vmatpush2.bf16.msra.mxu0 0
        %1254 = vmatprep.subr.bf16.mxu0 0
        %1255 = vmatpush2.bf16.msra.mxu0 0
        %1256 = vmatprep.subr.bf16.mxu0 0
        %1257 = vmatpush2.bf16.msra.mxu0 0
        %1258 = vmatprep.subr.bf16.mxu0 0
        %1259 = vmatpush2.bf16.msra.mxu0 0
        %1260 = vmatprep.subr.bf16.mxu0 0
        %1261 = vmatpush2.bf16.msra.mxu0 0
        %1262 = vmatprep.subr.bf16.mxu0 0
        %1263 = vmatpush2.bf16.msra.mxu0 0
        %1264 = vmatprep.mubr.bf16.mxu0 0
        %1265 = vmatmul.mubr.bf16.gmra.mxu0 %v1227
        %v1266 = vpop.f32.mrf.mxu0
        %v1267 = vadd.f32 0.0, %v1266
        %v1268 = vpop.f32.mrf.mxu0
        %v1269 = vpop.f32.mrf.mxu0
        %v1270 = vpop.f32.mrf.mxu0
        %1271 = vdwg.mxu0
        %1272 = vrot.lane.b32.xlu0 %v770, 64
        %v1273 = vpop.permute.xlu0 %1272
        %v1275 = vsel %vm1080, %v1077, 0
        %v1278 = vsel %vm1084, %v1273, 0
        %1280 = vmatprep.subr.bf16.mxu0 0
        %1281 = vmatpush1.bf16.msra.mxu0 0
        %1282 = vmatprep.subr.bf16.mxu0 0
        %1283 = vmatpush1.bf16.msra.mxu0 0
        %1284 = vmatprep.subr.bf16.mxu0 0
        %1285 = vmatpush1.bf16.msra.mxu0 0
        %1286 = vmatprep.subr.bf16.mxu0 0
        %1287 = vmatpush1.bf16.msra.mxu0 0
        %1288 = vmatprep.subr.bf16.mxu0 0
        %1289 = vmatpush1.bf16.msra.mxu0 0
        %1290 = vmatprep.subr.bf16.mxu0 0
        %1291 = vmatpush1.bf16.msra.mxu0 0
        %1292 = vmatprep.subr.bf16.mxu0 0
        %1293 = vmatpush1.bf16.msra.mxu0 0
        %1294 = vmatprep.subr.bf16.mxu0 0
        %1295 = vmatpush1.bf16.msra.mxu0 %v1278
        %1296 = vmatprep.subr.bf16.mxu0 0
        %1297 = vmatpush2.bf16.msra.mxu0 0
        %1298 = vmatprep.subr.bf16.mxu0 0
        %1299 = vmatpush2.bf16.msra.mxu0 0
        %1300 = vmatprep.subr.bf16.mxu0 0
        %1301 = vmatpush2.bf16.msra.mxu0 0
        %1302 = vmatprep.subr.bf16.mxu0 0
        %1303 = vmatpush2.bf16.msra.mxu0 0
        %1304 = vmatprep.subr.bf16.mxu0 0
        %1305 = vmatpush2.bf16.msra.mxu0 0
        %1306 = vmatprep.subr.bf16.mxu0 0
        %1307 = vmatpush2.bf16.msra.mxu0 0
        %1308 = vmatprep.subr.bf16.mxu0 0
        %1309 = vmatpush2.bf16.msra.mxu0 0
        %1310 = vmatprep.subr.bf16.mxu0 0
        %1311 = vmatpush2.bf16.msra.mxu0 0
        %1312 = vmatprep.mubr.bf16.mxu0 0
        %1313 = vmatmul.mubr.bf16.gmra.mxu0 %v1275
        %v1314 = vpop.f32.mrf.mxu0
        %v1315 = vadd.f32 0.0, %v1314
        %v1316 = vpop.f32.mrf.mxu0
        %v1317 = vpop.f32.mrf.mxu0
        %v1318 = vpop.f32.mrf.mxu0
        %1319 = vdwg.mxu0
        %v1325 = vcombine.low %v1123, %v1171
        %v1326 = vcombine.low %v1219, %v1267
        %v1328 = vunpack.c.l.s4 1983009808
        %v1329 = vunpack.c.0.s8 %v1328
        %v1330 = vlaneseq
        %v1331 = vshrl.u32 %v1330, 7
        %v1332 = vsub.s32 %v1329, %v1331
        %v1333 = vrot.slane %v1325, %v1332
        %v1335 = vunpack.c.l.s4 1983009808
        %v1336 = vunpack.c.0.s8 %v1335
        %v1337 = vlaneseq
        %v1338 = vshrl.u32 %v1337, 7
        %v1339 = vsub.s32 %v1336, %v1338
        %v1340 = vrot.slane %v1326, %v1339
        %v1341 = vcombine.low %v1333, %v1340
        %v1343 = vunpack.c.l.s4 1983009808
        %v1344 = vunpack.c.0.s8 %v1343
        %v1345 = vlaneseq
        %v1346 = vshrl.u32 %v1345, 7
        %v1347 = vsub.s32 %v1344, %v1346
        %v1348 = vrot.slane %v1315, %v1347
        %v1351 = vpack.c.bf16 %v1348, %v1341
        %v1352 = vld [vmem:[%s621] sm:$0xf]
        %1353 = vrot.lane.b32.xlu0 %v766, 120
        %v1354 = vpop.permute.xlu0 %1353
        %1355 = vrot.lane.b32.xlu0 %v766, 88
        %v1356 = vpop.permute.xlu0 %1355
        %v1358 = vsel %vm774, %v1354, 0
        %v1361 = vsel %vm774, %v1356, 0
        %1363 = vmatprep.subr.bf16.mxu0 0
        %1364 = vmatpush1.bf16.xpose.msra.mxu0 0
        %1365 = vmatprep.subr.bf16.mxu0 0
        %1366 = vmatpush1.bf16.xpose.msra.mxu0 0
        %1367 = vmatprep.subr.bf16.mxu0 0
        %1368 = vmatpush1.bf16.xpose.msra.mxu0 0
        %1369 = vmatprep.subr.bf16.mxu0 0
        %1370 = vmatpush1.bf16.xpose.msra.mxu0 0
        %1371 = vmatprep.subr.bf16.mxu0 0
        %1372 = vmatpush1.bf16.xpose.msra.mxu0 0
        %1373 = vmatprep.subr.bf16.mxu0 0
        %1374 = vmatpush1.bf16.xpose.msra.mxu0 0
        %1375 = vmatprep.subr.bf16.mxu0 0
        %1376 = vmatpush1.bf16.xpose.msra.mxu0 0
        %1377 = vmatprep.subr.bf16.mxu0 0
        %1378 = vmatpush1.bf16.xpose.msra.mxu0 %v1361
        %1379 = vmatprep.subr.bf16.mxu0 0
        %1380 = vmatpush2.bf16.xpose.msra.mxu0 0
        %1381 = vmatprep.subr.bf16.mxu0 0
        %1382 = vmatpush2.bf16.xpose.msra.mxu0 0
        %1383 = vmatprep.subr.bf16.mxu0 0
        %1384 = vmatpush2.bf16.xpose.msra.mxu0 0
        %1385 = vmatprep.subr.bf16.mxu0 0
        %1386 = vmatpush2.bf16.xpose.msra.mxu0 0
        %1387 = vmatprep.subr.bf16.mxu0 0
        %1388 = vmatpush2.bf16.xpose.msra.mxu0 0
        %1389 = vmatprep.subr.bf16.mxu0 0
        %1390 = vmatpush2.bf16.xpose.msra.mxu0 0
        %1391 = vmatprep.subr.bf16.mxu0 0
        %1392 = vmatpush2.bf16.xpose.msra.mxu0 0
        %1393 = vmatprep.subr.bf16.mxu0 0
        %1394 = vmatpush2.bf16.xpose.msra.mxu0 0
        %1395 = vmatprep.mubr.bf16.mxu0 0
        %1396 = vmatmul.mubr.bf16.gmra.mxu0 %v1358
        %v1397 = vpop.f32.mrf.mxu0
        %v1398 = vadd.f32 0.0, %v1397
        %v1399 = vpop.f32.mrf.mxu0
        %v1400 = vpop.f32.mrf.mxu0
        %v1401 = vpop.f32.mrf.mxu0
        %1402 = vdwg.mxu0
        %1403 = vrot.lane.b32.xlu0 %v767, 120
        %v1404 = vpop.permute.xlu0 %1403
        %1405 = vrot.lane.b32.xlu0 %v767, 88
        %v1406 = vpop.permute.xlu0 %1405
        %v1408 = vsel %vm774, %v1404, 0
        %v1411 = vsel %vm774, %v1406, 0
        %1413 = vmatprep.subr.bf16.mxu0 0
        %1414 = vmatpush1.bf16.xpose.msra.mxu0 0
        %1415 = vmatprep.subr.bf16.mxu0 0
        %1416 = vmatpush1.bf16.xpose.msra.mxu0 0
        %1417 = vmatprep.subr.bf16.mxu0 0
        %1418 = vmatpush1.bf16.xpose.msra.mxu0 0
        %1419 = vmatprep.subr.bf16.mxu0 0
        %1420 = vmatpush1.bf16.xpose.msra.mxu0 0
        %1421 = vmatprep.subr.bf16.mxu0 0
        %1422 = vmatpush1.bf16.xpose.msra.mxu0 0
        %1423 = vmatprep.subr.bf16.mxu0 0
        %1424 = vmatpush1.bf16.xpose.msra.mxu0 0
        %1425 = vmatprep.subr.bf16.mxu0 0
        %1426 = vmatpush1.bf16.xpose.msra.mxu0 0
        %1427 = vmatprep.subr.bf16.mxu0 0
        %1428 = vmatpush1.bf16.xpose.msra.mxu0 %v1411
        %1429 = vmatprep.subr.bf16.mxu0 0
        %1430 = vmatpush2.bf16.xpose.msra.mxu0 0
        %1431 = vmatprep.subr.bf16.mxu0 0
        %1432 = vmatpush2.bf16.xpose.msra.mxu0 0
        %1433 = vmatprep.subr.bf16.mxu0 0
        %1434 = vmatpush2.bf16.xpose.msra.mxu0 0
        %1435 = vmatprep.subr.bf16.mxu0 0
        %1436 = vmatpush2.bf16.xpose.msra.mxu0 0
        %1437 = vmatprep.subr.bf16.mxu0 0
        %1438 = vmatpush2.bf16.xpose.msra.mxu0 0
        %1439 = vmatprep.subr.bf16.mxu0 0
        %1440 = vmatpush2.bf16.xpose.msra.mxu0 0
        %1441 = vmatprep.subr.bf16.mxu0 0
        %1442 = vmatpush2.bf16.xpose.msra.mxu0 0
        %1443 = vmatprep.subr.bf16.mxu0 0
        %1444 = vmatpush2.bf16.xpose.msra.mxu0 0
        %1445 = vmatprep.mubr.bf16.mxu0 0
        %1446 = vmatmul.mubr.bf16.gmra.mxu0 %v1408
        %v1447 = vpop.f32.mrf.mxu0
        %v1448 = vadd.f32 0.0, %v1447
        %v1449 = vpop.f32.mrf.mxu0
        %v1450 = vpop.f32.mrf.mxu0
        %v1451 = vpop.f32.mrf.mxu0
        %1452 = vdwg.mxu0
        %1453 = vrot.lane.b32.xlu0 %v768, 120
        %v1454 = vpop.permute.xlu0 %1453
        %1455 = vrot.lane.b32.xlu0 %v768, 88
        %v1456 = vpop.permute.xlu0 %1455
        %v1458 = vsel %vm774, %v1454, 0
        %v1461 = vsel %vm774, %v1456, 0
        %1463 = vmatprep.subr.bf16.mxu0 0
        %1464 = vmatpush1.bf16.xpose.msra.mxu0 0
        %1465 = vmatprep.subr.bf16.mxu0 0
        %1466 = vmatpush1.bf16.xpose.msra.mxu0 0
        %1467 = vmatprep.subr.bf16.mxu0 0
        %1468 = vmatpush1.bf16.xpose.msra.mxu0 0
        %1469 = vmatprep.subr.bf16.mxu0 0
        %1470 = vmatpush1.bf16.xpose.msra.mxu0 0
        %1471 = vmatprep.subr.bf16.mxu0 0
        %1472 = vmatpush1.bf16.xpose.msra.mxu0 0
        %1473 = vmatprep.subr.bf16.mxu0 0
        %1474 = vmatpush1.bf16.xpose.msra.mxu0 0
        %1475 = vmatprep.subr.bf16.mxu0 0
        %1476 = vmatpush1.bf16.xpose.msra.mxu0 0
        %1477 = vmatprep.subr.bf16.mxu0 0
        %1478 = vmatpush1.bf16.xpose.msra.mxu0 %v1461
        %1479 = vmatprep.subr.bf16.mxu0 0
        %1480 = vmatpush2.bf16.xpose.msra.mxu0 0
        %1481 = vmatprep.subr.bf16.mxu0 0
        %1482 = vmatpush2.bf16.xpose.msra.mxu0 0
        %1483 = vmatprep.subr.bf16.mxu0 0
        %1484 = vmatpush2.bf16.xpose.msra.mxu0 0
        %1485 = vmatprep.subr.bf16.mxu0 0
        %1486 = vmatpush2.bf16.xpose.msra.mxu0 0
        %1487 = vmatprep.subr.bf16.mxu0 0
        %1488 = vmatpush2.bf16.xpose.msra.mxu0 0
        %1489 = vmatprep.subr.bf16.mxu0 0
        %1490 = vmatpush2.bf16.xpose.msra.mxu0 0
        %1491 = vmatprep.subr.bf16.mxu0 0
        %1492 = vmatpush2.bf16.xpose.msra.mxu0 0
        %1493 = vmatprep.subr.bf16.mxu0 0
        %1494 = vmatpush2.bf16.xpose.msra.mxu0 0
        %1495 = vmatprep.mubr.bf16.mxu0 0
        %1496 = vmatmul.mubr.bf16.gmra.mxu0 %v1458
        %v1497 = vpop.f32.mrf.mxu0
        %v1498 = vadd.f32 0.0, %v1497
        %v1499 = vpop.f32.mrf.mxu0
        %v1500 = vpop.f32.mrf.mxu0
        %v1501 = vpop.f32.mrf.mxu0
        %1502 = vdwg.mxu0
        %1503 = vrot.lane.b32.xlu0 %v769, 120
        %v1504 = vpop.permute.xlu0 %1503
        %1505 = vrot.lane.b32.xlu0 %v769, 88
        %v1506 = vpop.permute.xlu0 %1505
        %v1508 = vsel %vm774, %v1504, 0
        %v1511 = vsel %vm774, %v1506, 0
        %1513 = vmatprep.subr.bf16.mxu0 0
        %1514 = vmatpush1.bf16.xpose.msra.mxu0 0
        %1515 = vmatprep.subr.bf16.mxu0 0
        %1516 = vmatpush1.bf16.xpose.msra.mxu0 0
        %1517 = vmatprep.subr.bf16.mxu0 0
        %1518 = vmatpush1.bf16.xpose.msra.mxu0 0
        %1519 = vmatprep.subr.bf16.mxu0 0
        %1520 = vmatpush1.bf16.xpose.msra.mxu0 0
        %1521 = vmatprep.subr.bf16.mxu0 0
        %1522 = vmatpush1.bf16.xpose.msra.mxu0 0
        %1523 = vmatprep.subr.bf16.mxu0 0
        %1524 = vmatpush1.bf16.xpose.msra.mxu0 0
        %1525 = vmatprep.subr.bf16.mxu0 0
        %1526 = vmatpush1.bf16.xpose.msra.mxu0 0
        %1527 = vmatprep.subr.bf16.mxu0 0
        %1528 = vmatpush1.bf16.xpose.msra.mxu0 %v1511
        %1529 = vmatprep.subr.bf16.mxu0 0
        %1530 = vmatpush2.bf16.xpose.msra.mxu0 0
        %1531 = vmatprep.subr.bf16.mxu0 0
        %1532 = vmatpush2.bf16.xpose.msra.mxu0 0
        %1533 = vmatprep.subr.bf16.mxu0 0
        %1534 = vmatpush2.bf16.xpose.msra.mxu0 0
        %1535 = vmatprep.subr.bf16.mxu0 0
        %1536 = vmatpush2.bf16.xpose.msra.mxu0 0
        %1537 = vmatprep.subr.bf16.mxu0 0
        %1538 = vmatpush2.bf16.xpose.msra.mxu0 0
        %1539 = vmatprep.subr.bf16.mxu0 0
        %1540 = vmatpush2.bf16.xpose.msra.mxu0 0
        %1541 = vmatprep.subr.bf16.mxu0 0
        %1542 = vmatpush2.bf16.xpose.msra.mxu0 0
        %1543 = vmatprep.subr.bf16.mxu0 0
        %1544 = vmatpush2.bf16.xpose.msra.mxu0 0
        %1545 = vmatprep.mubr.bf16.mxu0 0
        %1546 = vmatmul.mubr.bf16.gmra.mxu0 %v1508
        %v1547 = vpop.f32.mrf.mxu0
        %v1548 = vadd.f32 0.0, %v1547
        %v1549 = vpop.f32.mrf.mxu0
        %v1550 = vpop.f32.mrf.mxu0
        %v1551 = vpop.f32.mrf.mxu0
        %1552 = vdwg.mxu0
        %1553 = vrot.lane.b32.xlu0 %v770, 120
        %v1554 = vpop.permute.xlu0 %1553
        %1555 = vrot.lane.b32.xlu0 %v770, 88
        %v1556 = vpop.permute.xlu0 %1555
        %v1558 = vsel %vm774, %v1554, 0
        %v1561 = vsel %vm774, %v1556, 0
        %1563 = vmatprep.subr.bf16.mxu0 0
        %1564 = vmatpush1.bf16.xpose.msra.mxu0 0
        %1565 = vmatprep.subr.bf16.mxu0 0
        %1566 = vmatpush1.bf16.xpose.msra.mxu0 0
        %1567 = vmatprep.subr.bf16.mxu0 0
        %1568 = vmatpush1.bf16.xpose.msra.mxu0 0
        %1569 = vmatprep.subr.bf16.mxu0 0
        %1570 = vmatpush1.bf16.xpose.msra.mxu0 0
        %1571 = vmatprep.subr.bf16.mxu0 0
        %1572 = vmatpush1.bf16.xpose.msra.mxu0 0
        %1573 = vmatprep.subr.bf16.mxu0 0
        %1574 = vmatpush1.bf16.xpose.msra.mxu0 0
        %1575 = vmatprep.subr.bf16.mxu0 0
        %1576 = vmatpush1.bf16.xpose.msra.mxu0 0
        %1577 = vmatprep.subr.bf16.mxu0 0
        %1578 = vmatpush1.bf16.xpose.msra.mxu0 %v1561
        %1579 = vmatprep.subr.bf16.mxu0 0
        %1580 = vmatpush2.bf16.xpose.msra.mxu0 0
        %1581 = vmatprep.subr.bf16.mxu0 0
        %1582 = vmatpush2.bf16.xpose.msra.mxu0 0
        %1583 = vmatprep.subr.bf16.mxu0 0
        %1584 = vmatpush2.bf16.xpose.msra.mxu0 0
        %1585 = vmatprep.subr.bf16.mxu0 0
        %1586 = vmatpush2.bf16.xpose.msra.mxu0 0
        %1587 = vmatprep.subr.bf16.mxu0 0
        %1588 = vmatpush2.bf16.xpose.msra.mxu0 0
        %1589 = vmatprep.subr.bf16.mxu0 0
        %1590 = vmatpush2.bf16.xpose.msra.mxu0 0
        %1591 = vmatprep.subr.bf16.mxu0 0
        %1592 = vmatpush2.bf16.xpose.msra.mxu0 0
        %1593 = vmatprep.subr.bf16.mxu0 0
        %1594 = vmatpush2.bf16.xpose.msra.mxu0 0
        %1595 = vmatprep.mubr.bf16.mxu0 0
        %1596 = vmatmul.mubr.bf16.gmra.mxu0 %v1558
        %v1597 = vpop.f32.mrf.mxu0
        %v1598 = vadd.f32 0.0, %v1597
        %v1599 = vpop.f32.mrf.mxu0
        %v1600 = vpop.f32.mrf.mxu0
        %v1601 = vpop.f32.mrf.mxu0
        %1602 = vdwg.mxu0
        %v1603 = vsel %vm1017, %v1398, -inf
        %1604 = vmax.xlane.f32.xlu0 %v1603
        %v1605 = vpop.xlane.xlu0 %1604
        %v1606 = vsel %vm1017, %v1448, -inf
        %1607 = vmax.xlane.f32.xlu0 %v1606
        %v1608 = vpop.xlane.xlu0 %1607
        %v1609 = vsel %vm1017, %v1498, -inf
        %1610 = vmax.xlane.f32.xlu0 %v1609
        %v1611 = vpop.xlane.xlu0 %1610
        %v1612 = vsel %vm1017, %v1548, -inf
        %1613 = vmax.xlane.f32.xlu0 %v1612
        %v1614 = vpop.xlane.xlu0 %1613
        %v1615 = vsel %vm1017, %v1598, -inf
        %1616 = vmax.xlane.f32.xlu0 %v1615
        %v1617 = vpop.xlane.xlu0 %1616
        %v1618 = vsub.f32 %v1398, %v1605
        %v1619 = vsub.f32 %v1448, %v1608
        %v1620 = vsub.f32 %v1498, %v1611
        %v1621 = vsub.f32 %v1548, %v1614
        %v1622 = vsub.f32 %v1598, %v1617
        %v1623 = vmul.f32 %v1618, 1.442695
        %v1624 = vpow.pop %v1623
        %v1625 = vmul.f32 %v1619, 1.442695
        %v1626 = vpow.pop %v1625
        %v1627 = vmul.f32 %v1620, 1.442695
        %v1628 = vpow.pop %v1627
        %v1629 = vmul.f32 %v1621, 1.442695
        %v1630 = vpow.pop %v1629
        %v1631 = vmul.f32 %v1622, 1.442695
        %v1632 = vpow.pop %v1631
        %v1633 = vsel %vm1017, %v1624, 0.0
        %1634 = vadd.xlane.f32.xlu0 %v1633
        %v1635 = vpop.xlane.xlu0 %1634
        %v1636 = vsel %vm1017, %v1626, 0.0
        %1637 = vadd.xlane.f32.xlu0 %v1636
        %v1638 = vpop.xlane.xlu0 %1637
        %v1639 = vsel %vm1017, %v1628, 0.0
        %1640 = vadd.xlane.f32.xlu0 %v1639
        %v1641 = vpop.xlane.xlu0 %1640
        %v1642 = vsel %vm1017, %v1630, 0.0
        %1643 = vadd.xlane.f32.xlu0 %v1642
        %v1644 = vpop.xlane.xlu0 %1643
        %v1645 = vsel %vm1017, %v1632, 0.0
        %1646 = vadd.xlane.f32.xlu0 %v1645
        %v1647 = vpop.xlane.xlu0 %1646
        %v1648 = vrcp.pop %v1635
        %v1649 = vrcp.pop %v1638
        %v1650 = vrcp.pop %v1641
        %v1651 = vrcp.pop %v1644
        %v1652 = vrcp.pop %v1647
        %v1653 = vmul.f32 %v1624, %v1648
        %v1654 = vmul.f32 %v1626, %v1649
        %v1655 = vmul.f32 %v1628, %v1650
        %v1656 = vmul.f32 %v1630, %v1651
        %v1657 = vmul.f32 %v1632, %v1652
        %v1658 = vpack.c.bf16 %v1653, %v1653
        %v1659 = vpack.c.bf16 %v1654, %v1654
        %v1660 = vpack.c.bf16 %v1655, %v1655
        %v1661 = vpack.c.bf16 %v1656, %v1656
        %v1662 = vpack.c.bf16 %v1657, %v1657
        %1663 = vrot.lane.b32.xlu0 %v766, 56
        %v1664 = vpop.permute.xlu0 %1663
        %v1666 = vsel %vm1080, %v1658, 0
        %v1669 = vsel %vm1084, %v1664, 0
        %1671 = vmatprep.subr.bf16.mxu0 0
        %1672 = vmatpush1.bf16.msra.mxu0 0
        %1673 = vmatprep.subr.bf16.mxu0 0
        %1674 = vmatpush1.bf16.msra.mxu0 0
        %1675 = vmatprep.subr.bf16.mxu0 0
        %1676 = vmatpush1.bf16.msra.mxu0 0
        %1677 = vmatprep.subr.bf16.mxu0 0
        %1678 = vmatpush1.bf16.msra.mxu0 0
        %1679 = vmatprep.subr.bf16.mxu0 0
        %1680 = vmatpush1.bf16.msra.mxu0 0
        %1681 = vmatprep.subr.bf16.mxu0 0
        %1682 = vmatpush1.bf16.msra.mxu0 0
        %1683 = vmatprep.subr.bf16.mxu0 0
        %1684 = vmatpush1.bf16.msra.mxu0 0
        %1685 = vmatprep.subr.bf16.mxu0 0
        %1686 = vmatpush1.bf16.msra.mxu0 %v1669
        %1687 = vmatprep.subr.bf16.mxu0 0
        %1688 = vmatpush2.bf16.msra.mxu0 0
        %1689 = vmatprep.subr.bf16.mxu0 0
        %1690 = vmatpush2.bf16.msra.mxu0 0
        %1691 = vmatprep.subr.bf16.mxu0 0
        %1692 = vmatpush2.bf16.msra.mxu0 0
        %1693 = vmatprep.subr.bf16.mxu0 0
        %1694 = vmatpush2.bf16.msra.mxu0 0
        %1695 = vmatprep.subr.bf16.mxu0 0
        %1696 = vmatpush2.bf16.msra.mxu0 0
        %1697 = vmatprep.subr.bf16.mxu0 0
        %1698 = vmatpush2.bf16.msra.mxu0 0
        %1699 = vmatprep.subr.bf16.mxu0 0
        %1700 = vmatpush2.bf16.msra.mxu0 0
        %1701 = vmatprep.subr.bf16.mxu0 0
        %1702 = vmatpush2.bf16.msra.mxu0 0
        %1703 = vmatprep.mubr.bf16.mxu0 0
        %1704 = vmatmul.mubr.bf16.gmra.mxu0 %v1666
        %v1705 = vpop.f32.mrf.mxu0
        %v1706 = vadd.f32 0.0, %v1705
        %v1707 = vpop.f32.mrf.mxu0
        %v1708 = vpop.f32.mrf.mxu0
        %v1709 = vpop.f32.mrf.mxu0
        %1710 = vdwg.mxu0
        %1711 = vrot.lane.b32.xlu0 %v767, 56
        %v1712 = vpop.permute.xlu0 %1711
        %v1714 = vsel %vm1080, %v1659, 0
        %v1717 = vsel %vm1084, %v1712, 0
        %1719 = vmatprep.subr.bf16.mxu0 0
        %1720 = vmatpush1.bf16.msra.mxu0 0
        %1721 = vmatprep.subr.bf16.mxu0 0
        %1722 = vmatpush1.bf16.msra.mxu0 0
        %1723 = vmatprep.subr.bf16.mxu0 0
        %1724 = vmatpush1.bf16.msra.mxu0 0
        %1725 = vmatprep.subr.bf16.mxu0 0
        %1726 = vmatpush1.bf16.msra.mxu0 0
        %1727 = vmatprep.subr.bf16.mxu0 0
        %1728 = vmatpush1.bf16.msra.mxu0 0
        %1729 = vmatprep.subr.bf16.mxu0 0
        %1730 = vmatpush1.bf16.msra.mxu0 0
        %1731 = vmatprep.subr.bf16.mxu0 0
        %1732 = vmatpush1.bf16.msra.mxu0 0
        %1733 = vmatprep.subr.bf16.mxu0 0
        %1734 = vmatpush1.bf16.msra.mxu0 %v1717
        %1735 = vmatprep.subr.bf16.mxu0 0
        %1736 = vmatpush2.bf16.msra.mxu0 0
        %1737 = vmatprep.subr.bf16.mxu0 0
        %1738 = vmatpush2.bf16.msra.mxu0 0
        %1739 = vmatprep.subr.bf16.mxu0 0
        %1740 = vmatpush2.bf16.msra.mxu0 0
        %1741 = vmatprep.subr.bf16.mxu0 0
        %1742 = vmatpush2.bf16.msra.mxu0 0
        %1743 = vmatprep.subr.bf16.mxu0 0
        %1744 = vmatpush2.bf16.msra.mxu0 0
        %1745 = vmatprep.subr.bf16.mxu0 0
        %1746 = vmatpush2.bf16.msra.mxu0 0
        %1747 = vmatprep.subr.bf16.mxu0 0
        %1748 = vmatpush2.bf16.msra.mxu0 0
        %1749 = vmatprep.subr.bf16.mxu0 0
        %1750 = vmatpush2.bf16.msra.mxu0 0
        %1751 = vmatprep.mubr.bf16.mxu0 0
        %1752 = vmatmul.mubr.bf16.gmra.mxu0 %v1714
        %v1753 = vpop.f32.mrf.mxu0
        %v1754 = vadd.f32 0.0, %v1753
        %v1755 = vpop.f32.mrf.mxu0
        %v1756 = vpop.f32.mrf.mxu0
        %v1757 = vpop.f32.mrf.mxu0
        %1758 = vdwg.mxu0
        %1759 = vrot.lane.b32.xlu0 %v768, 56
        %v1760 = vpop.permute.xlu0 %1759
        %v1762 = vsel %vm1080, %v1660, 0
        %v1765 = vsel %vm1084, %v1760, 0
        %1767 = vmatprep.subr.bf16.mxu0 0
        %1768 = vmatpush1.bf16.msra.mxu0 0
        %1769 = vmatprep.subr.bf16.mxu0 0
        %1770 = vmatpush1.bf16.msra.mxu0 0
        %1771 = vmatprep.subr.bf16.mxu0 0
        %1772 = vmatpush1.bf16.msra.mxu0 0
        %1773 = vmatprep.subr.bf16.mxu0 0
        %1774 = vmatpush1.bf16.msra.mxu0 0
        %1775 = vmatprep.subr.bf16.mxu0 0
        %1776 = vmatpush1.bf16.msra.mxu0 0
        %1777 = vmatprep.subr.bf16.mxu0 0
        %1778 = vmatpush1.bf16.msra.mxu0 0
        %1779 = vmatprep.subr.bf16.mxu0 0
        %1780 = vmatpush1.bf16.msra.mxu0 0
        %1781 = vmatprep.subr.bf16.mxu0 0
        %1782 = vmatpush1.bf16.msra.mxu0 %v1765
        %1783 = vmatprep.subr.bf16.mxu0 0
        %1784 = vmatpush2.bf16.msra.mxu0 0
        %1785 = vmatprep.subr.bf16.mxu0 0
        %1786 = vmatpush2.bf16.msra.mxu0 0
        %1787 = vmatprep.subr.bf16.mxu0 0
        %1788 = vmatpush2.bf16.msra.mxu0 0
        %1789 = vmatprep.subr.bf16.mxu0 0
        %1790 = vmatpush2.bf16.msra.mxu0 0
        %1791 = vmatprep.subr.bf16.mxu0 0
        %1792 = vmatpush2.bf16.msra.mxu0 0
        %1793 = vmatprep.subr.bf16.mxu0 0
        %1794 = vmatpush2.bf16.msra.mxu0 0
        %1795 = vmatprep.subr.bf16.mxu0 0
        %1796 = vmatpush2.bf16.msra.mxu0 0
        %1797 = vmatprep.subr.bf16.mxu0 0
        %1798 = vmatpush2.bf16.msra.mxu0 0
        %1799 = vmatprep.mubr.bf16.mxu0 0
        %1800 = vmatmul.mubr.bf16.gmra.mxu0 %v1762
        %v1801 = vpop.f32.mrf.mxu0
        %v1802 = vadd.f32 0.0, %v1801
        %v1803 = vpop.f32.mrf.mxu0
        %v1804 = vpop.f32.mrf.mxu0
        %v1805 = vpop.f32.mrf.mxu0
        %1806 = vdwg.mxu0
        %1807 = vrot.lane.b32.xlu0 %v769, 56
        %v1808 = vpop.permute.xlu0 %1807
        %v1810 = vsel %vm1080, %v1661, 0
        %v1813 = vsel %vm1084, %v1808, 0
        %1815 = vmatprep.subr.bf16.mxu0 0
        %1816 = vmatpush1.bf16.msra.mxu0 0
        %1817 = vmatprep.subr.bf16.mxu0 0
        %1818 = vmatpush1.bf16.msra.mxu0 0
        %1819 = vmatprep.subr.bf16.mxu0 0
        %1820 = vmatpush1.bf16.msra.mxu0 0
        %1821 = vmatprep.subr.bf16.mxu0 0
        %1822 = vmatpush1.bf16.msra.mxu0 0
        %1823 = vmatprep.subr.bf16.mxu0 0
        %1824 = vmatpush1.bf16.msra.mxu0 0
        %1825 = vmatprep.subr.bf16.mxu0 0
        %1826 = vmatpush1.bf16.msra.mxu0 0
        %1827 = vmatprep.subr.bf16.mxu0 0
        %1828 = vmatpush1.bf16.msra.mxu0 0
        %1829 = vmatprep.subr.bf16.mxu0 0
        %1830 = vmatpush1.bf16.msra.mxu0 %v1813
        %1831 = vmatprep.subr.bf16.mxu0 0
        %1832 = vmatpush2.bf16.msra.mxu0 0
        %1833 = vmatprep.subr.bf16.mxu0 0
        %1834 = vmatpush2.bf16.msra.mxu0 0
        %1835 = vmatprep.subr.bf16.mxu0 0
        %1836 = vmatpush2.bf16.msra.mxu0 0
        %1837 = vmatprep.subr.bf16.mxu0 0
        %1838 = vmatpush2.bf16.msra.mxu0 0
        %1839 = vmatprep.subr.bf16.mxu0 0
        %1840 = vmatpush2.bf16.msra.mxu0 0
        %1841 = vmatprep.subr.bf16.mxu0 0
        %1842 = vmatpush2.bf16.msra.mxu0 0
        %1843 = vmatprep.subr.bf16.mxu0 0
        %1844 = vmatpush2.bf16.msra.mxu0 0
        %1845 = vmatprep.subr.bf16.mxu0 0
        %1846 = vmatpush2.bf16.msra.mxu0 0
        %1847 = vmatprep.mubr.bf16.mxu0 0
        %1848 = vmatmul.mubr.bf16.gmra.mxu0 %v1810
        %v1849 = vpop.f32.mrf.mxu0
        %v1850 = vadd.f32 0.0, %v1849
        %v1851 = vpop.f32.mrf.mxu0
        %v1852 = vpop.f32.mrf.mxu0
        %v1853 = vpop.f32.mrf.mxu0
        %1854 = vdwg.mxu0
        %1855 = vrot.lane.b32.xlu0 %v770, 56
        %v1856 = vpop.permute.xlu0 %1855
        %v1858 = vsel %vm1080, %v1662, 0
        %v1861 = vsel %vm1084, %v1856, 0
        %1863 = vmatprep.subr.bf16.mxu0 0
        %1864 = vmatpush1.bf16.msra.mxu0 0
        %1865 = vmatprep.subr.bf16.mxu0 0
        %1866 = vmatpush1.bf16.msra.mxu0 0
        %1867 = vmatprep.subr.bf16.mxu0 0
        %1868 = vmatpush1.bf16.msra.mxu0 0
        %1869 = vmatprep.subr.bf16.mxu0 0
        %1870 = vmatpush1.bf16.msra.mxu0 0
        %1871 = vmatprep.subr.bf16.mxu0 0
        %1872 = vmatpush1.bf16.msra.mxu0 0
        %1873 = vmatprep.subr.bf16.mxu0 0
        %1874 = vmatpush1.bf16.msra.mxu0 0
        %1875 = vmatprep.subr.bf16.mxu0 0
        %1876 = vmatpush1.bf16.msra.mxu0 0
        %1877 = vmatprep.subr.bf16.mxu0 0
        %1878 = vmatpush1.bf16.msra.mxu0 %v1861
        %1879 = vmatprep.subr.bf16.mxu0 0
        %1880 = vmatpush2.bf16.msra.mxu0 0
        %1881 = vmatprep.subr.bf16.mxu0 0
        %1882 = vmatpush2.bf16.msra.mxu0 0
        %1883 = vmatprep.subr.bf16.mxu0 0
        %1884 = vmatpush2.bf16.msra.mxu0 0
        %1885 = vmatprep.subr.bf16.mxu0 0
        %1886 = vmatpush2.bf16.msra.mxu0 0
        %1887 = vmatprep.subr.bf16.mxu0 0
        %1888 = vmatpush2.bf16.msra.mxu0 0
        %1889 = vmatprep.subr.bf16.mxu0 0
        %1890 = vmatpush2.bf16.msra.mxu0 0
        %1891 = vmatprep.subr.bf16.mxu0 0
        %1892 = vmatpush2.bf16.msra.mxu0 0
        %1893 = vmatprep.subr.bf16.mxu0 0
        %1894 = vmatpush2.bf16.msra.mxu0 0
        %1895 = vmatprep.mubr.bf16.mxu0 0
        %1896 = vmatmul.mubr.bf16.gmra.mxu0 %v1858
        %v1897 = vpop.f32.mrf.mxu0
        %v1898 = vadd.f32 0.0, %v1897
        %v1899 = vpop.f32.mrf.mxu0
        %v1900 = vpop.f32.mrf.mxu0
        %v1901 = vpop.f32.mrf.mxu0
        %1902 = vdwg.mxu0
        %v1908 = vcombine.low %v1706, %v1754
        %v1909 = vcombine.low %v1802, %v1850
        %v1911 = vunpack.c.l.s4 1983009808
        %v1912 = vunpack.c.0.s8 %v1911
        %v1913 = vlaneseq
        %v1914 = vshrl.u32 %v1913, 7
        %v1915 = vsub.s32 %v1912, %v1914
        %v1916 = vrot.slane %v1908, %v1915
        %v1918 = vunpack.c.l.s4 1983009808
        %v1919 = vunpack.c.0.s8 %v1918
        %v1920 = vlaneseq
        %v1921 = vshrl.u32 %v1920, 7
        %v1922 = vsub.s32 %v1919, %v1921
        %v1923 = vrot.slane %v1909, %v1922
        %v1924 = vcombine.low %v1916, %v1923
        %v1926 = vunpack.c.l.s4 1983009808
        %v1927 = vunpack.c.0.s8 %v1926
        %v1928 = vlaneseq
        %v1929 = vshrl.u32 %v1928, 7
        %v1930 = vsub.s32 %v1927, %v1929
        %v1931 = vrot.slane %v1898, %v1930
        %v1934 = vpack.c.bf16 %v1931, %v1924
        %v1935 = vld [vmem:[%s621 + $0x4] sm:$0xf]
        %v1937 = vsel %vm774, %v1934, 0
        %vm1939 = vcmask 1043456
        %v1941 = vsel %vm1939, %v1935, 0
        %1943 = vmatprep.subr.bf16.mxu0 0
        %1944 = vmatpush1.bf16.msra.mxu0 0
        %1945 = vmatprep.subr.bf16.mxu0 0
        %1946 = vmatpush1.bf16.msra.mxu0 0
        %1947 = vmatprep.subr.bf16.mxu0 0
        %1948 = vmatpush1.bf16.msra.mxu0 0
        %1949 = vmatprep.subr.bf16.mxu0 0
        %1950 = vmatpush1.bf16.msra.mxu0 0
        %1951 = vmatprep.subr.bf16.mxu0 0
        %1952 = vmatpush1.bf16.msra.mxu0 0
        %1953 = vmatprep.subr.bf16.mxu0 0
        %1954 = vmatpush1.bf16.msra.mxu0 0
        %1955 = vmatprep.subr.bf16.mxu0 0
        %1956 = vmatpush1.bf16.msra.mxu0 0
        %1957 = vmatprep.subr.bf16.mxu0 0
        %1958 = vmatpush1.bf16.msra.mxu0 %v1941
        %1959 = vmatprep.subr.bf16.mxu0 0
        %1960 = vmatpush2.bf16.msra.mxu0 0
        %1961 = vmatprep.subr.bf16.mxu0 0
        %1962 = vmatpush2.bf16.msra.mxu0 0
        %1963 = vmatprep.subr.bf16.mxu0 0
        %1964 = vmatpush2.bf16.msra.mxu0 0
        %1965 = vmatprep.subr.bf16.mxu0 0
        %1966 = vmatpush2.bf16.msra.mxu0 0
        %1967 = vmatprep.subr.bf16.mxu0 0
        %1968 = vmatpush2.bf16.msra.mxu0 0
        %1969 = vmatprep.subr.bf16.mxu0 0
        %1970 = vmatpush2.bf16.msra.mxu0 0
        %1971 = vmatprep.subr.bf16.mxu0 0
        %1972 = vmatpush2.bf16.msra.mxu0 0
        %1973 = vmatprep.subr.bf16.mxu0 0
        %1974 = vmatpush2.bf16.msra.mxu0 0
        %1975 = vmatprep.mubr.bf16.mxu0 0
        %1976 = vmatmul.mubr.bf16.gmra.mxu0 %v1937
        %v1977 = vpop.f32.mrf.mxu0
        %v1978 = vadd.f32 0.0, %v1977
        %v1979 = vpop.f32.mrf.mxu0
        %v1980 = vpop.f32.mrf.mxu0
        %v1981 = vadd.f32 0.0, %v1980
        %v1982 = vpop.f32.mrf.mxu0
        %1983 = vdwg.mxu0
        %v1985 = vsel %vm774, %v1351, 0
        %v1988 = vsel %vm1939, %v1352, 0
        %1990 = vmatprep.subr.bf16.mxu0 0
        %1991 = vmatpush1.bf16.msra.mxu0 0
        %1992 = vmatprep.subr.bf16.mxu0 0
        %1993 = vmatpush1.bf16.msra.mxu0 0
        %1994 = vmatprep.subr.bf16.mxu0 0
        %1995 = vmatpush1.bf16.msra.mxu0 0
        %1996 = vmatprep.subr.bf16.mxu0 0
        %1997 = vmatpush1.bf16.msra.mxu0 0
        %1998 = vmatprep.subr.bf16.mxu0 0
        %1999 = vmatpush1.bf16.msra.mxu0 0
        %2000 = vmatprep.subr.bf16.mxu0 0
        %2001 = vmatpush1.bf16.msra.mxu0 0
        %2002 = vmatprep.subr.bf16.mxu0 0
        %2003 = vmatpush1.bf16.msra.mxu0 0
        %2004 = vmatprep.subr.bf16.mxu0 0
        %2005 = vmatpush1.bf16.msra.mxu0 %v1988
        %2006 = vmatprep.subr.bf16.mxu0 0
        %2007 = vmatpush2.bf16.msra.mxu0 0
        %2008 = vmatprep.subr.bf16.mxu0 0
        %2009 = vmatpush2.bf16.msra.mxu0 0
        %2010 = vmatprep.subr.bf16.mxu0 0
        %2011 = vmatpush2.bf16.msra.mxu0 0
        %2012 = vmatprep.subr.bf16.mxu0 0
        %2013 = vmatpush2.bf16.msra.mxu0 0
        %2014 = vmatprep.subr.bf16.mxu0 0
        %2015 = vmatpush2.bf16.msra.mxu0 0
        %2016 = vmatprep.subr.bf16.mxu0 0
        %2017 = vmatpush2.bf16.msra.mxu0 0
        %2018 = vmatprep.subr.bf16.mxu0 0
        %2019 = vmatpush2.bf16.msra.mxu0 0
        %2020 = vmatprep.subr.bf16.mxu0 0
        %2021 = vmatpush2.bf16.msra.mxu0 0
        %2022 = vmatprep.mubr.bf16.mxu0 0
        %2023 = vmatmul.mubr.bf16.gmra.mxu0 %v1985
        %v2024 = vpop.f32.mrf.mxu0
        %v2025 = vadd.f32 %v1978, %v2024
        %v2026 = vpop.f32.mrf.mxu0
        %v2027 = vpop.f32.mrf.mxu0
        %v2028 = vadd.f32 %v1981, %v2027
        %v2029 = vpop.f32.mrf.mxu0
        %2030 = vdwg.mxu0
        %2031 = vrot.lane.b32.xlu0 %v766, 112
        %v2032 = vpop.permute.xlu0 %2031
        %2033 = vrot.lane.b32.xlu0 %v766, 80
        %v2034 = vpop.permute.xlu0 %2033
        %v2036 = vsel %vm774, %v2032, 0
        %v2039 = vsel %vm774, %v2034, 0
        %2041 = vmatprep.subr.bf16.mxu0 0
        %2042 = vmatpush1.bf16.xpose.msra.mxu0 0
        %2043 = vmatprep.subr.bf16.mxu0 0
        %2044 = vmatpush1.bf16.xpose.msra.mxu0 0
        %2045 = vmatprep.subr.bf16.mxu0 0
        %2046 = vmatpush1.bf16.xpose.msra.mxu0 0
        %2047 = vmatprep.subr.bf16.mxu0 0
        %2048 = vmatpush1.bf16.xpose.msra.mxu0 0
        %2049 = vmatprep.subr.bf16.mxu0 0
        %2050 = vmatpush1.bf16.xpose.msra.mxu0 0
        %2051 = vmatprep.subr.bf16.mxu0 0
        %2052 = vmatpush1.bf16.xpose.msra.mxu0 0
        %2053 = vmatprep.subr.bf16.mxu0 0
        %2054 = vmatpush1.bf16.xpose.msra.mxu0 0
        %2055 = vmatprep.subr.bf16.mxu0 0
        %2056 = vmatpush1.bf16.xpose.msra.mxu0 %v2039
        %2057 = vmatprep.subr.bf16.mxu0 0
        %2058 = vmatpush2.bf16.xpose.msra.mxu0 0
        %2059 = vmatprep.subr.bf16.mxu0 0
        %2060 = vmatpush2.bf16.xpose.msra.mxu0 0
        %2061 = vmatprep.subr.bf16.mxu0 0
        %2062 = vmatpush2.bf16.xpose.msra.mxu0 0
        %2063 = vmatprep.subr.bf16.mxu0 0
        %2064 = vmatpush2.bf16.xpose.msra.mxu0 0
        %2065 = vmatprep.subr.bf16.mxu0 0
        %2066 = vmatpush2.bf16.xpose.msra.mxu0 0
        %2067 = vmatprep.subr.bf16.mxu0 0
        %2068 = vmatpush2.bf16.xpose.msra.mxu0 0
        %2069 = vmatprep.subr.bf16.mxu0 0
        %2070 = vmatpush2.bf16.xpose.msra.mxu0 0
        %2071 = vmatprep.subr.bf16.mxu0 0
        %2072 = vmatpush2.bf16.xpose.msra.mxu0 0
        %2073 = vmatprep.mubr.bf16.mxu0 0
        %2074 = vmatmul.mubr.bf16.gmra.mxu0 %v2036
        %v2075 = vpop.f32.mrf.mxu0
        %v2076 = vadd.f32 0.0, %v2075
        %v2077 = vpop.f32.mrf.mxu0
        %v2078 = vpop.f32.mrf.mxu0
        %v2079 = vpop.f32.mrf.mxu0
        %2080 = vdwg.mxu0
        %2081 = vrot.lane.b32.xlu0 %v767, 112
        %v2082 = vpop.permute.xlu0 %2081
        %2083 = vrot.lane.b32.xlu0 %v767, 80
        %v2084 = vpop.permute.xlu0 %2083
        %v2086 = vsel %vm774, %v2082, 0
        %v2089 = vsel %vm774, %v2084, 0
        %2091 = vmatprep.subr.bf16.mxu0 0
        %2092 = vmatpush1.bf16.xpose.msra.mxu0 0
        %2093 = vmatprep.subr.bf16.mxu0 0
        %2094 = vmatpush1.bf16.xpose.msra.mxu0 0
        %2095 = vmatprep.subr.bf16.mxu0 0
        %2096 = vmatpush1.bf16.xpose.msra.mxu0 0
        %2097 = vmatprep.subr.bf16.mxu0 0
        %2098 = vmatpush1.bf16.xpose.msra.mxu0 0
        %2099 = vmatprep.subr.bf16.mxu0 0
        %2100 = vmatpush1.bf16.xpose.msra.mxu0 0
        %2101 = vmatprep.subr.bf16.mxu0 0
        %2102 = vmatpush1.bf16.xpose.msra.mxu0 0
        %2103 = vmatprep.subr.bf16.mxu0 0
        %2104 = vmatpush1.bf16.xpose.msra.mxu0 0
        %2105 = vmatprep.subr.bf16.mxu0 0
        %2106 = vmatpush1.bf16.xpose.msra.mxu0 %v2089
        %2107 = vmatprep.subr.bf16.mxu0 0
        %2108 = vmatpush2.bf16.xpose.msra.mxu0 0
        %2109 = vmatprep.subr.bf16.mxu0 0
        %2110 = vmatpush2.bf16.xpose.msra.mxu0 0
        %2111 = vmatprep.subr.bf16.mxu0 0
        %2112 = vmatpush2.bf16.xpose.msra.mxu0 0
        %2113 = vmatprep.subr.bf16.mxu0 0
        %2114 = vmatpush2.bf16.xpose.msra.mxu0 0
        %2115 = vmatprep.subr.bf16.mxu0 0
        %2116 = vmatpush2.bf16.xpose.msra.mxu0 0
        %2117 = vmatprep.subr.bf16.mxu0 0
        %2118 = vmatpush2.bf16.xpose.msra.mxu0 0
        %2119 = vmatprep.subr.bf16.mxu0 0
        %2120 = vmatpush2.bf16.xpose.msra.mxu0 0
        %2121 = vmatprep.subr.bf16.mxu0 0
        %2122 = vmatpush2.bf16.xpose.msra.mxu0 0
        %2123 = vmatprep.mubr.bf16.mxu0 0
        %2124 = vmatmul.mubr.bf16.gmra.mxu0 %v2086
        %v2125 = vpop.f32.mrf.mxu0
        %v2126 = vadd.f32 0.0, %v2125
        %v2127 = vpop.f32.mrf.mxu0
        %v2128 = vpop.f32.mrf.mxu0
        %v2129 = vpop.f32.mrf.mxu0
        %2130 = vdwg.mxu0
        %2131 = vrot.lane.b32.xlu0 %v768, 112
        %v2132 = vpop.permute.xlu0 %2131
        %2133 = vrot.lane.b32.xlu0 %v768, 80
        %v2134 = vpop.permute.xlu0 %2133
        %v2136 = vsel %vm774, %v2132, 0
        %v2139 = vsel %vm774, %v2134, 0
        %2141 = vmatprep.subr.bf16.mxu0 0
        %2142 = vmatpush1.bf16.xpose.msra.mxu0 0
        %2143 = vmatprep.subr.bf16.mxu0 0
        %2144 = vmatpush1.bf16.xpose.msra.mxu0 0
        %2145 = vmatprep.subr.bf16.mxu0 0
        %2146 = vmatpush1.bf16.xpose.msra.mxu0 0
        %2147 = vmatprep.subr.bf16.mxu0 0
        %2148 = vmatpush1.bf16.xpose.msra.mxu0 0
        %2149 = vmatprep.subr.bf16.mxu0 0
        %2150 = vmatpush1.bf16.xpose.msra.mxu0 0
        %2151 = vmatprep.subr.bf16.mxu0 0
        %2152 = vmatpush1.bf16.xpose.msra.mxu0 0
        %2153 = vmatprep.subr.bf16.mxu0 0
        %2154 = vmatpush1.bf16.xpose.msra.mxu0 0
        %2155 = vmatprep.subr.bf16.mxu0 0
        %2156 = vmatpush1.bf16.xpose.msra.mxu0 %v2139
        %2157 = vmatprep.subr.bf16.mxu0 0
        %2158 = vmatpush2.bf16.xpose.msra.mxu0 0
        %2159 = vmatprep.subr.bf16.mxu0 0
        %2160 = vmatpush2.bf16.xpose.msra.mxu0 0
        %2161 = vmatprep.subr.bf16.mxu0 0
        %2162 = vmatpush2.bf16.xpose.msra.mxu0 0
        %2163 = vmatprep.subr.bf16.mxu0 0
        %2164 = vmatpush2.bf16.xpose.msra.mxu0 0
        %2165 = vmatprep.subr.bf16.mxu0 0
        %2166 = vmatpush2.bf16.xpose.msra.mxu0 0
        %2167 = vmatprep.subr.bf16.mxu0 0
        %2168 = vmatpush2.bf16.xpose.msra.mxu0 0
        %2169 = vmatprep.subr.bf16.mxu0 0
        %2170 = vmatpush2.bf16.xpose.msra.mxu0 0
        %2171 = vmatprep.subr.bf16.mxu0 0
        %2172 = vmatpush2.bf16.xpose.msra.mxu0 0
        %2173 = vmatprep.mubr.bf16.mxu0 0
        %2174 = vmatmul.mubr.bf16.gmra.mxu0 %v2136
        %v2175 = vpop.f32.mrf.mxu0
        %v2176 = vadd.f32 0.0, %v2175
        %v2177 = vpop.f32.mrf.mxu0
        %v2178 = vpop.f32.mrf.mxu0
        %v2179 = vpop.f32.mrf.mxu0
        %2180 = vdwg.mxu0
        %2181 = vrot.lane.b32.xlu0 %v769, 112
        %v2182 = vpop.permute.xlu0 %2181
        %2183 = vrot.lane.b32.xlu0 %v769, 80
        %v2184 = vpop.permute.xlu0 %2183
        %v2186 = vsel %vm774, %v2182, 0
        %v2189 = vsel %vm774, %v2184, 0
        %2191 = vmatprep.subr.bf16.mxu0 0
        %2192 = vmatpush1.bf16.xpose.msra.mxu0 0
        %2193 = vmatprep.subr.bf16.mxu0 0
        %2194 = vmatpush1.bf16.xpose.msra.mxu0 0
        %2195 = vmatprep.subr.bf16.mxu0 0
        %2196 = vmatpush1.bf16.xpose.msra.mxu0 0
        %2197 = vmatprep.subr.bf16.mxu0 0
        %2198 = vmatpush1.bf16.xpose.msra.mxu0 0
        %2199 = vmatprep.subr.bf16.mxu0 0
        %2200 = vmatpush1.bf16.xpose.msra.mxu0 0
        %2201 = vmatprep.subr.bf16.mxu0 0
        %2202 = vmatpush1.bf16.xpose.msra.mxu0 0
        %2203 = vmatprep.subr.bf16.mxu0 0
        %2204 = vmatpush1.bf16.xpose.msra.mxu0 0
        %2205 = vmatprep.subr.bf16.mxu0 0
        %2206 = vmatpush1.bf16.xpose.msra.mxu0 %v2189
        %2207 = vmatprep.subr.bf16.mxu0 0
        %2208 = vmatpush2.bf16.xpose.msra.mxu0 0
        %2209 = vmatprep.subr.bf16.mxu0 0
        %2210 = vmatpush2.bf16.xpose.msra.mxu0 0
        %2211 = vmatprep.subr.bf16.mxu0 0
        %2212 = vmatpush2.bf16.xpose.msra.mxu0 0
        %2213 = vmatprep.subr.bf16.mxu0 0
        %2214 = vmatpush2.bf16.xpose.msra.mxu0 0
        %2215 = vmatprep.subr.bf16.mxu0 0
        %2216 = vmatpush2.bf16.xpose.msra.mxu0 0
        %2217 = vmatprep.subr.bf16.mxu0 0
        %2218 = vmatpush2.bf16.xpose.msra.mxu0 0
        %2219 = vmatprep.subr.bf16.mxu0 0
        %2220 = vmatpush2.bf16.xpose.msra.mxu0 0
        %2221 = vmatprep.subr.bf16.mxu0 0
        %2222 = vmatpush2.bf16.xpose.msra.mxu0 0
        %2223 = vmatprep.mubr.bf16.mxu0 0
        %2224 = vmatmul.mubr.bf16.gmra.mxu0 %v2186
        %v2225 = vpop.f32.mrf.mxu0
        %v2226 = vadd.f32 0.0, %v2225
        %v2227 = vpop.f32.mrf.mxu0
        %v2228 = vpop.f32.mrf.mxu0
        %v2229 = vpop.f32.mrf.mxu0
        %2230 = vdwg.mxu0
        %2231 = vrot.lane.b32.xlu0 %v770, 112
        %v2232 = vpop.permute.xlu0 %2231
        %2233 = vrot.lane.b32.xlu0 %v770, 80
        %v2234 = vpop.permute.xlu0 %2233
        %v2236 = vsel %vm774, %v2232, 0
        %v2239 = vsel %vm774, %v2234, 0
        %2241 = vmatprep.subr.bf16.mxu0 0
        %2242 = vmatpush1.bf16.xpose.msra.mxu0 0
        %2243 = vmatprep.subr.bf16.mxu0 0
        %2244 = vmatpush1.bf16.xpose.msra.mxu0 0
        %2245 = vmatprep.subr.bf16.mxu0 0
        %2246 = vmatpush1.bf16.xpose.msra.mxu0 0
        %2247 = vmatprep.subr.bf16.mxu0 0
        %2248 = vmatpush1.bf16.xpose.msra.mxu0 0
        %2249 = vmatprep.subr.bf16.mxu0 0
        %2250 = vmatpush1.bf16.xpose.msra.mxu0 0
        %2251 = vmatprep.subr.bf16.mxu0 0
        %2252 = vmatpush1.bf16.xpose.msra.mxu0 0
        %2253 = vmatprep.subr.bf16.mxu0 0
        %2254 = vmatpush1.bf16.xpose.msra.mxu0 0
        %2255 = vmatprep.subr.bf16.mxu0 0
        %2256 = vmatpush1.bf16.xpose.msra.mxu0 %v2239
        %2257 = vmatprep.subr.bf16.mxu0 0
        %2258 = vmatpush2.bf16.xpose.msra.mxu0 0
        %2259 = vmatprep.subr.bf16.mxu0 0
        %2260 = vmatpush2.bf16.xpose.msra.mxu0 0
        %2261 = vmatprep.subr.bf16.mxu0 0
        %2262 = vmatpush2.bf16.xpose.msra.mxu0 0
        %2263 = vmatprep.subr.bf16.mxu0 0
        %2264 = vmatpush2.bf16.xpose.msra.mxu0 0
        %2265 = vmatprep.subr.bf16.mxu0 0
        %2266 = vmatpush2.bf16.xpose.msra.mxu0 0
        %2267 = vmatprep.subr.bf16.mxu0 0
        %2268 = vmatpush2.bf16.xpose.msra.mxu0 0
        %2269 = vmatprep.subr.bf16.mxu0 0
        %2270 = vmatpush2.bf16.xpose.msra.mxu0 0
        %2271 = vmatprep.subr.bf16.mxu0 0
        %2272 = vmatpush2.bf16.xpose.msra.mxu0 0
        %2273 = vmatprep.mubr.bf16.mxu0 0
        %2274 = vmatmul.mubr.bf16.gmra.mxu0 %v2236
        %v2275 = vpop.f32.mrf.mxu0
        %v2276 = vadd.f32 0.0, %v2275
        %v2277 = vpop.f32.mrf.mxu0
        %v2278 = vpop.f32.mrf.mxu0
        %v2279 = vpop.f32.mrf.mxu0
        %2280 = vdwg.mxu0
        %v2281 = vsel %vm1017, %v2076, -inf
        %2282 = vmax.xlane.f32.xlu0 %v2281
        %v2283 = vpop.xlane.xlu0 %2282
        %v2284 = vsel %vm1017, %v2126, -inf
        %2285 = vmax.xlane.f32.xlu0 %v2284
        %v2286 = vpop.xlane.xlu0 %2285
        %v2287 = vsel %vm1017, %v2176, -inf
        %2288 = vmax.xlane.f32.xlu0 %v2287
        %v2289 = vpop.xlane.xlu0 %2288
        %v2290 = vsel %vm1017, %v2226, -inf
        %2291 = vmax.xlane.f32.xlu0 %v2290
        %v2292 = vpop.xlane.xlu0 %2291
        %v2293 = vsel %vm1017, %v2276, -inf
        %2294 = vmax.xlane.f32.xlu0 %v2293
        %v2295 = vpop.xlane.xlu0 %2294
        %v2296 = vsub.f32 %v2076, %v2283
        %v2297 = vsub.f32 %v2126, %v2286
        %v2298 = vsub.f32 %v2176, %v2289
        %v2299 = vsub.f32 %v2226, %v2292
        %v2300 = vsub.f32 %v2276, %v2295
        %v2301 = vmul.f32 %v2296, 1.442695
        %v2302 = vpow.pop %v2301
        %v2303 = vmul.f32 %v2297, 1.442695
        %v2304 = vpow.pop %v2303
        %v2305 = vmul.f32 %v2298, 1.442695
        %v2306 = vpow.pop %v2305
        %v2307 = vmul.f32 %v2299, 1.442695
        %v2308 = vpow.pop %v2307
        %v2309 = vmul.f32 %v2300, 1.442695
        %v2310 = vpow.pop %v2309
        %v2311 = vsel %vm1017, %v2302, 0.0
        %2312 = vadd.xlane.f32.xlu0 %v2311
        %v2313 = vpop.xlane.xlu0 %2312
        %v2314 = vsel %vm1017, %v2304, 0.0
        %2315 = vadd.xlane.f32.xlu0 %v2314
        %v2316 = vpop.xlane.xlu0 %2315
        %v2317 = vsel %vm1017, %v2306, 0.0
        %2318 = vadd.xlane.f32.xlu0 %v2317
        %v2319 = vpop.xlane.xlu0 %2318
        %v2320 = vsel %vm1017, %v2308, 0.0
        %2321 = vadd.xlane.f32.xlu0 %v2320
        %v2322 = vpop.xlane.xlu0 %2321
        %v2323 = vsel %vm1017, %v2310, 0.0
        %2324 = vadd.xlane.f32.xlu0 %v2323
        %v2325 = vpop.xlane.xlu0 %2324
        %v2326 = vrcp.pop %v2313
        %v2327 = vrcp.pop %v2316
        %v2328 = vrcp.pop %v2319
        %v2329 = vrcp.pop %v2322
        %v2330 = vrcp.pop %v2325
        %v2331 = vmul.f32 %v2302, %v2326
        %v2332 = vmul.f32 %v2304, %v2327
        %v2333 = vmul.f32 %v2306, %v2328
        %v2334 = vmul.f32 %v2308, %v2329
        %v2335 = vmul.f32 %v2310, %v2330
        %v2336 = vpack.c.bf16 %v2331, %v2331
        %v2337 = vpack.c.bf16 %v2332, %v2332
        %v2338 = vpack.c.bf16 %v2333, %v2333
        %v2339 = vpack.c.bf16 %v2334, %v2334
        %v2340 = vpack.c.bf16 %v2335, %v2335
        %2341 = vrot.lane.b32.xlu0 %v766, 48
        %v2342 = vpop.permute.xlu0 %2341
        %v2344 = vsel %vm1080, %v2336, 0
        %v2347 = vsel %vm1084, %v2342, 0
        %2349 = vmatprep.subr.bf16.mxu0 0
        %2350 = vmatpush1.bf16.msra.mxu0 0
        %2351 = vmatprep.subr.bf16.mxu0 0
        %2352 = vmatpush1.bf16.msra.mxu0 0
        %2353 = vmatprep.subr.bf16.mxu0 0
        %2354 = vmatpush1.bf16.msra.mxu0 0
        %2355 = vmatprep.subr.bf16.mxu0 0
        %2356 = vmatpush1.bf16.msra.mxu0 0
        %2357 = vmatprep.subr.bf16.mxu0 0
        %2358 = vmatpush1.bf16.msra.mxu0 0
        %2359 = vmatprep.subr.bf16.mxu0 0
        %2360 = vmatpush1.bf16.msra.mxu0 0
        %2361 = vmatprep.subr.bf16.mxu0 0
        %2362 = vmatpush1.bf16.msra.mxu0 0
        %2363 = vmatprep.subr.bf16.mxu0 0
        %2364 = vmatpush1.bf16.msra.mxu0 %v2347
        %2365 = vmatprep.subr.bf16.mxu0 0
        %2366 = vmatpush2.bf16.msra.mxu0 0
        %2367 = vmatprep.subr.bf16.mxu0 0
        %2368 = vmatpush2.bf16.msra.mxu0 0
        %2369 = vmatprep.subr.bf16.mxu0 0
        %2370 = vmatpush2.bf16.msra.mxu0 0
        %2371 = vmatprep.subr.bf16.mxu0 0
        %2372 = vmatpush2.bf16.msra.mxu0 0
        %2373 = vmatprep.subr.bf16.mxu0 0
        %2374 = vmatpush2.bf16.msra.mxu0 0
        %2375 = vmatprep.subr.bf16.mxu0 0
        %2376 = vmatpush2.bf16.msra.mxu0 0
        %2377 = vmatprep.subr.bf16.mxu0 0
        %2378 = vmatpush2.bf16.msra.mxu0 0
        %2379 = vmatprep.subr.bf16.mxu0 0
        %2380 = vmatpush2.bf16.msra.mxu0 0
        %2381 = vmatprep.mubr.bf16.mxu0 0
        %2382 = vmatmul.mubr.bf16.gmra.mxu0 %v2344
        %v2383 = vpop.f32.mrf.mxu0
        %v2384 = vadd.f32 0.0, %v2383
        %v2385 = vpop.f32.mrf.mxu0
        %v2386 = vpop.f32.mrf.mxu0
        %v2387 = vpop.f32.mrf.mxu0
        %2388 = vdwg.mxu0
        %2389 = vrot.lane.b32.xlu0 %v767, 48
        %v2390 = vpop.permute.xlu0 %2389
        %v2392 = vsel %vm1080, %v2337, 0
        %v2395 = vsel %vm1084, %v2390, 0
        %2397 = vmatprep.subr.bf16.mxu0 0
        %2398 = vmatpush1.bf16.msra.mxu0 0
        %2399 = vmatprep.subr.bf16.mxu0 0
        %2400 = vmatpush1.bf16.msra.mxu0 0
        %2401 = vmatprep.subr.bf16.mxu0 0
        %2402 = vmatpush1.bf16.msra.mxu0 0
        %2403 = vmatprep.subr.bf16.mxu0 0
        %2404 = vmatpush1.bf16.msra.mxu0 0
        %2405 = vmatprep.subr.bf16.mxu0 0
        %2406 = vmatpush1.bf16.msra.mxu0 0
        %2407 = vmatprep.subr.bf16.mxu0 0
        %2408 = vmatpush1.bf16.msra.mxu0 0
        %2409 = vmatprep.subr.bf16.mxu0 0
        %2410 = vmatpush1.bf16.msra.mxu0 0
        %2411 = vmatprep.subr.bf16.mxu0 0
        %2412 = vmatpush1.bf16.msra.mxu0 %v2395
        %2413 = vmatprep.subr.bf16.mxu0 0
        %2414 = vmatpush2.bf16.msra.mxu0 0
        %2415 = vmatprep.subr.bf16.mxu0 0
        %2416 = vmatpush2.bf16.msra.mxu0 0
        %2417 = vmatprep.subr.bf16.mxu0 0
        %2418 = vmatpush2.bf16.msra.mxu0 0
        %2419 = vmatprep.subr.bf16.mxu0 0
        %2420 = vmatpush2.bf16.msra.mxu0 0
        %2421 = vmatprep.subr.bf16.mxu0 0
        %2422 = vmatpush2.bf16.msra.mxu0 0
        %2423 = vmatprep.subr.bf16.mxu0 0
        %2424 = vmatpush2.bf16.msra.mxu0 0
        %2425 = vmatprep.subr.bf16.mxu0 0
        %2426 = vmatpush2.bf16.msra.mxu0 0
        %2427 = vmatprep.subr.bf16.mxu0 0
        %2428 = vmatpush2.bf16.msra.mxu0 0
        %2429 = vmatprep.mubr.bf16.mxu0 0
        %2430 = vmatmul.mubr.bf16.gmra.mxu0 %v2392
        %v2431 = vpop.f32.mrf.mxu0
        %v2432 = vadd.f32 0.0, %v2431
        %v2433 = vpop.f32.mrf.mxu0
        %v2434 = vpop.f32.mrf.mxu0
        %v2435 = vpop.f32.mrf.mxu0
        %2436 = vdwg.mxu0
        %2437 = vrot.lane.b32.xlu0 %v768, 48
        %v2438 = vpop.permute.xlu0 %2437
        %v2440 = vsel %vm1080, %v2338, 0
        %v2443 = vsel %vm1084, %v2438, 0
        %2445 = vmatprep.subr.bf16.mxu0 0
        %2446 = vmatpush1.bf16.msra.mxu0 0
        %2447 = vmatprep.subr.bf16.mxu0 0
        %2448 = vmatpush1.bf16.msra.mxu0 0
        %2449 = vmatprep.subr.bf16.mxu0 0
        %2450 = vmatpush1.bf16.msra.mxu0 0
        %2451 = vmatprep.subr.bf16.mxu0 0
        %2452 = vmatpush1.bf16.msra.mxu0 0
        %2453 = vmatprep.subr.bf16.mxu0 0
        %2454 = vmatpush1.bf16.msra.mxu0 0
        %2455 = vmatprep.subr.bf16.mxu0 0
        %2456 = vmatpush1.bf16.msra.mxu0 0
        %2457 = vmatprep.subr.bf16.mxu0 0
        %2458 = vmatpush1.bf16.msra.mxu0 0
        %2459 = vmatprep.subr.bf16.mxu0 0
        %2460 = vmatpush1.bf16.msra.mxu0 %v2443
        %2461 = vmatprep.subr.bf16.mxu0 0
        %2462 = vmatpush2.bf16.msra.mxu0 0
        %2463 = vmatprep.subr.bf16.mxu0 0
        %2464 = vmatpush2.bf16.msra.mxu0 0
        %2465 = vmatprep.subr.bf16.mxu0 0
        %2466 = vmatpush2.bf16.msra.mxu0 0
        %2467 = vmatprep.subr.bf16.mxu0 0
        %2468 = vmatpush2.bf16.msra.mxu0 0
        %2469 = vmatprep.subr.bf16.mxu0 0
        %2470 = vmatpush2.bf16.msra.mxu0 0
        %2471 = vmatprep.subr.bf16.mxu0 0
        %2472 = vmatpush2.bf16.msra.mxu0 0
        %2473 = vmatprep.subr.bf16.mxu0 0
        %2474 = vmatpush2.bf16.msra.mxu0 0
        %2475 = vmatprep.subr.bf16.mxu0 0
        %2476 = vmatpush2.bf16.msra.mxu0 0
        %2477 = vmatprep.mubr.bf16.mxu0 0
        %2478 = vmatmul.mubr.bf16.gmra.mxu0 %v2440
        %v2479 = vpop.f32.mrf.mxu0
        %v2480 = vadd.f32 0.0, %v2479
        %v2481 = vpop.f32.mrf.mxu0
        %v2482 = vpop.f32.mrf.mxu0
        %v2483 = vpop.f32.mrf.mxu0
        %2484 = vdwg.mxu0
        %2485 = vrot.lane.b32.xlu0 %v769, 48
        %v2486 = vpop.permute.xlu0 %2485
        %v2488 = vsel %vm1080, %v2339, 0
        %v2491 = vsel %vm1084, %v2486, 0
        %2493 = vmatprep.subr.bf16.mxu0 0
        %2494 = vmatpush1.bf16.msra.mxu0 0
        %2495 = vmatprep.subr.bf16.mxu0 0
        %2496 = vmatpush1.bf16.msra.mxu0 0
        %2497 = vmatprep.subr.bf16.mxu0 0
        %2498 = vmatpush1.bf16.msra.mxu0 0
        %2499 = vmatprep.subr.bf16.mxu0 0
        %2500 = vmatpush1.bf16.msra.mxu0 0
        %2501 = vmatprep.subr.bf16.mxu0 0
        %2502 = vmatpush1.bf16.msra.mxu0 0
        %2503 = vmatprep.subr.bf16.mxu0 0
        %2504 = vmatpush1.bf16.msra.mxu0 0
        %2505 = vmatprep.subr.bf16.mxu0 0
        %2506 = vmatpush1.bf16.msra.mxu0 0
        %2507 = vmatprep.subr.bf16.mxu0 0
        %2508 = vmatpush1.bf16.msra.mxu0 %v2491
        %2509 = vmatprep.subr.bf16.mxu0 0
        %2510 = vmatpush2.bf16.msra.mxu0 0
        %2511 = vmatprep.subr.bf16.mxu0 0
        %2512 = vmatpush2.bf16.msra.mxu0 0
        %2513 = vmatprep.subr.bf16.mxu0 0
        %2514 = vmatpush2.bf16.msra.mxu0 0
        %2515 = vmatprep.subr.bf16.mxu0 0
        %2516 = vmatpush2.bf16.msra.mxu0 0
        %2517 = vmatprep.subr.bf16.mxu0 0
        %2518 = vmatpush2.bf16.msra.mxu0 0
        %2519 = vmatprep.subr.bf16.mxu0 0
        %2520 = vmatpush2.bf16.msra.mxu0 0
        %2521 = vmatprep.subr.bf16.mxu0 0
        %2522 = vmatpush2.bf16.msra.mxu0 0
        %2523 = vmatprep.subr.bf16.mxu0 0
        %2524 = vmatpush2.bf16.msra.mxu0 0
        %2525 = vmatprep.mubr.bf16.mxu0 0
        %2526 = vmatmul.mubr.bf16.gmra.mxu0 %v2488
        %v2527 = vpop.f32.mrf.mxu0
        %v2528 = vadd.f32 0.0, %v2527
        %v2529 = vpop.f32.mrf.mxu0
        %v2530 = vpop.f32.mrf.mxu0
        %v2531 = vpop.f32.mrf.mxu0
        %2532 = vdwg.mxu0
        %2533 = vrot.lane.b32.xlu0 %v770, 48
        %v2534 = vpop.permute.xlu0 %2533
        %v2536 = vsel %vm1080, %v2340, 0
        %v2539 = vsel %vm1084, %v2534, 0
        %2541 = vmatprep.subr.bf16.mxu0 0
        %2542 = vmatpush1.bf16.msra.mxu0 0
        %2543 = vmatprep.subr.bf16.mxu0 0
        %2544 = vmatpush1.bf16.msra.mxu0 0
        %2545 = vmatprep.subr.bf16.mxu0 0
        %2546 = vmatpush1.bf16.msra.mxu0 0
        %2547 = vmatprep.subr.bf16.mxu0 0
        %2548 = vmatpush1.bf16.msra.mxu0 0
        %2549 = vmatprep.subr.bf16.mxu0 0
        %2550 = vmatpush1.bf16.msra.mxu0 0
        %2551 = vmatprep.subr.bf16.mxu0 0
        %2552 = vmatpush1.bf16.msra.mxu0 0
        %2553 = vmatprep.subr.bf16.mxu0 0
        %2554 = vmatpush1.bf16.msra.mxu0 0
        %2555 = vmatprep.subr.bf16.mxu0 0
        %2556 = vmatpush1.bf16.msra.mxu0 %v2539
        %2557 = vmatprep.subr.bf16.mxu0 0
        %2558 = vmatpush2.bf16.msra.mxu0 0
        %2559 = vmatprep.subr.bf16.mxu0 0
        %2560 = vmatpush2.bf16.msra.mxu0 0
        %2561 = vmatprep.subr.bf16.mxu0 0
        %2562 = vmatpush2.bf16.msra.mxu0 0
        %2563 = vmatprep.subr.bf16.mxu0 0
        %2564 = vmatpush2.bf16.msra.mxu0 0
        %2565 = vmatprep.subr.bf16.mxu0 0
        %2566 = vmatpush2.bf16.msra.mxu0 0
        %2567 = vmatprep.subr.bf16.mxu0 0
        %2568 = vmatpush2.bf16.msra.mxu0 0
        %2569 = vmatprep.subr.bf16.mxu0 0
        %2570 = vmatpush2.bf16.msra.mxu0 0
        %2571 = vmatprep.subr.bf16.mxu0 0
        %2572 = vmatpush2.bf16.msra.mxu0 0
        %2573 = vmatprep.mubr.bf16.mxu0 0
        %2574 = vmatmul.mubr.bf16.gmra.mxu0 %v2536
        %v2575 = vpop.f32.mrf.mxu0
        %v2576 = vadd.f32 0.0, %v2575
        %v2577 = vpop.f32.mrf.mxu0
        %v2578 = vpop.f32.mrf.mxu0
        %v2579 = vpop.f32.mrf.mxu0
        %2580 = vdwg.mxu0
        %v2586 = vcombine.low %v2384, %v2432
        %v2587 = vcombine.low %v2480, %v2528
        %v2589 = vunpack.c.l.s4 1983009808
        %v2590 = vunpack.c.0.s8 %v2589
        %v2591 = vlaneseq
        %v2592 = vshrl.u32 %v2591, 7
        %v2593 = vsub.s32 %v2590, %v2592
        %v2594 = vrot.slane %v2586, %v2593
        %v2596 = vunpack.c.l.s4 1983009808
        %v2597 = vunpack.c.0.s8 %v2596
        %v2598 = vlaneseq
        %v2599 = vshrl.u32 %v2598, 7
        %v2600 = vsub.s32 %v2597, %v2599
        %v2601 = vrot.slane %v2587, %v2600
        %v2602 = vcombine.low %v2594, %v2601
        %v2604 = vunpack.c.l.s4 1983009808
        %v2605 = vunpack.c.0.s8 %v2604
        %v2606 = vlaneseq
        %v2607 = vshrl.u32 %v2606, 7
        %v2608 = vsub.s32 %v2605, %v2607
        %v2609 = vrot.slane %v2576, %v2608
        %v2612 = vpack.c.bf16 %v2609, %v2602
        %v2613 = vld [vmem:[%s621 + $0x8] sm:$0xf]
        %v2615 = vsel %vm774, %v2612, 0
        %v2618 = vsel %vm1939, %v2613, 0
        %2620 = vmatprep.subr.bf16.mxu0 0
        %2621 = vmatpush1.bf16.msra.mxu0 0
        %2622 = vmatprep.subr.bf16.mxu0 0
        %2623 = vmatpush1.bf16.msra.mxu0 0
        %2624 = vmatprep.subr.bf16.mxu0 0
        %2625 = vmatpush1.bf16.msra.mxu0 0
        %2626 = vmatprep.subr.bf16.mxu0 0
        %2627 = vmatpush1.bf16.msra.mxu0 0
        %2628 = vmatprep.subr.bf16.mxu0 0
        %2629 = vmatpush1.bf16.msra.mxu0 0
        %2630 = vmatprep.subr.bf16.mxu0 0
        %2631 = vmatpush1.bf16.msra.mxu0 0
        %2632 = vmatprep.subr.bf16.mxu0 0
        %2633 = vmatpush1.bf16.msra.mxu0 0
        %2634 = vmatprep.subr.bf16.mxu0 0
        %2635 = vmatpush1.bf16.msra.mxu0 %v2618
        %2636 = vmatprep.subr.bf16.mxu0 0
        %2637 = vmatpush2.bf16.msra.mxu0 0
        %2638 = vmatprep.subr.bf16.mxu0 0
        %2639 = vmatpush2.bf16.msra.mxu0 0
        %2640 = vmatprep.subr.bf16.mxu0 0
        %2641 = vmatpush2.bf16.msra.mxu0 0
        %2642 = vmatprep.subr.bf16.mxu0 0
        %2643 = vmatpush2.bf16.msra.mxu0 0
        %2644 = vmatprep.subr.bf16.mxu0 0
        %2645 = vmatpush2.bf16.msra.mxu0 0
        %2646 = vmatprep.subr.bf16.mxu0 0
        %2647 = vmatpush2.bf16.msra.mxu0 0
        %2648 = vmatprep.subr.bf16.mxu0 0
        %2649 = vmatpush2.bf16.msra.mxu0 0
        %2650 = vmatprep.subr.bf16.mxu0 0
        %2651 = vmatpush2.bf16.msra.mxu0 0
        %2652 = vmatprep.mubr.bf16.mxu0 0
        %2653 = vmatmul.mubr.bf16.gmra.mxu0 %v2615
        %v2654 = vpop.f32.mrf.mxu0
        %v2655 = vadd.f32 0.0, %v2654
        %v2656 = vpop.f32.mrf.mxu0
        %v2657 = vpop.f32.mrf.mxu0
        %v2658 = vadd.f32 0.0, %v2657
        %v2659 = vpop.f32.mrf.mxu0
        %2660 = vdwg.mxu0
        %v2661 = vadd.f32 %v2025, %v2655
        %v2662 = vadd.f32 %v2028, %v2658
        %2663 = vrot.lane.b32.xlu0 %v766, 104
        %v2664 = vpop.permute.xlu0 %2663
        %2665 = vrot.lane.b32.xlu0 %v766, 72
        %v2666 = vpop.permute.xlu0 %2665
        %v2668 = vsel %vm774, %v2664, 0
        %v2671 = vsel %vm774, %v2666, 0
        %2673 = vmatprep.subr.bf16.mxu0 0
        %2674 = vmatpush1.bf16.xpose.msra.mxu0 0
        %2675 = vmatprep.subr.bf16.mxu0 0
        %2676 = vmatpush1.bf16.xpose.msra.mxu0 0
        %2677 = vmatprep.subr.bf16.mxu0 0
        %2678 = vmatpush1.bf16.xpose.msra.mxu0 0
        %2679 = vmatprep.subr.bf16.mxu0 0
        %2680 = vmatpush1.bf16.xpose.msra.mxu0 0
        %2681 = vmatprep.subr.bf16.mxu0 0
        %2682 = vmatpush1.bf16.xpose.msra.mxu0 0
        %2683 = vmatprep.subr.bf16.mxu0 0
        %2684 = vmatpush1.bf16.xpose.msra.mxu0 0
        %2685 = vmatprep.subr.bf16.mxu0 0
        %2686 = vmatpush1.bf16.xpose.msra.mxu0 0
        %2687 = vmatprep.subr.bf16.mxu0 0
        %2688 = vmatpush1.bf16.xpose.msra.mxu0 %v2671
        %2689 = vmatprep.subr.bf16.mxu0 0
        %2690 = vmatpush2.bf16.xpose.msra.mxu0 0
        %2691 = vmatprep.subr.bf16.mxu0 0
        %2692 = vmatpush2.bf16.xpose.msra.mxu0 0
        %2693 = vmatprep.subr.bf16.mxu0 0
        %2694 = vmatpush2.bf16.xpose.msra.mxu0 0
        %2695 = vmatprep.subr.bf16.mxu0 0
        %2696 = vmatpush2.bf16.xpose.msra.mxu0 0
        %2697 = vmatprep.subr.bf16.mxu0 0
        %2698 = vmatpush2.bf16.xpose.msra.mxu0 0
        %2699 = vmatprep.subr.bf16.mxu0 0
        %2700 = vmatpush2.bf16.xpose.msra.mxu0 0
        %2701 = vmatprep.subr.bf16.mxu0 0
        %2702 = vmatpush2.bf16.xpose.msra.mxu0 0
        %2703 = vmatprep.subr.bf16.mxu0 0
        %2704 = vmatpush2.bf16.xpose.msra.mxu0 0
        %2705 = vmatprep.mubr.bf16.mxu0 0
        %2706 = vmatmul.mubr.bf16.gmra.mxu0 %v2668
        %v2707 = vpop.f32.mrf.mxu0
        %v2708 = vadd.f32 0.0, %v2707
        %v2709 = vpop.f32.mrf.mxu0
        %v2710 = vpop.f32.mrf.mxu0
        %v2711 = vpop.f32.mrf.mxu0
        %2712 = vdwg.mxu0
        %2713 = vrot.lane.b32.xlu0 %v767, 104
        %v2714 = vpop.permute.xlu0 %2713
        %2715 = vrot.lane.b32.xlu0 %v767, 72
        %v2716 = vpop.permute.xlu0 %2715
        %v2718 = vsel %vm774, %v2714, 0
        %v2721 = vsel %vm774, %v2716, 0
        %2723 = vmatprep.subr.bf16.mxu0 0
        %2724 = vmatpush1.bf16.xpose.msra.mxu0 0
        %2725 = vmatprep.subr.bf16.mxu0 0
        %2726 = vmatpush1.bf16.xpose.msra.mxu0 0
        %2727 = vmatprep.subr.bf16.mxu0 0
        %2728 = vmatpush1.bf16.xpose.msra.mxu0 0
        %2729 = vmatprep.subr.bf16.mxu0 0
        %2730 = vmatpush1.bf16.xpose.msra.mxu0 0
        %2731 = vmatprep.subr.bf16.mxu0 0
        %2732 = vmatpush1.bf16.xpose.msra.mxu0 0
        %2733 = vmatprep.subr.bf16.mxu0 0
        %2734 = vmatpush1.bf16.xpose.msra.mxu0 0
        %2735 = vmatprep.subr.bf16.mxu0 0
        %2736 = vmatpush1.bf16.xpose.msra.mxu0 0
        %2737 = vmatprep.subr.bf16.mxu0 0
        %2738 = vmatpush1.bf16.xpose.msra.mxu0 %v2721
        %2739 = vmatprep.subr.bf16.mxu0 0
        %2740 = vmatpush2.bf16.xpose.msra.mxu0 0
        %2741 = vmatprep.subr.bf16.mxu0 0
        %2742 = vmatpush2.bf16.xpose.msra.mxu0 0
        %2743 = vmatprep.subr.bf16.mxu0 0
        %2744 = vmatpush2.bf16.xpose.msra.mxu0 0
        %2745 = vmatprep.subr.bf16.mxu0 0
        %2746 = vmatpush2.bf16.xpose.msra.mxu0 0
        %2747 = vmatprep.subr.bf16.mxu0 0
        %2748 = vmatpush2.bf16.xpose.msra.mxu0 0
        %2749 = vmatprep.subr.bf16.mxu0 0
        %2750 = vmatpush2.bf16.xpose.msra.mxu0 0
        %2751 = vmatprep.subr.bf16.mxu0 0
        %2752 = vmatpush2.bf16.xpose.msra.mxu0 0
        %2753 = vmatprep.subr.bf16.mxu0 0
        %2754 = vmatpush2.bf16.xpose.msra.mxu0 0
        %2755 = vmatprep.mubr.bf16.mxu0 0
        %2756 = vmatmul.mubr.bf16.gmra.mxu0 %v2718
        %v2757 = vpop.f32.mrf.mxu0
        %v2758 = vadd.f32 0.0, %v2757
        %v2759 = vpop.f32.mrf.mxu0
        %v2760 = vpop.f32.mrf.mxu0
        %v2761 = vpop.f32.mrf.mxu0
        %2762 = vdwg.mxu0
        %2763 = vrot.lane.b32.xlu0 %v768, 104
        %v2764 = vpop.permute.xlu0 %2763
        %2765 = vrot.lane.b32.xlu0 %v768, 72
        %v2766 = vpop.permute.xlu0 %2765
        %v2768 = vsel %vm774, %v2764, 0
        %v2771 = vsel %vm774, %v2766, 0
        %2773 = vmatprep.subr.bf16.mxu0 0
        %2774 = vmatpush1.bf16.xpose.msra.mxu0 0
        %2775 = vmatprep.subr.bf16.mxu0 0
        %2776 = vmatpush1.bf16.xpose.msra.mxu0 0
        %2777 = vmatprep.subr.bf16.mxu0 0
        %2778 = vmatpush1.bf16.xpose.msra.mxu0 0
        %2779 = vmatprep.subr.bf16.mxu0 0
        %2780 = vmatpush1.bf16.xpose.msra.mxu0 0
        %2781 = vmatprep.subr.bf16.mxu0 0
        %2782 = vmatpush1.bf16.xpose.msra.mxu0 0
        %2783 = vmatprep.subr.bf16.mxu0 0
        %2784 = vmatpush1.bf16.xpose.msra.mxu0 0
        %2785 = vmatprep.subr.bf16.mxu0 0
        %2786 = vmatpush1.bf16.xpose.msra.mxu0 0
        %2787 = vmatprep.subr.bf16.mxu0 0
        %2788 = vmatpush1.bf16.xpose.msra.mxu0 %v2771
        %2789 = vmatprep.subr.bf16.mxu0 0
        %2790 = vmatpush2.bf16.xpose.msra.mxu0 0
        %2791 = vmatprep.subr.bf16.mxu0 0
        %2792 = vmatpush2.bf16.xpose.msra.mxu0 0
        %2793 = vmatprep.subr.bf16.mxu0 0
        %2794 = vmatpush2.bf16.xpose.msra.mxu0 0
        %2795 = vmatprep.subr.bf16.mxu0 0
        %2796 = vmatpush2.bf16.xpose.msra.mxu0 0
        %2797 = vmatprep.subr.bf16.mxu0 0
        %2798 = vmatpush2.bf16.xpose.msra.mxu0 0
        %2799 = vmatprep.subr.bf16.mxu0 0
        %2800 = vmatpush2.bf16.xpose.msra.mxu0 0
        %2801 = vmatprep.subr.bf16.mxu0 0
        %2802 = vmatpush2.bf16.xpose.msra.mxu0 0
        %2803 = vmatprep.subr.bf16.mxu0 0
        %2804 = vmatpush2.bf16.xpose.msra.mxu0 0
        %2805 = vmatprep.mubr.bf16.mxu0 0
        %2806 = vmatmul.mubr.bf16.gmra.mxu0 %v2768
        %v2807 = vpop.f32.mrf.mxu0
        %v2808 = vadd.f32 0.0, %v2807
        %v2809 = vpop.f32.mrf.mxu0
        %v2810 = vpop.f32.mrf.mxu0
        %v2811 = vpop.f32.mrf.mxu0
        %2812 = vdwg.mxu0
        %2813 = vrot.lane.b32.xlu0 %v769, 104
        %v2814 = vpop.permute.xlu0 %2813
        %2815 = vrot.lane.b32.xlu0 %v769, 72
        %v2816 = vpop.permute.xlu0 %2815
        %v2818 = vsel %vm774, %v2814, 0
        %v2821 = vsel %vm774, %v2816, 0
        %2823 = vmatprep.subr.bf16.mxu0 0
        %2824 = vmatpush1.bf16.xpose.msra.mxu0 0
        %2825 = vmatprep.subr.bf16.mxu0 0
        %2826 = vmatpush1.bf16.xpose.msra.mxu0 0
        %2827 = vmatprep.subr.bf16.mxu0 0
        %2828 = vmatpush1.bf16.xpose.msra.mxu0 0
        %2829 = vmatprep.subr.bf16.mxu0 0
        %2830 = vmatpush1.bf16.xpose.msra.mxu0 0
        %2831 = vmatprep.subr.bf16.mxu0 0
        %2832 = vmatpush1.bf16.xpose.msra.mxu0 0
        %2833 = vmatprep.subr.bf16.mxu0 0
        %2834 = vmatpush1.bf16.xpose.msra.mxu0 0
        %2835 = vmatprep.subr.bf16.mxu0 0
        %2836 = vmatpush1.bf16.xpose.msra.mxu0 0
        %2837 = vmatprep.subr.bf16.mxu0 0
        %2838 = vmatpush1.bf16.xpose.msra.mxu0 %v2821
        %2839 = vmatprep.subr.bf16.mxu0 0
        %2840 = vmatpush2.bf16.xpose.msra.mxu0 0
        %2841 = vmatprep.subr.bf16.mxu0 0
        %2842 = vmatpush2.bf16.xpose.msra.mxu0 0
        %2843 = vmatprep.subr.bf16.mxu0 0
        %2844 = vmatpush2.bf16.xpose.msra.mxu0 0
        %2845 = vmatprep.subr.bf16.mxu0 0
        %2846 = vmatpush2.bf16.xpose.msra.mxu0 0
        %2847 = vmatprep.subr.bf16.mxu0 0
        %2848 = vmatpush2.bf16.xpose.msra.mxu0 0
        %2849 = vmatprep.subr.bf16.mxu0 0
        %2850 = vmatpush2.bf16.xpose.msra.mxu0 0
        %2851 = vmatprep.subr.bf16.mxu0 0
        %2852 = vmatpush2.bf16.xpose.msra.mxu0 0
        %2853 = vmatprep.subr.bf16.mxu0 0
        %2854 = vmatpush2.bf16.xpose.msra.mxu0 0
        %2855 = vmatprep.mubr.bf16.mxu0 0
        %2856 = vmatmul.mubr.bf16.gmra.mxu0 %v2818
        %v2857 = vpop.f32.mrf.mxu0
        %v2858 = vadd.f32 0.0, %v2857
        %v2859 = vpop.f32.mrf.mxu0
        %v2860 = vpop.f32.mrf.mxu0
        %v2861 = vpop.f32.mrf.mxu0
        %2862 = vdwg.mxu0
        %2863 = vrot.lane.b32.xlu0 %v770, 104
        %v2864 = vpop.permute.xlu0 %2863
        %2865 = vrot.lane.b32.xlu0 %v770, 72
        %v2866 = vpop.permute.xlu0 %2865
        %v2868 = vsel %vm774, %v2864, 0
        %v2871 = vsel %vm774, %v2866, 0
        %2873 = vmatprep.subr.bf16.mxu0 0
        %2874 = vmatpush1.bf16.xpose.msra.mxu0 0
        %2875 = vmatprep.subr.bf16.mxu0 0
        %2876 = vmatpush1.bf16.xpose.msra.mxu0 0
        %2877 = vmatprep.subr.bf16.mxu0 0
        %2878 = vmatpush1.bf16.xpose.msra.mxu0 0
        %2879 = vmatprep.subr.bf16.mxu0 0
        %2880 = vmatpush1.bf16.xpose.msra.mxu0 0
        %2881 = vmatprep.subr.bf16.mxu0 0
        %2882 = vmatpush1.bf16.xpose.msra.mxu0 0
        %2883 = vmatprep.subr.bf16.mxu0 0
        %2884 = vmatpush1.bf16.xpose.msra.mxu0 0
        %2885 = vmatprep.subr.bf16.mxu0 0
        %2886 = vmatpush1.bf16.xpose.msra.mxu0 0
        %2887 = vmatprep.subr.bf16.mxu0 0
        %2888 = vmatpush1.bf16.xpose.msra.mxu0 %v2871
        %2889 = vmatprep.subr.bf16.mxu0 0
        %2890 = vmatpush2.bf16.xpose.msra.mxu0 0
        %2891 = vmatprep.subr.bf16.mxu0 0
        %2892 = vmatpush2.bf16.xpose.msra.mxu0 0
        %2893 = vmatprep.subr.bf16.mxu0 0
        %2894 = vmatpush2.bf16.xpose.msra.mxu0 0
        %2895 = vmatprep.subr.bf16.mxu0 0
        %2896 = vmatpush2.bf16.xpose.msra.mxu0 0
        %2897 = vmatprep.subr.bf16.mxu0 0
        %2898 = vmatpush2.bf16.xpose.msra.mxu0 0
        %2899 = vmatprep.subr.bf16.mxu0 0
        %2900 = vmatpush2.bf16.xpose.msra.mxu0 0
        %2901 = vmatprep.subr.bf16.mxu0 0
        %2902 = vmatpush2.bf16.xpose.msra.mxu0 0
        %2903 = vmatprep.subr.bf16.mxu0 0
        %2904 = vmatpush2.bf16.xpose.msra.mxu0 0
        %2905 = vmatprep.mubr.bf16.mxu0 0
        %2906 = vmatmul.mubr.bf16.gmra.mxu0 %v2868
        %v2907 = vpop.f32.mrf.mxu0
        %v2908 = vadd.f32 0.0, %v2907
        %v2909 = vpop.f32.mrf.mxu0
        %v2910 = vpop.f32.mrf.mxu0
        %v2911 = vpop.f32.mrf.mxu0
        %2912 = vdwg.mxu0
        %v2913 = vsel %vm1017, %v2708, -inf
        %2914 = vmax.xlane.f32.xlu0 %v2913
        %v2915 = vpop.xlane.xlu0 %2914
        %v2916 = vsel %vm1017, %v2758, -inf
        %2917 = vmax.xlane.f32.xlu0 %v2916
        %v2918 = vpop.xlane.xlu0 %2917
        %v2919 = vsel %vm1017, %v2808, -inf
        %2920 = vmax.xlane.f32.xlu0 %v2919
        %v2921 = vpop.xlane.xlu0 %2920
        %v2922 = vsel %vm1017, %v2858, -inf
        %2923 = vmax.xlane.f32.xlu0 %v2922
        %v2924 = vpop.xlane.xlu0 %2923
        %v2925 = vsel %vm1017, %v2908, -inf
        %2926 = vmax.xlane.f32.xlu0 %v2925
        %v2927 = vpop.xlane.xlu0 %2926
        %v2928 = vsub.f32 %v2708, %v2915
        %v2929 = vsub.f32 %v2758, %v2918
        %v2930 = vsub.f32 %v2808, %v2921
        %v2931 = vsub.f32 %v2858, %v2924
        %v2932 = vsub.f32 %v2908, %v2927
        %v2933 = vmul.f32 %v2928, 1.442695
        %v2934 = vpow.pop %v2933
        %v2935 = vmul.f32 %v2929, 1.442695
        %v2936 = vpow.pop %v2935
        %v2937 = vmul.f32 %v2930, 1.442695
        %v2938 = vpow.pop %v2937
        %v2939 = vmul.f32 %v2931, 1.442695
        %v2940 = vpow.pop %v2939
        %v2941 = vmul.f32 %v2932, 1.442695
        %v2942 = vpow.pop %v2941
        %v2943 = vsel %vm1017, %v2934, 0.0
        %2944 = vadd.xlane.f32.xlu0 %v2943
        %v2945 = vpop.xlane.xlu0 %2944
        %v2946 = vsel %vm1017, %v2936, 0.0
        %2947 = vadd.xlane.f32.xlu0 %v2946
        %v2948 = vpop.xlane.xlu0 %2947
        %v2949 = vsel %vm1017, %v2938, 0.0
        %2950 = vadd.xlane.f32.xlu0 %v2949
        %v2951 = vpop.xlane.xlu0 %2950
        %v2952 = vsel %vm1017, %v2940, 0.0
        %2953 = vadd.xlane.f32.xlu0 %v2952
        %v2954 = vpop.xlane.xlu0 %2953
        %v2955 = vsel %vm1017, %v2942, 0.0
        %2956 = vadd.xlane.f32.xlu0 %v2955
        %v2957 = vpop.xlane.xlu0 %2956
        %v2958 = vrcp.pop %v2945
        %v2959 = vrcp.pop %v2948
        %v2960 = vrcp.pop %v2951
        %v2961 = vrcp.pop %v2954
        %v2962 = vrcp.pop %v2957
        %v2963 = vmul.f32 %v2934, %v2958
        %v2964 = vmul.f32 %v2936, %v2959
        %v2965 = vmul.f32 %v2938, %v2960
        %v2966 = vmul.f32 %v2940, %v2961
        %v2967 = vmul.f32 %v2942, %v2962
        %v2968 = vpack.c.bf16 %v2963, %v2963
        %v2969 = vpack.c.bf16 %v2964, %v2964
        %v2970 = vpack.c.bf16 %v2965, %v2965
        %v2971 = vpack.c.bf16 %v2966, %v2966
        %v2972 = vpack.c.bf16 %v2967, %v2967
        %2973 = vrot.lane.b32.xlu0 %v766, 40
        %v2974 = vpop.permute.xlu0 %2973
        %v2976 = vsel %vm1080, %v2968, 0
        %v2979 = vsel %vm1084, %v2974, 0
        %2981 = vmatprep.subr.bf16.mxu0 0
        %2982 = vmatpush1.bf16.msra.mxu0 0
        %2983 = vmatprep.subr.bf16.mxu0 0
        %2984 = vmatpush1.bf16.msra.mxu0 0
        %2985 = vmatprep.subr.bf16.mxu0 0
        %2986 = vmatpush1.bf16.msra.mxu0 0
        %2987 = vmatprep.subr.bf16.mxu0 0
        %2988 = vmatpush1.bf16.msra.mxu0 0
        %2989 = vmatprep.subr.bf16.mxu0 0
        %2990 = vmatpush1.bf16.msra.mxu0 0
        %2991 = vmatprep.subr.bf16.mxu0 0
        %2992 = vmatpush1.bf16.msra.mxu0 0
        %2993 = vmatprep.subr.bf16.mxu0 0
        %2994 = vmatpush1.bf16.msra.mxu0 0
        %2995 = vmatprep.subr.bf16.mxu0 0
        %2996 = vmatpush1.bf16.msra.mxu0 %v2979
        %2997 = vmatprep.subr.bf16.mxu0 0
        %2998 = vmatpush2.bf16.msra.mxu0 0
        %2999 = vmatprep.subr.bf16.mxu0 0
        %3000 = vmatpush2.bf16.msra.mxu0 0
        %3001 = vmatprep.subr.bf16.mxu0 0
        %3002 = vmatpush2.bf16.msra.mxu0 0
        %3003 = vmatprep.subr.bf16.mxu0 0
        %3004 = vmatpush2.bf16.msra.mxu0 0
        %3005 = vmatprep.subr.bf16.mxu0 0
        %3006 = vmatpush2.bf16.msra.mxu0 0
        %3007 = vmatprep.subr.bf16.mxu0 0
        %3008 = vmatpush2.bf16.msra.mxu0 0
        %3009 = vmatprep.subr.bf16.mxu0 0
        %3010 = vmatpush2.bf16.msra.mxu0 0
        %3011 = vmatprep.subr.bf16.mxu0 0
        %3012 = vmatpush2.bf16.msra.mxu0 0
        %3013 = vmatprep.mubr.bf16.mxu0 0
        %3014 = vmatmul.mubr.bf16.gmra.mxu0 %v2976
        %v3015 = vpop.f32.mrf.mxu0
        %v3016 = vadd.f32 0.0, %v3015
        %v3017 = vpop.f32.mrf.mxu0
        %v3018 = vpop.f32.mrf.mxu0
        %v3019 = vpop.f32.mrf.mxu0
        %3020 = vdwg.mxu0
        %3021 = vrot.lane.b32.xlu0 %v767, 40
        %v3022 = vpop.permute.xlu0 %3021
        %v3024 = vsel %vm1080, %v2969, 0
        %v3027 = vsel %vm1084, %v3022, 0
        %3029 = vmatprep.subr.bf16.mxu0 0
        %3030 = vmatpush1.bf16.msra.mxu0 0
        %3031 = vmatprep.subr.bf16.mxu0 0
        %3032 = vmatpush1.bf16.msra.mxu0 0
        %3033 = vmatprep.subr.bf16.mxu0 0
        %3034 = vmatpush1.bf16.msra.mxu0 0
        %3035 = vmatprep.subr.bf16.mxu0 0
        %3036 = vmatpush1.bf16.msra.mxu0 0
        %3037 = vmatprep.subr.bf16.mxu0 0
        %3038 = vmatpush1.bf16.msra.mxu0 0
        %3039 = vmatprep.subr.bf16.mxu0 0
        %3040 = vmatpush1.bf16.msra.mxu0 0
        %3041 = vmatprep.subr.bf16.mxu0 0
        %3042 = vmatpush1.bf16.msra.mxu0 0
        %3043 = vmatprep.subr.bf16.mxu0 0
        %3044 = vmatpush1.bf16.msra.mxu0 %v3027
        %3045 = vmatprep.subr.bf16.mxu0 0
        %3046 = vmatpush2.bf16.msra.mxu0 0
        %3047 = vmatprep.subr.bf16.mxu0 0
        %3048 = vmatpush2.bf16.msra.mxu0 0
        %3049 = vmatprep.subr.bf16.mxu0 0
        %3050 = vmatpush2.bf16.msra.mxu0 0
        %3051 = vmatprep.subr.bf16.mxu0 0
        %3052 = vmatpush2.bf16.msra.mxu0 0
        %3053 = vmatprep.subr.bf16.mxu0 0
        %3054 = vmatpush2.bf16.msra.mxu0 0
        %3055 = vmatprep.subr.bf16.mxu0 0
        %3056 = vmatpush2.bf16.msra.mxu0 0
        %3057 = vmatprep.subr.bf16.mxu0 0
        %3058 = vmatpush2.bf16.msra.mxu0 0
        %3059 = vmatprep.subr.bf16.mxu0 0
        %3060 = vmatpush2.bf16.msra.mxu0 0
        %3061 = vmatprep.mubr.bf16.mxu0 0
        %3062 = vmatmul.mubr.bf16.gmra.mxu0 %v3024
        %v3063 = vpop.f32.mrf.mxu0
        %v3064 = vadd.f32 0.0, %v3063
        %v3065 = vpop.f32.mrf.mxu0
        %v3066 = vpop.f32.mrf.mxu0
        %v3067 = vpop.f32.mrf.mxu0
        %3068 = vdwg.mxu0
        %3069 = vrot.lane.b32.xlu0 %v768, 40
        %v3070 = vpop.permute.xlu0 %3069
        %v3072 = vsel %vm1080, %v2970, 0
        %v3075 = vsel %vm1084, %v3070, 0
        %3077 = vmatprep.subr.bf16.mxu0 0
        %3078 = vmatpush1.bf16.msra.mxu0 0
        %3079 = vmatprep.subr.bf16.mxu0 0
        %3080 = vmatpush1.bf16.msra.mxu0 0
        %3081 = vmatprep.subr.bf16.mxu0 0
        %3082 = vmatpush1.bf16.msra.mxu0 0
        %3083 = vmatprep.subr.bf16.mxu0 0
        %3084 = vmatpush1.bf16.msra.mxu0 0
        %3085 = vmatprep.subr.bf16.mxu0 0
        %3086 = vmatpush1.bf16.msra.mxu0 0
        %3087 = vmatprep.subr.bf16.mxu0 0
        %3088 = vmatpush1.bf16.msra.mxu0 0
        %3089 = vmatprep.subr.bf16.mxu0 0
        %3090 = vmatpush1.bf16.msra.mxu0 0
        %3091 = vmatprep.subr.bf16.mxu0 0
        %3092 = vmatpush1.bf16.msra.mxu0 %v3075
        %3093 = vmatprep.subr.bf16.mxu0 0
        %3094 = vmatpush2.bf16.msra.mxu0 0
        %3095 = vmatprep.subr.bf16.mxu0 0
        %3096 = vmatpush2.bf16.msra.mxu0 0
        %3097 = vmatprep.subr.bf16.mxu0 0
        %3098 = vmatpush2.bf16.msra.mxu0 0
        %3099 = vmatprep.subr.bf16.mxu0 0
        %3100 = vmatpush2.bf16.msra.mxu0 0
        %3101 = vmatprep.subr.bf16.mxu0 0
        %3102 = vmatpush2.bf16.msra.mxu0 0
        %3103 = vmatprep.subr.bf16.mxu0 0
        %3104 = vmatpush2.bf16.msra.mxu0 0
        %3105 = vmatprep.subr.bf16.mxu0 0
        %3106 = vmatpush2.bf16.msra.mxu0 0
        %3107 = vmatprep.subr.bf16.mxu0 0
        %3108 = vmatpush2.bf16.msra.mxu0 0
        %3109 = vmatprep.mubr.bf16.mxu0 0
        %3110 = vmatmul.mubr.bf16.gmra.mxu0 %v3072
        %v3111 = vpop.f32.mrf.mxu0
        %v3112 = vadd.f32 0.0, %v3111
        %v3113 = vpop.f32.mrf.mxu0
        %v3114 = vpop.f32.mrf.mxu0
        %v3115 = vpop.f32.mrf.mxu0
        %3116 = vdwg.mxu0
        %3117 = vrot.lane.b32.xlu0 %v769, 40
        %v3118 = vpop.permute.xlu0 %3117
        %v3120 = vsel %vm1080, %v2971, 0
        %v3123 = vsel %vm1084, %v3118, 0
        %3125 = vmatprep.subr.bf16.mxu0 0
        %3126 = vmatpush1.bf16.msra.mxu0 0
        %3127 = vmatprep.subr.bf16.mxu0 0
        %3128 = vmatpush1.bf16.msra.mxu0 0
        %3129 = vmatprep.subr.bf16.mxu0 0
        %3130 = vmatpush1.bf16.msra.mxu0 0
        %3131 = vmatprep.subr.bf16.mxu0 0
        %3132 = vmatpush1.bf16.msra.mxu0 0
        %3133 = vmatprep.subr.bf16.mxu0 0
        %3134 = vmatpush1.bf16.msra.mxu0 0
        %3135 = vmatprep.subr.bf16.mxu0 0
        %3136 = vmatpush1.bf16.msra.mxu0 0
        %3137 = vmatprep.subr.bf16.mxu0 0
        %3138 = vmatpush1.bf16.msra.mxu0 0
        %3139 = vmatprep.subr.bf16.mxu0 0
        %3140 = vmatpush1.bf16.msra.mxu0 %v3123
        %3141 = vmatprep.subr.bf16.mxu0 0
        %3142 = vmatpush2.bf16.msra.mxu0 0
        %3143 = vmatprep.subr.bf16.mxu0 0
        %3144 = vmatpush2.bf16.msra.mxu0 0
        %3145 = vmatprep.subr.bf16.mxu0 0
        %3146 = vmatpush2.bf16.msra.mxu0 0
        %3147 = vmatprep.subr.bf16.mxu0 0
        %3148 = vmatpush2.bf16.msra.mxu0 0
        %3149 = vmatprep.subr.bf16.mxu0 0
        %3150 = vmatpush2.bf16.msra.mxu0 0
        %3151 = vmatprep.subr.bf16.mxu0 0
        %3152 = vmatpush2.bf16.msra.mxu0 0
        %3153 = vmatprep.subr.bf16.mxu0 0
        %3154 = vmatpush2.bf16.msra.mxu0 0
        %3155 = vmatprep.subr.bf16.mxu0 0
        %3156 = vmatpush2.bf16.msra.mxu0 0
        %3157 = vmatprep.mubr.bf16.mxu0 0
        %3158 = vmatmul.mubr.bf16.gmra.mxu0 %v3120
        %v3159 = vpop.f32.mrf.mxu0
        %v3160 = vadd.f32 0.0, %v3159
        %v3161 = vpop.f32.mrf.mxu0
        %v3162 = vpop.f32.mrf.mxu0
        %v3163 = vpop.f32.mrf.mxu0
        %3164 = vdwg.mxu0
        %3165 = vrot.lane.b32.xlu0 %v770, 40
        %v3166 = vpop.permute.xlu0 %3165
        %v3168 = vsel %vm1080, %v2972, 0
        %v3171 = vsel %vm1084, %v3166, 0
        %3173 = vmatprep.subr.bf16.mxu0 0
        %3174 = vmatpush1.bf16.msra.mxu0 0
        %3175 = vmatprep.subr.bf16.mxu0 0
        %3176 = vmatpush1.bf16.msra.mxu0 0
        %3177 = vmatprep.subr.bf16.mxu0 0
        %3178 = vmatpush1.bf16.msra.mxu0 0
        %3179 = vmatprep.subr.bf16.mxu0 0
        %3180 = vmatpush1.bf16.msra.mxu0 0
        %3181 = vmatprep.subr.bf16.mxu0 0
        %3182 = vmatpush1.bf16.msra.mxu0 0
        %3183 = vmatprep.subr.bf16.mxu0 0
        %3184 = vmatpush1.bf16.msra.mxu0 0
        %3185 = vmatprep.subr.bf16.mxu0 0
        %3186 = vmatpush1.bf16.msra.mxu0 0
        %3187 = vmatprep.subr.bf16.mxu0 0
        %3188 = vmatpush1.bf16.msra.mxu0 %v3171
        %3189 = vmatprep.subr.bf16.mxu0 0
        %3190 = vmatpush2.bf16.msra.mxu0 0
        %3191 = vmatprep.subr.bf16.mxu0 0
        %3192 = vmatpush2.bf16.msra.mxu0 0
        %3193 = vmatprep.subr.bf16.mxu0 0
        %3194 = vmatpush2.bf16.msra.mxu0 0
        %3195 = vmatprep.subr.bf16.mxu0 0
        %3196 = vmatpush2.bf16.msra.mxu0 0
        %3197 = vmatprep.subr.bf16.mxu0 0
        %3198 = vmatpush2.bf16.msra.mxu0 0
        %3199 = vmatprep.subr.bf16.mxu0 0
        %3200 = vmatpush2.bf16.msra.mxu0 0
        %3201 = vmatprep.subr.bf16.mxu0 0
        %3202 = vmatpush2.bf16.msra.mxu0 0
        %3203 = vmatprep.subr.bf16.mxu0 0
        %3204 = vmatpush2.bf16.msra.mxu0 0
        %3205 = vmatprep.mubr.bf16.mxu0 0
        %3206 = vmatmul.mubr.bf16.gmra.mxu0 %v3168
        %v3207 = vpop.f32.mrf.mxu0
        %v3208 = vadd.f32 0.0, %v3207
        %v3209 = vpop.f32.mrf.mxu0
        %v3210 = vpop.f32.mrf.mxu0
        %v3211 = vpop.f32.mrf.mxu0
        %3212 = vdwg.mxu0
        %v3218 = vcombine.low %v3016, %v3064
        %v3219 = vcombine.low %v3112, %v3160
        %v3221 = vunpack.c.l.s4 1983009808
        %v3222 = vunpack.c.0.s8 %v3221
        %v3223 = vlaneseq
        %v3224 = vshrl.u32 %v3223, 7
        %v3225 = vsub.s32 %v3222, %v3224
        %v3226 = vrot.slane %v3218, %v3225
        %v3228 = vunpack.c.l.s4 1983009808
        %v3229 = vunpack.c.0.s8 %v3228
        %v3230 = vlaneseq
        %v3231 = vshrl.u32 %v3230, 7
        %v3232 = vsub.s32 %v3229, %v3231
        %v3233 = vrot.slane %v3219, %v3232
        %v3234 = vcombine.low %v3226, %v3233
        %v3236 = vunpack.c.l.s4 1983009808
        %v3237 = vunpack.c.0.s8 %v3236
        %v3238 = vlaneseq
        %v3239 = vshrl.u32 %v3238, 7
        %v3240 = vsub.s32 %v3237, %v3239
        %v3241 = vrot.slane %v3208, %v3240
        %v3244 = vpack.c.bf16 %v3241, %v3234
        %v3245 = vld [vmem:[%s621 + $0xc] sm:$0xf]
        %v3247 = vsel %vm774, %v3244, 0
        %v3250 = vsel %vm1939, %v3245, 0
        %3252 = vmatprep.subr.bf16.mxu0 0
        %3253 = vmatpush1.bf16.msra.mxu0 0
        %3254 = vmatprep.subr.bf16.mxu0 0
        %3255 = vmatpush1.bf16.msra.mxu0 0
        %3256 = vmatprep.subr.bf16.mxu0 0
        %3257 = vmatpush1.bf16.msra.mxu0 0
        %3258 = vmatprep.subr.bf16.mxu0 0
        %3259 = vmatpush1.bf16.msra.mxu0 0
        %3260 = vmatprep.subr.bf16.mxu0 0
        %3261 = vmatpush1.bf16.msra.mxu0 0
        %3262 = vmatprep.subr.bf16.mxu0 0
        %3263 = vmatpush1.bf16.msra.mxu0 0
        %3264 = vmatprep.subr.bf16.mxu0 0
        %3265 = vmatpush1.bf16.msra.mxu0 0
        %3266 = vmatprep.subr.bf16.mxu0 0
        %3267 = vmatpush1.bf16.msra.mxu0 %v3250
        %3268 = vmatprep.subr.bf16.mxu0 0
        %3269 = vmatpush2.bf16.msra.mxu0 0
        %3270 = vmatprep.subr.bf16.mxu0 0
        %3271 = vmatpush2.bf16.msra.mxu0 0
        %3272 = vmatprep.subr.bf16.mxu0 0
        %3273 = vmatpush2.bf16.msra.mxu0 0
        %3274 = vmatprep.subr.bf16.mxu0 0
        %3275 = vmatpush2.bf16.msra.mxu0 0
        %3276 = vmatprep.subr.bf16.mxu0 0
        %3277 = vmatpush2.bf16.msra.mxu0 0
        %3278 = vmatprep.subr.bf16.mxu0 0
        %3279 = vmatpush2.bf16.msra.mxu0 0
        %3280 = vmatprep.subr.bf16.mxu0 0
        %3281 = vmatpush2.bf16.msra.mxu0 0
        %3282 = vmatprep.subr.bf16.mxu0 0
        %3283 = vmatpush2.bf16.msra.mxu0 0
        %3284 = vmatprep.mubr.bf16.mxu0 0
        %3285 = vmatmul.mubr.bf16.gmra.mxu0 %v3247
        %v3286 = vpop.f32.mrf.mxu0
        %v3287 = vadd.f32 0.0, %v3286
        %v3288 = vpop.f32.mrf.mxu0
        %v3289 = vpop.f32.mrf.mxu0
        %v3290 = vadd.f32 0.0, %v3289
        %v3291 = vpop.f32.mrf.mxu0
        %3292 = vdwg.mxu0
        %v3293 = vadd.f32 %v2661, %v3287
        %v3294 = vadd.f32 %v2662, %v3290
        %v3295 = vld [vmem:[%s624] sm:$0x1]
        %v3297 = vlaneseq
        %v3298 = vshrl.u32 %v3297, 7
        %v3299 = vsub.s32 0, %v3298
        %v3300 = vrot.slane %v3295, %v3299
        %v3302 = vadd.f32 %v3293, %v3300
        %v3303 = vadd.f32 %v3294, %v3300
        %v3304 = vadd.f32 %v3302, %v664
        %v3305 = vadd.f32 %v3303, %v665
        %v3306 = vld [vmem:[%s627] sm:$0x1]
        %v3307 = vld [vmem:[%s630] sm:$0x1]
        %v3308 = vsel %vm690, %v3304, 0.0
        %3309 = vadd.xlane.f32.xlu0 %v3308
        %v3310 = vpop.xlane.xlu0 %3309
        %vm3311 = vcmask 254976
        %v3312 = vsel %vm3311, %v3305, 0.0
        %3313 = vadd.xlane.f32.xlu0 %v3312
        %v3314 = vpop.xlane.xlu0 %3313
        %v3315 = vrcp.pop 32.0
        %v3316 = vmul.f32 %v3310, %v3315
        %v3317 = vmul.f32 %v3314, %v3315
        %v3318 = vsub.f32 %v3304, %v3316
        %v3319 = vsub.f32 %v3305, %v3317
        %v3320 = vmul.f32 %v3318, %v3318
        %v3321 = vmul.f32 %v3319, %v3319
        %v3322 = vsel %vm690, %v3320, 0.0
        %3323 = vadd.xlane.f32.xlu0 %v3322
        %v3324 = vpop.xlane.xlu0 %3323
        %v3325 = vsel %vm3311, %v3321, 0.0
        %3326 = vadd.xlane.f32.xlu0 %v3325
        %v3327 = vpop.xlane.xlu0 %3326
        %v3328 = vmul.f32 %v3324, %v3315
        %v3329 = vmul.f32 %v3327, %v3315
        %v3330 = vadd.f32 %v3328, 1e-05
        %v3331 = vadd.f32 %v3329, 1e-05
        %v3332 = vrsqrt.pop %v3330
        %v3333 = vrsqrt.pop %v3331
        %v3334 = vmul.f32 %v3318, %v3332
        %v3335 = vmul.f32 %v3319, %v3333
        %v3337 = vlaneseq
        %v3338 = vshrl.u32 %v3337, 7
        %v3339 = vsub.s32 0, %v3338
        %v3340 = vrot.slane %v3306, %v3339
        %v3342 = vmul.f32 %v3334, %v3340
        %v3343 = vmul.f32 %v3335, %v3340
        %v3345 = vlaneseq
        %v3346 = vshrl.u32 %v3345, 7
        %v3347 = vsub.s32 0, %v3346
        %v3348 = vrot.slane %v3307, %v3347
        %v3350 = vadd.f32 %v3342, %v3348
        %v3351 = vadd.f32 %v3343, %v3348
        %v3352 = vpack.c.bf16 %v3351, %v3350
        %v3353 = vld [vmem:[%s635] sm:$0xf]
        %v3354 = vld [vmem:[%s635 + $0x4] sm:$0xf]
        %v3355 = vld [vmem:[%s635 + $0x8] sm:$0xf]
        %v3356 = vld [vmem:[%s635 + $0xc] sm:$0xf]
        %v3357 = vld [vmem:[%s638] sm:$0x1]
        %v3359 = vlaneseq
        %v3360 = vshrl.u32 %v3359, 7
        %v3361 = vsub.s32 0, %v3360
        %v3362 = vrot.slane %v3357, %v3361
        %v3368 = vunpack.c.l.b16 %v3353
        %v3369 = vunpack.c.l.b16 %v3354
        %v3370 = vunpack.c.l.b16 %v3355
        %v3371 = vunpack.c.l.b16 %v3356
        %v3372 = vpack.c.b16 %v3369, %v3368
        %v3373 = vpack.c.b16 %v3371, %v3370
        %v3377 = vsel %vm690, %v3352, 0
        %3379 = vmatprep.subr.bf16.mxu0 0
        %3380 = vmatpush1.bf16.msra.mxu0 0
        %3381 = vmatprep.subr.bf16.mxu0 0
        %3382 = vmatpush1.bf16.msra.mxu0 0
        %3383 = vmatprep.subr.bf16.mxu0 0
        %3384 = vmatpush1.bf16.msra.mxu0 0
        %3385 = vmatprep.subr.bf16.mxu0 0
        %3386 = vmatpush1.bf16.msra.mxu0 0
        %3387 = vmatprep.subr.bf16.mxu0 0
        %3388 = vmatpush1.bf16.msra.mxu0 0
        %3389 = vmatprep.subr.bf16.mxu0 0
        %3390 = vmatpush1.bf16.msra.mxu0 0
        %3391 = vmatprep.subr.bf16.mxu0 0
        %3392 = vmatpush1.bf16.msra.mxu0 %v3373
        %3393 = vmatprep.subr.bf16.mxu0 0
        %3394 = vmatpush1.bf16.msra.mxu0 %v3372
        %3395 = vmatprep.subr.bf16.mxu0 0
        %3396 = vmatpush2.bf16.msra.mxu0 0
        %3397 = vmatprep.subr.bf16.mxu0 0
        %3398 = vmatpush2.bf16.msra.mxu0 0
        %3399 = vmatprep.subr.bf16.mxu0 0
        %3400 = vmatpush2.bf16.msra.mxu0 0
        %3401 = vmatprep.subr.bf16.mxu0 0
        %3402 = vmatpush2.bf16.msra.mxu0 0
        %3403 = vmatprep.subr.bf16.mxu0 0
        %3404 = vmatpush2.bf16.msra.mxu0 0
        %3405 = vmatprep.subr.bf16.mxu0 0
        %3406 = vmatpush2.bf16.msra.mxu0 0
        %3407 = vmatprep.subr.bf16.mxu0 0
        %3408 = vmatpush2.bf16.msra.mxu0 0
        %3409 = vmatprep.subr.bf16.mxu0 0
        %3410 = vmatpush2.bf16.msra.mxu0 0
        %3411 = vmatprep.mubr.bf16.mxu0 0
        %3412 = vmatmul.mubr.bf16.gmra.mxu0 %v3377
        %v3413 = vpop.f32.mrf.mxu0
        %v3414 = vadd.f32 %v3362, %v3413
        %v3415 = vpop.f32.mrf.mxu0
        %v3416 = vpop.f32.mrf.mxu0
        %v3417 = vadd.f32 %v3362, %v3416
        %v3418 = vpop.f32.mrf.mxu0
        %3419 = vdwg.mxu0
        %v3420 = vmul.f32 %v3414, 0.5
        %v3421 = vmul.f32 %v3417, 0.5
        %v3422 = vmul.f32 %v3414, 0.044715
        %v3423 = vmul.f32 %v3417, 0.044715
        %v3424 = vmul.f32 %v3422, %v3414
        %v3425 = vmul.f32 %v3423, %v3417
        %v3426 = vmul.f32 %v3424, %v3414
        %v3427 = vmul.f32 %v3425, %v3417
        %v3428 = vadd.f32 %v3414, %v3426
        %v3429 = vadd.f32 %v3417, %v3427
        %v3430 = vmul.f32 %v3428, 0.7978846
        %v3431 = vmul.f32 %v3429, 0.7978846
        %v3432 = vtanh.pop %v3430
        %v3433 = vtanh.pop %v3431
        %v3434 = vadd.f32 %v3432, 1.0
        %v3435 = vadd.f32 %v3433, 1.0
        %v3436 = vmul.f32 %v3420, %v3434
        %v3437 = vmul.f32 %v3421, %v3435
        %v3438 = vpack.c.bf16 %v3437, %v3436
        %v3439 = vld [vmem:[%s643] sm:$0xf]
        %v3440 = vld [vmem:[%s643 + $0x4] sm:$0xf]
        %v3441 = vld [vmem:[%s643 + $0x8] sm:$0xf]
        %v3442 = vld [vmem:[%s643 + $0xc] sm:$0xf]
        %v3443 = vld [vmem:[%s643 + $0x10] sm:$0xf]
        %v3444 = vld [vmem:[%s643 + $0x14] sm:$0xf]
        %v3445 = vld [vmem:[%s643 + $0x18] sm:$0xf]
        %v3446 = vld [vmem:[%s643 + $0x1c] sm:$0xf]
        %v3447 = vld [vmem:[%s646] sm:$0x1]
        %v3449 = vlaneseq
        %v3450 = vshrl.u32 %v3449, 7
        %v3451 = vsub.s32 0, %v3450
        %v3452 = vrot.slane %v3447, %v3451
        %v3462 = vunpack.c.l.b16 %v3439
        %v3463 = vunpack.c.l.b16 %v3440
        %v3464 = vunpack.c.l.b16 %v3441
        %v3465 = vunpack.c.l.b16 %v3442
        %v3466 = vunpack.c.l.b16 %v3443
        %v3467 = vunpack.c.l.b16 %v3444
        %v3468 = vunpack.c.l.b16 %v3445
        %v3469 = vunpack.c.l.b16 %v3446
        %v3470 = vpack.c.b16 %v3463, %v3462
        %v3471 = vpack.c.b16 %v3465, %v3464
        %v3472 = vpack.c.b16 %v3467, %v3466
        %v3473 = vpack.c.b16 %v3469, %v3468
        %vm3478 = vcmask 523264
        %v3480 = vsel %vm3478, %v3438, 0
        %3482 = vmatprep.subr.bf16.mxu0 0
        %3483 = vmatpush1.bf16.msra.mxu0 0
        %3484 = vmatprep.subr.bf16.mxu0 0
        %3485 = vmatpush1.bf16.msra.mxu0 0
        %3486 = vmatprep.subr.bf16.mxu0 0
        %3487 = vmatpush1.bf16.msra.mxu0 0
        %3488 = vmatprep.subr.bf16.mxu0 0
        %3489 = vmatpush1.bf16.msra.mxu0 0
        %3490 = vmatprep.subr.bf16.mxu0 0
        %3491 = vmatpush1.bf16.msra.mxu0 %v3473
        %3492 = vmatprep.subr.bf16.mxu0 0
        %3493 = vmatpush1.bf16.msra.mxu0 %v3472
        %3494 = vmatprep.subr.bf16.mxu0 0
        %3495 = vmatpush1.bf16.msra.mxu0 %v3471
        %3496 = vmatprep.subr.bf16.mxu0 0
        %3497 = vmatpush1.bf16.msra.mxu0 %v3470
        %3498 = vmatprep.subr.bf16.mxu0 0
        %3499 = vmatpush2.bf16.msra.mxu0 0
        %3500 = vmatprep.subr.bf16.mxu0 0
        %3501 = vmatpush2.bf16.msra.mxu0 0
        %3502 = vmatprep.subr.bf16.mxu0 0
        %3503 = vmatpush2.bf16.msra.mxu0 0
        %3504 = vmatprep.subr.bf16.mxu0 0
        %3505 = vmatpush2.bf16.msra.mxu0 0
        %3506 = vmatprep.subr.bf16.mxu0 0
        %3507 = vmatpush2.bf16.msra.mxu0 0
        %3508 = vmatprep.subr.bf16.mxu0 0
        %3509 = vmatpush2.bf16.msra.mxu0 0
        %3510 = vmatprep.subr.bf16.mxu0 0
        %3511 = vmatpush2.bf16.msra.mxu0 0
        %3512 = vmatprep.subr.bf16.mxu0 0
        %3513 = vmatpush2.bf16.msra.mxu0 0
        %3514 = vmatprep.mubr.bf16.mxu0 0
        %3515 = vmatmul.mubr.bf16.gmra.mxu0 %v3480
        %v3516 = vpop.f32.mrf.mxu0
        %v3517 = vadd.f32 %v3452, %v3516
        %v3518 = vpop.f32.mrf.mxu0
        %v3519 = vpop.f32.mrf.mxu0
        %v3520 = vadd.f32 %v3452, %v3519
        %v3521 = vpop.f32.mrf.mxu0
        %3522 = vdwg.mxu0
        %v3523 = vadd.f32 %v3517, %v3350
        %v3524 = vadd.f32 %v3520, %v3351
        %v3525 = vld [vmem:[%s649] sm:$0x1]
        %v3526 = vld [vmem:[%s652] sm:$0x1]
        %v3527 = vsel %vm690, %v3523, 0.0
        %3528 = vadd.xlane.f32.xlu0 %v3527
        %v3529 = vpop.xlane.xlu0 %3528
        %v3530 = vsel %vm3311, %v3524, 0.0
        %3531 = vadd.xlane.f32.xlu0 %v3530
        %v3532 = vpop.xlane.xlu0 %3531
        %v3533 = vmul.f32 %v3529, %v3315
        %v3534 = vmul.f32 %v3532, %v3315
        %v3535 = vsub.f32 %v3523, %v3533
        %v3536 = vsub.f32 %v3524, %v3534
        %v3537 = vmul.f32 %v3535, %v3535
        %v3538 = vmul.f32 %v3536, %v3536
        %v3539 = vsel %vm690, %v3537, 0.0
        %3540 = vadd.xlane.f32.xlu0 %v3539
        %v3541 = vpop.xlane.xlu0 %3540
        %v3542 = vsel %vm3311, %v3538, 0.0
        %3543 = vadd.xlane.f32.xlu0 %v3542
        %v3544 = vpop.xlane.xlu0 %3543
        %v3545 = vmul.f32 %v3541, %v3315
        %v3546 = vmul.f32 %v3544, %v3315
        %v3547 = vadd.f32 %v3545, 1e-05
        %v3548 = vadd.f32 %v3546, 1e-05
        %v3549 = vrsqrt.pop %v3547
        %v3550 = vrsqrt.pop %v3548
        %v3551 = vmul.f32 %v3535, %v3549
        %v3552 = vmul.f32 %v3536, %v3550
        %v3554 = vlaneseq
        %v3555 = vshrl.u32 %v3554, 7
        %v3556 = vsub.s32 0, %v3555
        %v3557 = vrot.slane %v3525, %v3556
        %v3559 = vmul.f32 %v3551, %v3557
        %v3560 = vmul.f32 %v3552, %v3557
        %v3562 = vlaneseq
        %v3563 = vshrl.u32 %v3562, 7
        %v3564 = vsub.s32 0, %v3563
        %v3565 = vrot.slane %v3526, %v3564
        %v3567 = vadd.f32 %v3559, %v3565
        %v3568 = vadd.f32 %v3560, %v3565
        %3569 = vst.msk [vmem:[#allocation2] sm:$0xff] %vm690, %v3567
        %3570 = vst.msk [vmem:[#allocation2 + $0x8] sm:$0x3] %vm3311, %v3568
        %p3571 = scmp.eq.s32.totalorder %s27, 1
        // Predicated region
        $region85: #{vit_forward.1} parent=79 // pred_check
          %p3572 = pneg %p3571
        $region86: #{vit_forward.1} parent=79 // pred_check_branch
          %3574 = sbr.rel (%p3572) target = $region88
        $region87: #{vit_forward.1} parent=79 // pred_region
          %v3575 = vld [vmem:[%s13] sm:$0xf]
          %v3576 = vld [vmem:[%s13 + $0x4] sm:$0xf]
          %v3577 = vld [vmem:[%s13 + $0x8] sm:$0xf]
          %v3578 = vld [vmem:[%s13 + $0xc] sm:$0xf]
          %v3579 = vpack.c.bf16 %v3567, %v3567
          %v3580 = vld [vmem:[%s14] sm:$0x1]
          %v3582 = vlaneseq
          %v3583 = vshrl.u32 %v3582, 7
          %v3584 = vsub.s32 0, %v3583
          %v3585 = vrot.slane %v3580, %v3584
          %v3591 = vunpack.c.l.b16 %v3575
          %v3592 = vunpack.c.l.b16 %v3576
          %v3593 = vunpack.c.l.b16 %v3577
          %v3594 = vunpack.c.l.b16 %v3578
          %v3595 = vpack.c.b16 %v3592, %v3591
          %v3596 = vpack.c.b16 %v3594, %v3593
          %v3600 = vsel %vm690, %v3579, 0
          %3602 = vmatprep.subr.bf16.mxu0 0
          %3603 = vmatpush1.bf16.msra.mxu0 0
          %3604 = vmatprep.subr.bf16.mxu0 0
          %3605 = vmatpush1.bf16.msra.mxu0 0
          %3606 = vmatprep.subr.bf16.mxu0 0
          %3607 = vmatpush1.bf16.msra.mxu0 0
          %3608 = vmatprep.subr.bf16.mxu0 0
          %3609 = vmatpush1.bf16.msra.mxu0 0
          %3610 = vmatprep.subr.bf16.mxu0 0
          %3611 = vmatpush1.bf16.msra.mxu0 0
          %3612 = vmatprep.subr.bf16.mxu0 0
          %3613 = vmatpush1.bf16.msra.mxu0 0
          %3614 = vmatprep.subr.bf16.mxu0 0
          %3615 = vmatpush1.bf16.msra.mxu0 %v3596
          %3616 = vmatprep.subr.bf16.mxu0 0
          %3617 = vmatpush1.bf16.msra.mxu0 %v3595
          %3618 = vmatprep.subr.bf16.mxu0 0
          %3619 = vmatpush2.bf16.msra.mxu0 0
          %3620 = vmatprep.subr.bf16.mxu0 0
          %3621 = vmatpush2.bf16.msra.mxu0 0
          %3622 = vmatprep.subr.bf16.mxu0 0
          %3623 = vmatpush2.bf16.msra.mxu0 0
          %3624 = vmatprep.subr.bf16.mxu0 0
          %3625 = vmatpush2.bf16.msra.mxu0 0
          %3626 = vmatprep.subr.bf16.mxu0 0
          %3627 = vmatpush2.bf16.msra.mxu0 0
          %3628 = vmatprep.subr.bf16.mxu0 0
          %3629 = vmatpush2.bf16.msra.mxu0 0
          %3630 = vmatprep.subr.bf16.mxu0 0
          %3631 = vmatpush2.bf16.msra.mxu0 0
          %3632 = vmatprep.subr.bf16.mxu0 0
          %3633 = vmatpush2.bf16.msra.mxu0 0
          %3634 = vmatprep.mubr.bf16.mxu0 0
          %3635 = vmatmul.mubr.bf16.gmra.mxu0 %v3600
          %v3636 = vpop.f32.mrf.mxu0
          %v3637 = vadd.f32 %v3585, %v3636
          %v3638 = vpop.f32.mrf.mxu0
          %v3639 = vpop.f32.mrf.mxu0
          %v3640 = vpop.f32.mrf.mxu0
          %3641 = vdwg.mxu0
          %3642 = vst [vmem:[#allocation3] sm:$0x3] %v3637
        $region88: #{vit_forward.1} parent=79 // pred_fallthru
          _
        // Predicated region
        $region89: #{vit_forward.1} parent=79 // pred_check
          %p3643 = pneg %p415
        $region90: #{vit_forward.1} parent=79 // pred_check_branch
          %3645 = sbr.rel (%p3643) target = $region92
        $region91: #{vit_forward.1} parent=79 // pred_region
          %s3647 = ssub.s32 32, 32
          %3648 = vsyncadd [#allocation4], %s3647
          %s3650 = sshll.u32 [#allocation3], 4
          %s3651 = int_to_ptr.vmem [resolvable:$true] %s3650
          %3653 = dma.vmem_to_hbm [thread:$0]  %s3651, 32, %s15, [#allocation4]
        $region92: #{vit_forward.1} parent=79 // pred_fallthru
          _
        // Predicated region
        $region93: #{vit_forward.1} parent=79 // pred_check
          %p3654 = pneg %p415
        $region94: #{vit_forward.1} parent=79 // pred_check_branch
          %3656 = sbr.rel (%p3654) target = $region96
        $region95: #{vit_forward.1} parent=79 // pred_region
          %3657 = dma.done [#allocation4], 32
        $region96: #{vit_forward.1} parent=79 // pred_fallthru
          _
      $region80: #{vit_forward.1} parent=5 // pred_fallthru
        _
      %p3658 = scmp.le.s32.totalorder 2, %s22
      // Predicated region
      $region97: #{vit_forward.1} parent=5 // pred_check
        %p3659 = pneg %p3658
      $region98: #{vit_forward.1} parent=5 // pred_check_branch
        %3661 = sbr.rel (%p3659) target = $region100
      $region99: #{vit_forward.1} parent=5 // pred_region
        %s3662 = ssub.s32 %s22, 2
      $region100: #{vit_forward.1} parent=5 // pred_fallthru
        _
    $region6: #{vit_forward.1} parent=1 // loop_footer
      %s26 = sadd.s32 1, %s22
    $region7: #{vit_forward.1} parent=1 // loop_footer_branch
      %21 = sbr.rel target = $region3
    $region8: #{vit_forward.1} parent=1 // loop_exit
      _
    %3663 = vsyncpa [#allocation4], 1
    %s3664 = scalar_lea.sflag [#allocation4], 1
    %3665 = vsyncpa %s3664, 1

</llo_original>
